<compile_context>
chip_gen: v7x
topology: tpu7x:2x2x1
jax: 0.10.0
libtpu: 0.0.40
codegen_flags: <defaults>
</compile_context>

<pallas_src>
import jax
import jax.numpy as jnp
from jax.experimental import pallas as pl
from jax.experimental.pallas import tpu as pltpu

EPS = 1e-5
MATMUL_DTYPE = jnp.bfloat16      # MXU operand dtype (accumulation stays f32).


# --------------------------------------------------------------------------- #
# Kernel helpers                                                              #
# --------------------------------------------------------------------------- #
def _fill_pad_scratch(pad_ref, interior_mc):
    """Zero the 1-pixel halo ring and write the (Nb*H*W, C) interior slab."""
    nb, hp, wp, c = pad_ref.shape
    h, w = hp - 2, wp - 2
    dt = pad_ref.dtype
    pad_ref[:, 0:1, :, :] = jnp.zeros((nb, 1, wp, c), dt)
    pad_ref[:, hp - 1:hp, :, :] = jnp.zeros((nb, 1, wp, c), dt)
    pad_ref[:, :, 0:1, :] = jnp.zeros((nb, hp, 1, c), dt)
    pad_ref[:, :, wp - 1:wp, :] = jnp.zeros((nb, hp, 1, c), dt)
    pad_ref[:, 1:1 + h, 1:1 + w, :] = interior_mc.reshape(nb, h, w, c).astype(dt)


def _conv3x3_and_stats(pad_ref, w_ref, y_ref, stats_ref):
    """3x3/s1/p1 conv = 9 accumulated K=C MXU matmuls; + partial BN stats."""
    nb, hp, wp, c = pad_ref.shape
    h, w = hp - 2, wp - 2
    mt = nb * h * w

    acc = jnp.zeros((mt, c), jnp.float32)
    for t in range(9):                                    # static unroll: 9 taps
        ky, kx = divmod(t, 3)
        tap = pad_ref[:, ky:ky + h, kx:kx + w, :].reshape(mt, c)
        acc = acc + jnp.dot(tap.astype(MATMUL_DTYPE), w_ref[t],
                            preferred_element_type=jnp.float32)

    # Per-channel partial sum / sum-of-squares via the MXU (ones-contraction)
    # so the VPU only sees the single mul+add normalization pass later.
    ones = jnp.ones((1, mt), jnp.float32)
    s = jnp.dot(ones, acc, preferred_element_type=jnp.float32)           # (1, C)
    ss = jnp.dot(ones, acc * acc, preferred_element_type=jnp.float32)    # (1, C)
    stats_ref[...] = jnp.concatenate([s, ss], axis=0).reshape(1, 2, c)

    y_ref[...] = acc                                      # (Mt, C) f32, pre-BN


# --------------------------------------------------------------------------- #
# Kernels                                                                     #
# --------------------------------------------------------------------------- #
def conv1_stats_kernel(x_ref, w_ref, y_ref, stats_ref, pad_ref):
    _fill_pad_scratch(pad_ref, x_ref[...])
    _conv3x3_and_stats(pad_ref, w_ref, y_ref, stats_ref)


def bn_relu_conv2_stats_kernel(y1_ref, scale_ref, bias_ref, w_ref,
                               y2_ref, stats_ref, pad_ref):
    # bn1-apply + relu stays in the conv's channel-minor (Mt, C) layout: its
    # consumer (the padded scratch) is channel-minor, so a lane-dense detour
    # here would only add a relayout.
    a = jnp.maximum(y1_ref[...] * scale_ref[...] + bias_ref[...], 0.0)
    _fill_pad_scratch(pad_ref, a)
    _conv3x3_and_stats(pad_ref, w_ref, y2_ref, stats_ref)


def bn_add_relu_kernel(y2_ref, x_ref, scale_ref, bias_ref, out_ref):
    # Fully lane-dense: every ref is an (Nb*H, W*C) slab, scale/bias pre-tiled
    # to (1, W*C) -> unmasked vector stores on the final write.
    o = (y2_ref[...] * scale_ref[...] + bias_ref[...]
         + x_ref[...].astype(jnp.float32))
    out_ref[...] = jnp.maximum(o, 0.0).astype(out_ref.dtype)


# --------------------------------------------------------------------------- #
# Wrapper                                                                     #
# --------------------------------------------------------------------------- #
def _bn_scale_bias(stats_tiles, gamma, beta, m):
    """Fold per-tile (sum, sumsq) partials into fused BN scale/bias (O(C))."""
    s = jnp.sum(stats_tiles, axis=0)                      # (2, C)
    mean = s[0:1] * (1.0 / m)                             # (1, C)
    var = s[1:2] * (1.0 / m) - mean * mean                # biased (training) var
    scale = gamma * jax.lax.rsqrt(var + EPS)              # (1, C)
    bias = beta - mean * scale                            # (1, C)
    return scale, bias


def basic_block(x_nchw, params, *, batch_tile=1):
    """BasicBlock forward, NCHW in / NCHW out.  Identity-shortcut path only."""
    w1, g1, b1, w2, g2, b2 = params

    x = jnp.transpose(x_nchw, (0, 2, 3, 1))               # NCHW -> NHWC
    n, h, w, c = x.shape
    assert w1.shape == (3, 3, c, c) and w2.shape == (3, 3, c, c), (
        "identity shortcut path requires in_planes == planes, stride == 1")
    assert n % batch_tile == 0
    nb = batch_tile
    nt = n // nb
    wc = w * c
    mt = nb * h * w                                       # rows per conv tile
    m = n * h * w                                         # BN reduction size

    # Two free (metadata-only) views of each activation buffer:
    #   channel-minor (M, C)     -> conv kernels (matmul contraction over C)
    #   lane-dense   (N*H, W*C)  -> elementwise / store kernel
    x_mc = x.reshape(m, c)
    x_ld = x.reshape(n * h, wc)

    # HWIO (3,3,C,C) -> (9, C, C); pre-cast to the MXU operand dtype.
    w1k = w1.reshape(9, c, c).astype(MATMUL_DTYPE)
    w2k = w2.reshape(9, c, c).astype(MATMUL_DTYPE)

    conv_act_spec = pl.BlockSpec((mt, c), lambda i: (i, 0))
    ld_act_spec = pl.BlockSpec((nb * h, wc), lambda i: (i, 0))
    w_spec = pl.BlockSpec((9, c, c), lambda i: (0, 0, 0))
    chan_vec_spec = pl.BlockSpec((1, c), lambda i: (0, 0))
    lane_vec_spec = pl.BlockSpec((1, wc), lambda i: (0, 0))
    stats_spec = pl.BlockSpec((1, 2, c), lambda i: (i, 0, 0))
    pad_scratch = pltpu.VMEM((nb, h + 2, w + 2, c), jnp.float32)

    cparams = pltpu.CompilerParams(
        dimension_semantics=("parallel",),    # batch tiles -> v7x's 2 TCs
        vmem_limit_bytes=32 * 1024 * 1024,    # safe on v5e / v6e / v7x
    )

    # ---- pass 1: conv1 + per-tile BN1 partial stats -------------------------
    y1, st1 = pl.pallas_call(
        conv1_stats_kernel,
        grid=(nt,),
        in_specs=[conv_act_spec, w_spec],
        out_specs=[conv_act_spec, stats_spec],
        out_shape=[jax.ShapeDtypeStruct((m, c), jnp.float32),
                   jax.ShapeDtypeStruct((nt, 2, c), jnp.float32)],
        scratch_shapes=[pad_scratch],
        compiler_params=cparams,
    )(x_mc, w1k)

    scale1, bias1 = _bn_scale_bias(st1, g1, b1, m)        # (1, C) each

    # ---- pass 2: bn1 -> relu -> conv2 + per-tile BN2 partial stats ----------
    y2, st2 = pl.pallas_call(
        bn_relu_conv2_stats_kernel,
        grid=(nt,),
        in_specs=[conv_act_spec, chan_vec_spec, chan_vec_spec, w_spec],
        out_specs=[conv_act_spec, stats_spec],
        out_shape=[jax.ShapeDtypeStruct((m, c), jnp.float32),
                   jax.ShapeDtypeStruct((nt, 2, c), jnp.float32)],
        scratch_shapes=[pad_scratch],
        compiler_params=cparams,
    )(y1, scale1, bias1, w2k)

    scale2, bias2 = _bn_scale_bias(st2, g2, b2, m)
    scale2_ld = jnp.tile(scale2, (1, w))                  # (1, W*C) lane-dense
    bias2_ld = jnp.tile(bias2, (1, w))

    # ---- pass 3: bn2 + identity shortcut + relu (lane-dense) ----------------
    out_ld = pl.pallas_call(
        bn_add_relu_kernel,
        grid=(nt,),
        in_specs=[ld_act_spec, ld_act_spec, lane_vec_spec, lane_vec_spec],
        out_specs=ld_act_spec,
        out_shape=jax.ShapeDtypeStruct((n * h, wc), x.dtype),
        compiler_params=cparams,
    )(y2.reshape(n * h, wc), x_ld, scale2_ld, bias2_ld)

    out = out_ld.reshape(n, h, w, c)
    return jnp.transpose(out, (0, 3, 1, 2))               # NHWC -> NCHW


# --------------------------------------------------------------------------- #
# Pure-JAX reference (matches the PyTorch forward, training-mode BN)          #
# --------------------------------------------------------------------------- #
def reference(x_nchw, params):
    w1, g1, b1, w2, g2, b2 = params
    x = jnp.transpose(x_nchw, (0, 2, 3, 1))

    def conv(a, wt):
        return jax.lax.conv_general_dilated(
            a, wt, window_strides=(1, 1), padding=((1, 1), (1, 1)),
            dimension_numbers=('NHWC', 'HWIO', 'NHWC'))

    def bn(a, g, b):
        mu = jnp.mean(a, axis=(0, 1, 2), keepdims=True)
        var = jnp.mean((a - mu) ** 2, axis=(0, 1, 2), keepdims=True)
        return ((a - mu) * jax.lax.rsqrt(var + EPS)
                * g.reshape(1, 1, 1, -1) + b.reshape(1, 1, 1, -1))

    y = jnp.maximum(bn(conv(x, w1), g1, b1), 0.0)
    z = bn(conv(y, w2), g2, b2)
    out = jnp.maximum(z + x, 0.0)
    return jnp.transpose(out, (0, 3, 1, 2))


if __name__ == "__main__":
    # Small config consistent with the module: in_planes == planes, stride == 1.
    # C=8, W=16 -> W*C = 128 lanes for the lane-dense elementwise/store pass.
    N, C, H, W = 2, 8, 16, 16
    key = jax.random.PRNGKey(0)
    ks = jax.random.split(key, 7)

    x = jax.random.normal(ks[0], (N, C, H, W), jnp.float32)
    w1 = 0.1 * jax.random.normal(ks[1], (3, 3, C, C), jnp.float32)   # HWIO
    w2 = 0.1 * jax.random.normal(ks[2], (3, 3, C, C), jnp.float32)   # HWIO
    g1 = 1.0 + 0.1 * jax.random.normal(ks[3], (1, C), jnp.float32)
    b1 = 0.1 * jax.random.normal(ks[4], (1, C), jnp.float32)
    g2 = 1.0 + 0.1 * jax.random.normal(ks[5], (1, C), jnp.float32)
    b2 = 0.1 * jax.random.normal(ks[6], (1, C), jnp.float32)
    params = (w1, g1, b1, w2, g2, b2)

    out = basic_block(x, params, batch_tile=1)
    jax.block_until_ready(out)

    ref = reference(x, params)
    err = float(jnp.max(jnp.abs(out - ref)))
    # bf16 MXU operands (per perf review) -> tolerance loosened vs pure f32.
    assert jnp.allclose(out, ref, atol=5e-2, rtol=5e-2), f"max abs err = {err}"

    print("KERNEL_OK")
</pallas_src>

<mosaic_0001>
module attributes {stable_mosaic.version = 11 : i64} {
  func.func @conv1_stats_kernel(%arg0: i32, %arg1: memref<256x8xf32, #tpu.memory_space<vmem>>, %arg2: memref<9x8x8xbf16, #tpu.memory_space<vmem>>, %arg3: memref<256x8xf32, #tpu.memory_space<vmem>>, %arg4: memref<1x2x8xf32, #tpu.memory_space<vmem>>, %arg5: memref<1x18x18x8xf32, #tpu.memory_space<vmem>>) attributes {dimension_semantics = [#tpu.dimension_semantics<parallel>], iteration_bounds = array<i64: 2>, scalar_prefetch = 0 : i64, scratch_operands = 1 : i64, tpu.core_type = #tpu.core_type<tc>, window_params = [{transform_indices = @transform_0, window_bounds = array<i64: 256, 8>}, {pipeline_mode = #tpu.pipeline_mode<synchronous>, transform_indices = @transform_1, window_bounds = array<i64: 9, 8, 8>}, {transform_indices = @transform_2, window_bounds = array<i64: 256, 8>}, {transform_indices = @transform_3, window_bounds = array<i64: 1, 2, 8>}]} {
    %c0 = arith.constant 0 : index
    %c0_0 = arith.constant 0 : index
    %0 = vector.load %arg1[%c0, %c0_0] : memref<256x8xf32, #tpu.memory_space<vmem>>, vector<256x8xf32>
    %cst = arith.constant 0.000000e+00 : f32
    %1 = vector.broadcast %cst : f32 to vector<1x1x18x8xf32>
    %c0_1 = arith.constant 0 : index
    %c0_2 = arith.constant 0 : index
    %c0_3 = arith.constant 0 : index
    %c0_4 = arith.constant 0 : index
    %2 = vector.load %arg5[%c0_1, %c0_2, %c0_3, %c0_4] : memref<1x18x18x8xf32, #tpu.memory_space<vmem>>, vector<1x1x18x8xf32>
    tpu.vector_store %arg5[%c0_1, %c0_2, %c0_3, %c0_4], %1 {strides = array<i32>} : memref<1x18x18x8xf32, #tpu.memory_space<vmem>>, vector<1x1x18x8xf32>,
    %cst_5 = arith.constant 0.000000e+00 : f32
    %3 = vector.broadcast %cst_5 : f32 to vector<1x1x18x8xf32>
    %c0_6 = arith.constant 0 : index
    %c17 = arith.constant 17 : index
    %c0_7 = arith.constant 0 : index
    %c0_8 = arith.constant 0 : index
    %4 = vector.load %arg5[%c0_6, %c17, %c0_7, %c0_8] : memref<1x18x18x8xf32, #tpu.memory_space<vmem>>, vector<1x1x18x8xf32>
    tpu.vector_store %arg5[%c0_6, %c17, %c0_7, %c0_8], %3 {strides = array<i32>} : memref<1x18x18x8xf32, #tpu.memory_space<vmem>>, vector<1x1x18x8xf32>,
    %cst_9 = arith.constant 0.000000e+00 : f32
    %5 = vector.broadcast %cst_9 : f32 to vector<1x18x1x8xf32>
    %c0_10 = arith.constant 0 : index
    %c0_11 = arith.constant 0 : index
    %c0_12 = arith.constant 0 : index
    %c0_13 = arith.constant 0 : index
    %6 = vector.load %arg5[%c0_10, %c0_11, %c0_12, %c0_13] : memref<1x18x18x8xf32, #tpu.memory_space<vmem>>, vector<1x18x1x8xf32>
    tpu.vector_store %arg5[%c0_10, %c0_11, %c0_12, %c0_13], %5 {strides = array<i32>} : memref<1x18x18x8xf32, #tpu.memory_space<vmem>>, vector<1x18x1x8xf32>,
    %cst_14 = arith.constant 0.000000e+00 : f32
    %7 = vector.broadcast %cst_14 : f32 to vector<1x18x1x8xf32>
    %c0_15 = arith.constant 0 : index
    %c0_16 = arith.constant 0 : index
    %c17_17 = arith.constant 17 : index
    %c0_18 = arith.constant 0 : index
    %8 = vector.load %arg5[%c0_15, %c0_16, %c17_17, %c0_18] : memref<1x18x18x8xf32, #tpu.memory_space<vmem>>, vector<1x18x1x8xf32>
    tpu.vector_store %arg5[%c0_15, %c0_16, %c17_17, %c0_18], %7 {strides = array<i32>} : memref<1x18x18x8xf32, #tpu.memory_space<vmem>>, vector<1x18x1x8xf32>,
    %9 = vector.shape_cast %0 : vector<256x8xf32> to vector<1x16x16x8xf32>
    %c0_19 = arith.constant 0 : index
    %c1 = arith.constant 1 : index
    %c1_20 = arith.constant 1 : index
    %c0_21 = arith.constant 0 : index
    %10 = vector.load %arg5[%c0_19, %c1, %c1_20, %c0_21] : memref<1x18x18x8xf32, #tpu.memory_space<vmem>>, vector<1x16x16x8xf32>
    tpu.vector_store %arg5[%c0_19, %c1, %c1_20, %c0_21], %9 {strides = array<i32>} : memref<1x18x18x8xf32, #tpu.memory_space<vmem>>, vector<1x16x16x8xf32>,
    %cst_22 = arith.constant 0.000000e+00 : f32
    %11 = vector.broadcast %cst_22 : f32 to vector<256x8xf32>
    %c0_23 = arith.constant 0 : index
    %c0_24 = arith.constant 0 : index
    %c0_25 = arith.constant 0 : index
    %c0_26 = arith.constant 0 : index
    %12 = vector.load %arg5[%c0_23, %c0_24, %c0_25, %c0_26] : memref<1x18x18x8xf32, #tpu.memory_space<vmem>>, vector<1x16x16x8xf32>
    %13 = vector.shape_cast %12 : vector<1x16x16x8xf32> to vector<256x8xf32>
    %14 = arith.truncf %13 : vector<256x8xf32> to vector<256x8xbf16>
    %c0_27 = arith.constant 0 : index
    %c0_28 = arith.constant 0 : index
    %c0_29 = arith.constant 0 : index
    %15 = vector.load %arg2[%c0_27, %c0_28, %c0_29] : memref<9x8x8xbf16, #tpu.memory_space<vmem>>, vector<1x8x8xbf16>
    %16 = vector.shape_cast %15 : vector<1x8x8xbf16> to vector<8x8xbf16>
    %cst_30 = arith.constant dense<0.000000e+00> : vector<256x8xf32>
    %17 = tpu.matmul %14, %16, %cst_30 {dimension_numbers = #tpu.dot_dimension_numbers<[1], [0], [0], [1], [0, 0, 1, 1], [], []>} : vector<256x8xbf16>, vector<8x8xbf16>, vector<256x8xf32> -> vector<256x8xf32>
    %18 = arith.addf %11, %17 : vector<256x8xf32>
    %c0_31 = arith.constant 0 : index
    %c0_32 = arith.constant 0 : index
    %c1_33 = arith.constant 1 : index
    %c0_34 = arith.constant 0 : index
    %19 = vector.load %arg5[%c0_31, %c0_32, %c1_33, %c0_34] : memref<1x18x18x8xf32, #tpu.memory_space<vmem>>, vector<1x16x16x8xf32>
    %20 = vector.shape_cast %19 : vector<1x16x16x8xf32> to vector<256x8xf32>
    %21 = arith.truncf %20 : vector<256x8xf32> to vector<256x8xbf16>
    %c1_35 = arith.constant 1 : index
    %c0_36 = arith.constant 0 : index
    %c0_37 = arith.constant 0 : index
    %22 = vector.load %arg2[%c1_35, %c0_36, %c0_37] : memref<9x8x8xbf16, #tpu.memory_space<vmem>>, vector<1x8x8xbf16>
    %23 = vector.shape_cast %22 : vector<1x8x8xbf16> to vector<8x8xbf16>
    %cst_38 = arith.constant dense<0.000000e+00> : vector<256x8xf32>
    %24 = tpu.matmul %21, %23, %cst_38 {dimension_numbers = #tpu.dot_dimension_numbers<[1], [0], [0], [1], [0, 0, 1, 1], [], []>} : vector<256x8xbf16>, vector<8x8xbf16>, vector<256x8xf32> -> vector<256x8xf32>
    %25 = arith.addf %18, %24 : vector<256x8xf32>
    %c0_39 = arith.constant 0 : index
    %c0_40 = arith.constant 0 : index
    %c2 = arith.constant 2 : index
    %c0_41 = arith.constant 0 : index
    %26 = vector.load %arg5[%c0_39, %c0_40, %c2, %c0_41] : memref<1x18x18x8xf32, #tpu.memory_space<vmem>>, vector<1x16x16x8xf32>
    %27 = vector.shape_cast %26 : vector<1x16x16x8xf32> to vector<256x8xf32>
    %28 = arith.truncf %27 : vector<256x8xf32> to vector<256x8xbf16>
    %c2_42 = arith.constant 2 : index
    %c0_43 = arith.constant 0 : index
    %c0_44 = arith.constant 0 : index
    %29 = vector.load %arg2[%c2_42, %c0_43, %c0_44] : memref<9x8x8xbf16, #tpu.memory_space<vmem>>, vector<1x8x8xbf16>
    %30 = vector.shape_cast %29 : vector<1x8x8xbf16> to vector<8x8xbf16>
    %cst_45 = arith.constant dense<0.000000e+00> : vector<256x8xf32>
    %31 = tpu.matmul %28, %30, %cst_45 {dimension_numbers = #tpu.dot_dimension_numbers<[1], [0], [0], [1], [0, 0, 1, 1], [], []>} : vector<256x8xbf16>, vector<8x8xbf16>, vector<256x8xf32> -> vector<256x8xf32>
    %32 = arith.addf %25, %31 : vector<256x8xf32>
    %c0_46 = arith.constant 0 : index
    %c1_47 = arith.constant 1 : index
    %c0_48 = arith.constant 0 : index
    %c0_49 = arith.constant 0 : index
    %33 = vector.load %arg5[%c0_46, %c1_47, %c0_48, %c0_49] : memref<1x18x18x8xf32, #tpu.memory_space<vmem>>, vector<1x16x16x8xf32>
    %34 = vector.shape_cast %33 : vector<1x16x16x8xf32> to vector<256x8xf32>
    %35 = arith.truncf %34 : vector<256x8xf32> to vector<256x8xbf16>
    %c3 = arith.constant 3 : index
    %c0_50 = arith.constant 0 : index
    %c0_51 = arith.constant 0 : index
    %36 = vector.load %arg2[%c3, %c0_50, %c0_51] : memref<9x8x8xbf16, #tpu.memory_space<vmem>>, vector<1x8x8xbf16>
    %37 = vector.shape_cast %36 : vector<1x8x8xbf16> to vector<8x8xbf16>
    %cst_52 = arith.constant dense<0.000000e+00> : vector<256x8xf32>
    %38 = tpu.matmul %35, %37, %cst_52 {dimension_numbers = #tpu.dot_dimension_numbers<[1], [0], [0], [1], [0, 0, 1, 1], [], []>} : vector<256x8xbf16>, vector<8x8xbf16>, vector<256x8xf32> -> vector<256x8xf32>
    %39 = arith.addf %32, %38 : vector<256x8xf32>
    %c0_53 = arith.constant 0 : index
    %c1_54 = arith.constant 1 : index
    %c1_55 = arith.constant 1 : index
    %c0_56 = arith.constant 0 : index
    %40 = vector.load %arg5[%c0_53, %c1_54, %c1_55, %c0_56] : memref<1x18x18x8xf32, #tpu.memory_space<vmem>>, vector<1x16x16x8xf32>
    %41 = vector.shape_cast %40 : vector<1x16x16x8xf32> to vector<256x8xf32>
    %42 = arith.truncf %41 : vector<256x8xf32> to vector<256x8xbf16>
    %c4 = arith.constant 4 : index
    %c0_57 = arith.constant 0 : index
    %c0_58 = arith.constant 0 : index
    %43 = vector.load %arg2[%c4, %c0_57, %c0_58] : memref<9x8x8xbf16, #tpu.memory_space<vmem>>, vector<1x8x8xbf16>
    %44 = vector.shape_cast %43 : vector<1x8x8xbf16> to vector<8x8xbf16>
    %cst_59 = arith.constant dense<0.000000e+00> : vector<256x8xf32>
    %45 = tpu.matmul %42, %44, %cst_59 {dimension_numbers = #tpu.dot_dimension_numbers<[1], [0], [0], [1], [0, 0, 1, 1], [], []>} : vector<256x8xbf16>, vector<8x8xbf16>, vector<256x8xf32> -> vector<256x8xf32>
    %46 = arith.addf %39, %45 : vector<256x8xf32>
    %c0_60 = arith.constant 0 : index
    %c1_61 = arith.constant 1 : index
    %c2_62 = arith.constant 2 : index
    %c0_63 = arith.constant 0 : index
    %47 = vector.load %arg5[%c0_60, %c1_61, %c2_62, %c0_63] : memref<1x18x18x8xf32, #tpu.memory_space<vmem>>, vector<1x16x16x8xf32>
    %48 = vector.shape_cast %47 : vector<1x16x16x8xf32> to vector<256x8xf32>
    %49 = arith.truncf %48 : vector<256x8xf32> to vector<256x8xbf16>
    %c5 = arith.constant 5 : index
    %c0_64 = arith.constant 0 : index
    %c0_65 = arith.constant 0 : index
    %50 = vector.load %arg2[%c5, %c0_64, %c0_65] : memref<9x8x8xbf16, #tpu.memory_space<vmem>>, vector<1x8x8xbf16>
    %51 = vector.shape_cast %50 : vector<1x8x8xbf16> to vector<8x8xbf16>
    %cst_66 = arith.constant dense<0.000000e+00> : vector<256x8xf32>
    %52 = tpu.matmul %49, %51, %cst_66 {dimension_numbers = #tpu.dot_dimension_numbers<[1], [0], [0], [1], [0, 0, 1, 1], [], []>} : vector<256x8xbf16>, vector<8x8xbf16>, vector<256x8xf32> -> vector<256x8xf32>
    %53 = arith.addf %46, %52 : vector<256x8xf32>
    %c0_67 = arith.constant 0 : index
    %c2_68 = arith.constant 2 : index
    %c0_69 = arith.constant 0 : index
    %c0_70 = arith.constant 0 : index
    %54 = vector.load %arg5[%c0_67, %c2_68, %c0_69, %c0_70] : memref<1x18x18x8xf32, #tpu.memory_space<vmem>>, vector<1x16x16x8xf32>
    %55 = vector.shape_cast %54 : vector<1x16x16x8xf32> to vector<256x8xf32>
    %56 = arith.truncf %55 : vector<256x8xf32> to vector<256x8xbf16>
    %c6 = arith.constant 6 : index
    %c0_71 = arith.constant 0 : index
    %c0_72 = arith.constant 0 : index
    %57 = vector.load %arg2[%c6, %c0_71, %c0_72] : memref<9x8x8xbf16, #tpu.memory_space<vmem>>, vector<1x8x8xbf16>
    %58 = vector.shape_cast %57 : vector<1x8x8xbf16> to vector<8x8xbf16>
    %cst_73 = arith.constant dense<0.000000e+00> : vector<256x8xf32>
    %59 = tpu.matmul %56, %58, %cst_73 {dimension_numbers = #tpu.dot_dimension_numbers<[1], [0], [0], [1], [0, 0, 1, 1], [], []>} : vector<256x8xbf16>, vector<8x8xbf16>, vector<256x8xf32> -> vector<256x8xf32>
    %60 = arith.addf %53, %59 : vector<256x8xf32>
    %c0_74 = arith.constant 0 : index
    %c2_75 = arith.constant 2 : index
    %c1_76 = arith.constant 1 : index
    %c0_77 = arith.constant 0 : index
    %61 = vector.load %arg5[%c0_74, %c2_75, %c1_76, %c0_77] : memref<1x18x18x8xf32, #tpu.memory_space<vmem>>, vector<1x16x16x8xf32>
    %62 = vector.shape_cast %61 : vector<1x16x16x8xf32> to vector<256x8xf32>
    %63 = arith.truncf %62 : vector<256x8xf32> to vector<256x8xbf16>
    %c7 = arith.constant 7 : index
    %c0_78 = arith.constant 0 : index
    %c0_79 = arith.constant 0 : index
    %64 = vector.load %arg2[%c7, %c0_78, %c0_79] : memref<9x8x8xbf16, #tpu.memory_space<vmem>>, vector<1x8x8xbf16>
    %65 = vector.shape_cast %64 : vector<1x8x8xbf16> to vector<8x8xbf16>
    %cst_80 = arith.constant dense<0.000000e+00> : vector<256x8xf32>
    %66 = tpu.matmul %63, %65, %cst_80 {dimension_numbers = #tpu.dot_dimension_numbers<[1], [0], [0], [1], [0, 0, 1, 1], [], []>} : vector<256x8xbf16>, vector<8x8xbf16>, vector<256x8xf32> -> vector<256x8xf32>
    %67 = arith.addf %60, %66 : vector<256x8xf32>
    %c0_81 = arith.constant 0 : index
    %c2_82 = arith.constant 2 : index
    %c2_83 = arith.constant 2 : index
    %c0_84 = arith.constant 0 : index
    %68 = vector.load %arg5[%c0_81, %c2_82, %c2_83, %c0_84] : memref<1x18x18x8xf32, #tpu.memory_space<vmem>>, vector<1x16x16x8xf32>
    %69 = vector.shape_cast %68 : vector<1x16x16x8xf32> to vector<256x8xf32>
    %70 = arith.truncf %69 : vector<256x8xf32> to vector<256x8xbf16>
    %c8 = arith.constant 8 : index
    %c0_85 = arith.constant 0 : index
    %c0_86 = arith.constant 0 : index
    %71 = vector.load %arg2[%c8, %c0_85, %c0_86] : memref<9x8x8xbf16, #tpu.memory_space<vmem>>, vector<1x8x8xbf16>
    %72 = vector.shape_cast %71 : vector<1x8x8xbf16> to vector<8x8xbf16>
    %cst_87 = arith.constant dense<0.000000e+00> : vector<256x8xf32>
    %73 = tpu.matmul %70, %72, %cst_87 {dimension_numbers = #tpu.dot_dimension_numbers<[1], [0], [0], [1], [0, 0, 1, 1], [], []>} : vector<256x8xbf16>, vector<8x8xbf16>, vector<256x8xf32> -> vector<256x8xf32>
    %74 = arith.addf %67, %73 : vector<256x8xf32>
    %cst_88 = arith.constant 1.000000e+00 : f32
    %75 = vector.broadcast %cst_88 : f32 to vector<1x256xf32>
    %cst_89 = arith.constant dense<0.000000e+00> : vector<1x8xf32>
    %76 = tpu.matmul %75, %74, %cst_89 {dimension_numbers = #tpu.dot_dimension_numbers<[1], [0], [0], [1], [0, 0, 1, 1], [], []>} : vector<1x256xf32>, vector<256x8xf32>, vector<1x8xf32> -> vector<1x8xf32>
    %77 = arith.mulf %74, %74 : vector<256x8xf32>
    %cst_90 = arith.constant dense<0.000000e+00> : vector<1x8xf32>
    %78 = tpu.matmul %75, %77, %cst_90 {dimension_numbers = #tpu.dot_dimension_numbers<[1], [0], [0], [1], [0, 0, 1, 1], [], []>} : vector<1x256xf32>, vector<256x8xf32>, vector<1x8xf32> -> vector<1x8xf32>
    %79 = tpu.concatenate %76, %78 in 0 : vector<1x8xf32>, vector<1x8xf32> -> vector<2x8xf32>
    %80 = vector.shape_cast %79 : vector<2x8xf32> to vector<1x2x8xf32>
    %c0_91 = arith.constant 0 : index
    %c0_92 = arith.constant 0 : index
    %c0_93 = arith.constant 0 : index
    %81 = vector.load %arg4[%c0_91, %c0_92, %c0_93] : memref<1x2x8xf32, #tpu.memory_space<vmem>>, vector<1x2x8xf32>
    tpu.vector_store %arg4[%c0_91, %c0_92, %c0_93], %80 {strides = array<i32>} : memref<1x2x8xf32, #tpu.memory_space<vmem>>, vector<1x2x8xf32>,
    %c0_94 = arith.constant 0 : index
    %c0_95 = arith.constant 0 : index
    %82 = vector.load %arg3[%c0_94, %c0_95] : memref<256x8xf32, #tpu.memory_space<vmem>>, vector<256x8xf32>
    tpu.vector_store %arg3[%c0_94, %c0_95], %74 {strides = array<i32>} : memref<256x8xf32, #tpu.memory_space<vmem>>, vector<256x8xf32>,
    return
  }
  func.func @transform_0(%arg0: i32) -> (i32, i32) {
    %c0_i32 = arith.constant 0 : i32
    %c0_i32_0 = arith.constant 0 : i32
    return %arg0, %c0_i32 : i32, i32
  }
  func.func @transform_1(%arg0: i32) -> (i32, i32, i32) {
    %c0_i32 = arith.constant 0 : i32
    %c0_i32_0 = arith.constant 0 : i32
    %c0_i32_1 = arith.constant 0 : i32
    %c0_i32_2 = arith.constant 0 : i32
    return %c0_i32, %c0_i32_0, %c0_i32_1 : i32, i32, i32
  }
  func.func @transform_2(%arg0: i32) -> (i32, i32) {
    %c0_i32 = arith.constant 0 : i32
    %c0_i32_0 = arith.constant 0 : i32
    return %arg0, %c0_i32 : i32, i32
  }
  func.func @transform_3(%arg0: i32) -> (i32, i32, i32) {
    %c0_i32 = arith.constant 0 : i32
    %c0_i32_0 = arith.constant 0 : i32
    %c0_i32_1 = arith.constant 0 : i32
    return %arg0, %c0_i32, %c0_i32_0 : i32, i32, i32
  }
}

</mosaic_0001>

<llo_original>
// kernel: tpu_custom_call.1
$region0: #{tpu_custom_call.1}
  #allocation0 [shape = 'u32[]', space=smem, size = 0x4, offset = 0x4, fixed_abs, tag = 'smem constant byte address 0x4 - core index']
  #allocation1 [shape = 'u32[144,128]{1,0:T(1,128)}', space=vmem, size = 0x12000, scoped, tag = 'internal scratch']
  #allocation2 [shape = 'f32[1,18,18,8]{3,2,1,0:T(8,128)}', space=vmem, size = 0x36000, scoped, tag = 'scratch operand']
  %s0 = inlined_call_operand.vmem [shape: f32[512,8], index: 0, kind: input, shape index: {}]
  %s1 = inlined_call_operand.vmem [shape: bf16[9,8,8], index: 1, kind: input, shape index: {}]
  %s2 = inlined_call_operand.vmem [shape: f32[512,8], index: 2, kind: output, shape index: {0}]
  %s3 = inlined_call_operand.hbm [shape: f32[2,2,8], index: 3, kind: output, shape index: {1}]
  %4 = xla_tuple %s2, %s3
  %s5 = sld [smem:[#allocation0]]
  $region49: #{tpu_custom_call.1} parent=0
    _
  %s7 = ssub.s32 1, %s5
  %s8 = scalar_select 0, %s7, %s5
  $region1: #{tpu_custom_call.1} parent=0
    #allocation3 [shape = 'u8[2048]{0}', space=vmem, size = 0x800, scoped, tag = 'output window, operand 1']
    #allocation4 [shape = 's32[2]{0}', space=sflag, size = 0x8, scoped, tag = 'scoped memory for tpu_custom_call.1']
    %9 = vsyncpa [#allocation4], 0
    %s10 = scalar_lea.sflag [#allocation4], 1
    %11 = vsyncpa %s10, 0
    loop: start=0, step=1, limit=4
    $region2: #{tpu_custom_call.1} parent=1 // loop_pre_header
      _
    $region3: #{tpu_custom_call.1} parent=1 // loop_header
      %s13 = sphi 0, %s17
      %p14 = scmp.ge.s32.totalorder %s13, 4
      %s23 = sphi 0, %s25
      %s26 = sphi 0, %s23
      %s27 = sphi 0, %s26
      %s43 = sphi 0, %s27
      %s47 = sphi 0, %s47
      %s49 = sphi 0, %s47
      %s50 = sphi 0, %s49
      %s64 = sphi 0, %s50
      %s70 = sphi 0, %s72
      %s73 = sphi 0, %s70
      %s74 = sphi 0, %s73
      %s90 = sphi 0, %s74
      %s96 = sphi 0, %s98
      %s99 = sphi 0, %s96
      %s100 = sphi 0, %s99
      %s116 = sphi 0, %s100
    $region4: #{tpu_custom_call.1} parent=1 // loop_header_branch
      %16 = sbr.rel (%p14) target = $region8
    $region5: #{tpu_custom_call.1} parent=1 // loop_body
      %s18 = ssub.s32 %s13, 1
      %s19 = ssub.s32 %s13, 2
      %s20 = sadd.s32 %s13, 1
      %s21 = ssub.s32 %s13, %s20
      %p22 = scmp.eq.s32.totalorder %s21, 0
      %s24 = sadd.s32 %s23, 1
      %s25 = scalar_select %p22, %s23, %s24
      %p28 = pneg %p22
      %p29 = scmp.eq.s32.totalorder %s13, 1
      %p30 = por %p28, %p29
      %p31 = scmp.ne.s32.totalorder %s23, %s26
      %p32 = scmp.eq.s32.totalorder %s13, 0
      %p33 = por %p31, %p32
      %p34 = scmp.ne.s32.totalorder %s23, %s26
      %p35 = scmp.eq.s32.totalorder %s18, 1
      %p36 = por %p34, %p35
      %p37 = scmp.ne.s32.totalorder %s26, %s27
      %p38 = scmp.eq.s32.totalorder %s18, 0
      %p39 = por %p37, %p38
      %p40 = scmp.ne.s32.totalorder %s26, %s27
      %p41 = scmp.eq.s32.totalorder %s19, 1
      %p42 = por %p40, %p41
      %p44 = scmp.ne.s32.totalorder %s27, %s43
      %p45 = scmp.eq.s32.totalorder %s19, 0
      %p46 = por %p44, %p45
      %s48 = sadd.s32 %s47, 1
      %p51 = scmp.eq.s32.totalorder %s13, 1
      %p52 = scmp.ne.s32.totalorder %s47, %s49
      %p53 = scmp.eq.s32.totalorder %s13, 0
      %p54 = por %p52, %p53
      %p55 = scmp.ne.s32.totalorder %s47, %s49
      %p56 = scmp.eq.s32.totalorder %s18, 1
      %p57 = por %p55, %p56
      %p58 = scmp.ne.s32.totalorder %s49, %s50
      %p59 = scmp.eq.s32.totalorder %s18, 0
      %p60 = por %p58, %p59
      %p61 = scmp.ne.s32.totalorder %s49, %s50
      %p62 = scmp.eq.s32.totalorder %s19, 1
      %p63 = por %p61, %p62
      %p65 = scmp.ne.s32.totalorder %s50, %s64
      %p66 = scmp.eq.s32.totalorder %s19, 0
      %p67 = por %p65, %p66
      %s68 = ssub.s32 %s13, %s20
      %p69 = scmp.eq.s32.totalorder %s68, 0
      %s71 = sadd.s32 %s70, 1
      %s72 = scalar_select %p69, %s70, %s71
      %p75 = pneg %p69
      %p76 = scmp.eq.s32.totalorder %s13, 1
      %p77 = por %p75, %p76
      %p78 = scmp.ne.s32.totalorder %s70, %s73
      %p79 = scmp.eq.s32.totalorder %s13, 0
      %p80 = por %p78, %p79
      %p81 = scmp.ne.s32.totalorder %s70, %s73
      %p82 = scmp.eq.s32.totalorder %s18, 1
      %p83 = por %p81, %p82
      %p84 = scmp.ne.s32.totalorder %s73, %s74
      %p85 = scmp.eq.s32.totalorder %s18, 0
      %p86 = por %p84, %p85
      %p87 = scmp.ne.s32.totalorder %s73, %s74
      %p88 = scmp.eq.s32.totalorder %s19, 1
      %p89 = por %p87, %p88
      %p91 = scmp.ne.s32.totalorder %s74, %s90
      %p92 = scmp.eq.s32.totalorder %s19, 0
      %p93 = por %p91, %p92
      %s94 = ssub.s32 %s13, %s20
      %p95 = scmp.eq.s32.totalorder %s94, 0
      %s97 = sadd.s32 %s96, 1
      %s98 = scalar_select %p95, %s96, %s97
      %p101 = pneg %p95
      %p102 = scmp.eq.s32.totalorder %s13, 1
      %p103 = por %p101, %p102
      %p104 = scmp.ne.s32.totalorder %s96, %s99
      %p105 = scmp.eq.s32.totalorder %s13, 0
      %p106 = por %p104, %p105
      %p107 = scmp.ne.s32.totalorder %s96, %s99
      %p108 = scmp.eq.s32.totalorder %s18, 1
      %p109 = por %p107, %p108
      %p110 = scmp.ne.s32.totalorder %s99, %s100
      %p111 = scmp.eq.s32.totalorder %s18, 0
      %p112 = por %p110, %p111
      %p113 = scmp.ne.s32.totalorder %s99, %s100
      %p114 = scmp.eq.s32.totalorder %s19, 1
      %p115 = por %p113, %p114
      %p117 = scmp.ne.s32.totalorder %s100, %s116
      %p118 = scmp.eq.s32.totalorder %s19, 0
      %p119 = por %p117, %p118
      %p120 = scmp.le.s32.totalorder 1, %s13
      %p121 = scmp.lt.s32.totalorder %s13, 3
      %p122 = pnand %p120, %p121
      %p123 = pneg %p122
      // Predicated region
      $region9: #{tpu_custom_call.1} parent=5 // pred_check
        _
      $region10: #{tpu_custom_call.1} parent=5 // pred_check_branch
        %125 = sbr.rel (%p122) target = $region12
      $region11: #{tpu_custom_call.1} parent=5 // pred_region
        %s126 = ssub.s32 %s13, 1
        // Predicated region
        $region13: #{tpu_custom_call.1} parent=11 // pred_check
          %p127 = pneg %p60
        $region14: #{tpu_custom_call.1} parent=11 // pred_check_branch
          %129 = sbr.rel (%p127) target = $region16
        $region15: #{tpu_custom_call.1} parent=11 // pred_region
          _
        $region16: #{tpu_custom_call.1} parent=11 // pred_fallthru
          _
      $region12: #{tpu_custom_call.1} parent=5 // pred_fallthru
        _
      %p130 = scmp.lt.s32.totalorder %s13, 2
      // Predicated region
      $region17: #{tpu_custom_call.1} parent=5 // pred_check
        %p131 = pneg %p130
      $region18: #{tpu_custom_call.1} parent=5 // pred_check_branch
        %133 = sbr.rel (%p131) target = $region20
      $region19: #{tpu_custom_call.1} parent=5 // pred_region
        // Predicated region
        $region21: #{tpu_custom_call.1} parent=19 // pred_check
          %p134 = pneg %p33
        $region22: #{tpu_custom_call.1} parent=19 // pred_check_branch
          %136 = sbr.rel (%p134) target = $region24
        $region23: #{tpu_custom_call.1} parent=19 // pred_region
          %s137 = smul.u32 32, %s13
          %p138 = scmp.lt.s32.totalorder %s137, 63
          %s139 = scalar_select %p138, %s137, 63
          %s140 = smul.addr %s139, 8
          %s141 = scalar_lea.vmem %s0, %s140
          %s142 = smul.u32 32, %s13
        $region24: #{tpu_custom_call.1} parent=19 // pred_fallthru
          _
      $region20: #{tpu_custom_call.1} parent=5 // pred_fallthru
        _
      %p143 = scmp.le.s32.totalorder 1, %s13
      %p144 = scmp.lt.s32.totalorder %s13, 3
      %p145 = pnand %p143, %p144
      %p146 = pneg %p145
      // Predicated region
      $region25: #{tpu_custom_call.1} parent=5 // pred_check
        _
      $region26: #{tpu_custom_call.1} parent=5 // pred_check_branch
        %148 = sbr.rel (%p145) target = $region28
      $region27: #{tpu_custom_call.1} parent=5 // pred_region
        %s149 = ssub.s32 %s13, 1
        %s150 = smul.u32 32, %s18
        %p151 = scmp.lt.s32.totalorder %s150, 63
        %s152 = scalar_select %p151, %s150, 63
        %s153 = smul.addr %s152, 8
        %s154 = scalar_lea.vmem %s0, %s153
        %p155 = pneg %p39
        %p156 = pneg %p36
        %p157 = pneg %p60
        %p158 = pneg %p57
        %p159 = pneg %p86
        %p160 = pneg %p83
        %s161 = smul.u32 32, %s18
        %p162 = scmp.lt.s32.totalorder %s161, 63
        %s163 = scalar_select %p162, %s161, 63
        %s164 = smul.addr %s163, 8
        %s165 = scalar_lea.vmem %s2, %s164
        %p166 = pneg %p112
        %p167 = pneg %p109
        %s168 = sand.u32 %s99, 1
        %s169 = scalar_lea.sflag [#allocation4], %s168
        %s170 = sand.u32 %s99, 1
        %s171 = smul.addr %s170, 2
        %s172 = scalar_lea.vmem [#allocation3], %s171
        %s173 = smul.u32 32, %s18
        %p174 = scmp.lt.s32.totalorder %s173, 63
        %s175 = scalar_select %p174, %s173, 63
        %s176 = smul.addr %s175, 8
        %s177 = scalar_lea.vmem %s0, %s176
        %s178 = smul.u32 32, %s18
        %s179 = smul.u32 32, %s18
        %p180 = scmp.lt.s32.totalorder %s179, 63
        %s181 = scalar_select %p180, %s179, 63
        %s182 = smul.addr %s181, 8
        %s183 = scalar_lea.vmem %s2, %s182
        %s184 = smul.u32 32, %s18
        %v186 = vld [vmem:[%s177] sm:$0xff]
        %v187 = vld [vmem:[%s177 + $0x8] sm:$0xff]
        %v188 = vld [vmem:[%s177 + $0x10] sm:$0xff]
        %v189 = vld [vmem:[%s177 + $0x18] sm:$0xff]
        %v190 = vld [vmem:[%s177 + $0x20] sm:$0xff]
        %v191 = vld [vmem:[%s177 + $0x28] sm:$0xff]
        %v192 = vld [vmem:[%s177 + $0x30] sm:$0xff]
        %v193 = vld [vmem:[%s177 + $0x38] sm:$0xff]
        %v194 = vld [vmem:[%s177 + $0x40] sm:$0xff]
        %v195 = vld [vmem:[%s177 + $0x48] sm:$0xff]
        %v196 = vld [vmem:[%s177 + $0x50] sm:$0xff]
        %v197 = vld [vmem:[%s177 + $0x58] sm:$0xff]
        %v198 = vld [vmem:[%s177 + $0x60] sm:$0xff]
        %v199 = vld [vmem:[%s177 + $0x68] sm:$0xff]
        %v200 = vld [vmem:[%s177 + $0x70] sm:$0xff]
        %v201 = vld [vmem:[%s177 + $0x78] sm:$0xff]
        %v202 = vld [vmem:[%s177 + $0x80] sm:$0xff]
        %v203 = vld [vmem:[%s177 + $0x88] sm:$0xff]
        %v204 = vld [vmem:[%s177 + $0x90] sm:$0xff]
        %v205 = vld [vmem:[%s177 + $0x98] sm:$0xff]
        %v206 = vld [vmem:[%s177 + $0xa0] sm:$0xff]
        %v207 = vld [vmem:[%s177 + $0xa8] sm:$0xff]
        %v208 = vld [vmem:[%s177 + $0xb0] sm:$0xff]
        %v209 = vld [vmem:[%s177 + $0xb8] sm:$0xff]
        %v210 = vld [vmem:[%s177 + $0xc0] sm:$0xff]
        %v211 = vld [vmem:[%s177 + $0xc8] sm:$0xff]
        %v212 = vld [vmem:[%s177 + $0xd0] sm:$0xff]
        %v213 = vld [vmem:[%s177 + $0xd8] sm:$0xff]
        %v214 = vld [vmem:[%s177 + $0xe0] sm:$0xff]
        %v215 = vld [vmem:[%s177 + $0xe8] sm:$0xff]
        %v216 = vld [vmem:[%s177 + $0xf0] sm:$0xff]
        %v217 = vld [vmem:[%s177 + $0xf8] sm:$0xff]
        %vm218 = vcmask 64512
        %219 = vst.msk [vmem:[#allocation2] sm:$0xff] %vm218, 0.0
        %220 = vst.msk [vmem:[#allocation2 + $0x8] sm:$0xff] %vm218, 0.0
        %vm221 = vcmask 58368
        %222 = vst.msk [vmem:[#allocation2 + $0x10] sm:$0x3] %vm221, 0.0
        %s223 = scalar_lea.vmem [#allocation2], 408
        %224 = vst.msk [vmem:[%s223] sm:$0xff] %vm218, 0.0
        %225 = vst.msk [vmem:[%s223 + $0x8] sm:$0xff] %vm218, 0.0
        %226 = vst.msk [vmem:[%s223 + $0x10] sm:$0x3] %vm221, 0.0
        %vm227 = vcmask 57344
        %228 = vst.msk [vmem:[#allocation2] sm:$0x1] %vm227, 0.0
        %229 = vst.msk [vmem:[#allocation2 + $0x18] sm:$0x1] %vm227, 0.0
        %230 = vst.msk [vmem:[#allocation2 + $0x30] sm:$0x1] %vm227, 0.0
        %231 = vst.msk [vmem:[#allocation2 + $0x48] sm:$0x1] %vm227, 0.0
        %232 = vst.msk [vmem:[#allocation2 + $0x60] sm:$0x1] %vm227, 0.0
        %233 = vst.msk [vmem:[#allocation2 + $0x78] sm:$0x1] %vm227, 0.0
        %234 = vst.msk [vmem:[#allocation2 + $0x90] sm:$0x1] %vm227, 0.0
        %235 = vst.msk [vmem:[#allocation2 + $0xa8] sm:$0x1] %vm227, 0.0
        %236 = vst.msk [vmem:[#allocation2 + $0xc0] sm:$0x1] %vm227, 0.0
        %237 = vst.msk [vmem:[#allocation2 + $0xd8] sm:$0x1] %vm227, 0.0
        %238 = vst.msk [vmem:[#allocation2 + $0xf0] sm:$0x1] %vm227, 0.0
        %239 = vst.msk [vmem:[#allocation2 + $0x108] sm:$0x1] %vm227, 0.0
        %240 = vst.msk [vmem:[#allocation2 + $0x120] sm:$0x1] %vm227, 0.0
        %241 = vst.msk [vmem:[#allocation2 + $0x138] sm:$0x1] %vm227, 0.0
        %242 = vst.msk [vmem:[#allocation2 + $0x150] sm:$0x1] %vm227, 0.0
        %243 = vst.msk [vmem:[#allocation2 + $0x168] sm:$0x1] %vm227, 0.0
        %244 = vst.msk [vmem:[#allocation2 + $0x180] sm:$0x1] %vm227, 0.0
        %245 = vst.msk [vmem:[#allocation2 + $0x198] sm:$0x1] %vm227, 0.0
        %246 = vst.msk [vmem:[#allocation2 + $0x11] sm:$0x1] %vm227, 0.0
        %247 = vst.msk [vmem:[#allocation2 + $0x29] sm:$0x1] %vm227, 0.0
        %248 = vst.msk [vmem:[#allocation2 + $0x41] sm:$0x1] %vm227, 0.0
        %249 = vst.msk [vmem:[#allocation2 + $0x59] sm:$0x1] %vm227, 0.0
        %250 = vst.msk [vmem:[#allocation2 + $0x71] sm:$0x1] %vm227, 0.0
        %251 = vst.msk [vmem:[#allocation2 + $0x89] sm:$0x1] %vm227, 0.0
        %252 = vst.msk [vmem:[#allocation2 + $0xa1] sm:$0x1] %vm227, 0.0
        %253 = vst.msk [vmem:[#allocation2 + $0xb9] sm:$0x1] %vm227, 0.0
        %254 = vst.msk [vmem:[#allocation2 + $0xd1] sm:$0x1] %vm227, 0.0
        %255 = vst.msk [vmem:[#allocation2 + $0xe9] sm:$0x1] %vm227, 0.0
        %256 = vst.msk [vmem:[#allocation2 + $0x101] sm:$0x1] %vm227, 0.0
        %257 = vst.msk [vmem:[#allocation2 + $0x119] sm:$0x1] %vm227, 0.0
        %258 = vst.msk [vmem:[#allocation2 + $0x131] sm:$0x1] %vm227, 0.0
        %259 = vst.msk [vmem:[#allocation2 + $0x149] sm:$0x1] %vm227, 0.0
        %260 = vst.msk [vmem:[#allocation2 + $0x161] sm:$0x1] %vm227, 0.0
        %261 = vst.msk [vmem:[#allocation2 + $0x179] sm:$0x1] %vm227, 0.0
        %262 = vst.msk [vmem:[#allocation2 + $0x191] sm:$0x1] %vm227, 0.0
        %263 = vst.msk [vmem:[#allocation2 + $0x1a9] sm:$0x1] %vm227, 0.0
        %s264 = scalar_lea.vmem [#allocation2], 24
        %265 = vst.msk [vmem:[%s264 + $0x1] sm:$0xff] %vm218, %v186
        %266 = vst.msk [vmem:[%s264 + $0x9] sm:$0xff] %vm218, %v187
        %267 = vst.msk [vmem:[%s264 + $0x19] sm:$0xff] %vm218, %v188
        %268 = vst.msk [vmem:[%s264 + $0x21] sm:$0xff] %vm218, %v189
        %269 = vst.msk [vmem:[%s264 + $0x31] sm:$0xff] %vm218, %v190
        %270 = vst.msk [vmem:[%s264 + $0x39] sm:$0xff] %vm218, %v191
        %271 = vst.msk [vmem:[%s264 + $0x49] sm:$0xff] %vm218, %v192
        %272 = vst.msk [vmem:[%s264 + $0x51] sm:$0xff] %vm218, %v193
        %273 = vst.msk [vmem:[%s264 + $0x61] sm:$0xff] %vm218, %v194
        %274 = vst.msk [vmem:[%s264 + $0x69] sm:$0xff] %vm218, %v195
        %275 = vst.msk [vmem:[%s264 + $0x79] sm:$0xff] %vm218, %v196
        %276 = vst.msk [vmem:[%s264 + $0x81] sm:$0xff] %vm218, %v197
        %277 = vst.msk [vmem:[%s264 + $0x91] sm:$0xff] %vm218, %v198
        %278 = vst.msk [vmem:[%s264 + $0x99] sm:$0xff] %vm218, %v199
        %279 = vst.msk [vmem:[%s264 + $0xa9] sm:$0xff] %vm218, %v200
        %280 = vst.msk [vmem:[%s264 + $0xb1] sm:$0xff] %vm218, %v201
        %281 = vst.msk [vmem:[%s264 + $0xc1] sm:$0xff] %vm218, %v202
        %282 = vst.msk [vmem:[%s264 + $0xc9] sm:$0xff] %vm218, %v203
        %283 = vst.msk [vmem:[%s264 + $0xd9] sm:$0xff] %vm218, %v204
        %284 = vst.msk [vmem:[%s264 + $0xe1] sm:$0xff] %vm218, %v205
        %285 = vst.msk [vmem:[%s264 + $0xf1] sm:$0xff] %vm218, %v206
        %286 = vst.msk [vmem:[%s264 + $0xf9] sm:$0xff] %vm218, %v207
        %287 = vst.msk [vmem:[%s264 + $0x109] sm:$0xff] %vm218, %v208
        %288 = vst.msk [vmem:[%s264 + $0x111] sm:$0xff] %vm218, %v209
        %289 = vst.msk [vmem:[%s264 + $0x121] sm:$0xff] %vm218, %v210
        %290 = vst.msk [vmem:[%s264 + $0x129] sm:$0xff] %vm218, %v211
        %291 = vst.msk [vmem:[%s264 + $0x139] sm:$0xff] %vm218, %v212
        %292 = vst.msk [vmem:[%s264 + $0x141] sm:$0xff] %vm218, %v213
        %293 = vst.msk [vmem:[%s264 + $0x151] sm:$0xff] %vm218, %v214
        %294 = vst.msk [vmem:[%s264 + $0x159] sm:$0xff] %vm218, %v215
        %295 = vst.msk [vmem:[%s264 + $0x169] sm:$0xff] %vm218, %v216
        %296 = vst.msk [vmem:[%s264 + $0x171] sm:$0xff] %vm218, %v217
        %v297 = vld [vmem:[#allocation2] sm:$0xff]
        %v298 = vld [vmem:[#allocation2 + $0x8] sm:$0xff]
        %v299 = vld [vmem:[#allocation2 + $0x18] sm:$0xff]
        %v300 = vld [vmem:[#allocation2 + $0x20] sm:$0xff]
        %v301 = vld [vmem:[#allocation2 + $0x30] sm:$0xff]
        %v302 = vld [vmem:[#allocation2 + $0x38] sm:$0xff]
        %v303 = vld [vmem:[#allocation2 + $0x48] sm:$0xff]
        %v304 = vld [vmem:[#allocation2 + $0x50] sm:$0xff]
        %v305 = vld [vmem:[#allocation2 + $0x60] sm:$0xff]
        %v306 = vld [vmem:[#allocation2 + $0x68] sm:$0xff]
        %v307 = vld [vmem:[#allocation2 + $0x78] sm:$0xff]
        %v308 = vld [vmem:[#allocation2 + $0x80] sm:$0xff]
        %v309 = vld [vmem:[#allocation2 + $0x90] sm:$0xff]
        %v310 = vld [vmem:[#allocation2 + $0x98] sm:$0xff]
        %v311 = vld [vmem:[#allocation2 + $0xa8] sm:$0xff]
        %v312 = vld [vmem:[#allocation2 + $0xb0] sm:$0xff]
        %v313 = vld [vmem:[#allocation2 + $0xc0] sm:$0xff]
        %v314 = vld [vmem:[#allocation2 + $0xc8] sm:$0xff]
        %v315 = vld [vmem:[#allocation2 + $0xd8] sm:$0xff]
        %v316 = vld [vmem:[#allocation2 + $0xe0] sm:$0xff]
        %v317 = vld [vmem:[#allocation2 + $0xf0] sm:$0xff]
        %v318 = vld [vmem:[#allocation2 + $0xf8] sm:$0xff]
        %v319 = vld [vmem:[#allocation2 + $0x108] sm:$0xff]
        %v320 = vld [vmem:[#allocation2 + $0x110] sm:$0xff]
        %v321 = vld [vmem:[#allocation2 + $0x120] sm:$0xff]
        %v322 = vld [vmem:[#allocation2 + $0x128] sm:$0xff]
        %v323 = vld [vmem:[#allocation2 + $0x138] sm:$0xff]
        %v324 = vld [vmem:[#allocation2 + $0x140] sm:$0xff]
        %v325 = vld [vmem:[#allocation2 + $0x150] sm:$0xff]
        %v326 = vld [vmem:[#allocation2 + $0x158] sm:$0xff]
        %v327 = vld [vmem:[#allocation2 + $0x168] sm:$0xff]
        %v328 = vld [vmem:[#allocation2 + $0x170] sm:$0xff]
        %v329 = vpack.c.bf16 %v298, %v297
        %v330 = vpack.c.bf16 %v300, %v299
        %v331 = vpack.c.bf16 %v302, %v301
        %v332 = vpack.c.bf16 %v304, %v303
        %v333 = vpack.c.bf16 %v306, %v305
        %v334 = vpack.c.bf16 %v308, %v307
        %v335 = vpack.c.bf16 %v310, %v309
        %v336 = vpack.c.bf16 %v312, %v311
        %v337 = vpack.c.bf16 %v314, %v313
        %v338 = vpack.c.bf16 %v316, %v315
        %v339 = vpack.c.bf16 %v318, %v317
        %v340 = vpack.c.bf16 %v320, %v319
        %v341 = vpack.c.bf16 %v322, %v321
        %v342 = vpack.c.bf16 %v324, %v323
        %v343 = vpack.c.bf16 %v326, %v325
        %v344 = vpack.c.bf16 %v328, %v327
        %v345 = vld [vmem:[%s1] sm:$0xf]
        %v346 = vld [vmem:[#allocation2 + $0x1] sm:$0xff]
        %v347 = vld [vmem:[#allocation2 + $0x9] sm:$0xff]
        %v348 = vld [vmem:[#allocation2 + $0x19] sm:$0xff]
        %v349 = vld [vmem:[#allocation2 + $0x21] sm:$0xff]
        %v350 = vld [vmem:[#allocation2 + $0x31] sm:$0xff]
        %v351 = vld [vmem:[#allocation2 + $0x39] sm:$0xff]
        %v352 = vld [vmem:[#allocation2 + $0x49] sm:$0xff]
        %v353 = vld [vmem:[#allocation2 + $0x51] sm:$0xff]
        %v354 = vld [vmem:[#allocation2 + $0x61] sm:$0xff]
        %v355 = vld [vmem:[#allocation2 + $0x69] sm:$0xff]
        %v356 = vld [vmem:[#allocation2 + $0x79] sm:$0xff]
        %v357 = vld [vmem:[#allocation2 + $0x81] sm:$0xff]
        %v358 = vld [vmem:[#allocation2 + $0x91] sm:$0xff]
        %v359 = vld [vmem:[#allocation2 + $0x99] sm:$0xff]
        %v360 = vld [vmem:[#allocation2 + $0xa9] sm:$0xff]
        %v361 = vld [vmem:[#allocation2 + $0xb1] sm:$0xff]
        %v362 = vld [vmem:[#allocation2 + $0xc1] sm:$0xff]
        %v363 = vld [vmem:[#allocation2 + $0xc9] sm:$0xff]
        %v364 = vld [vmem:[#allocation2 + $0xd9] sm:$0xff]
        %v365 = vld [vmem:[#allocation2 + $0xe1] sm:$0xff]
        %v366 = vld [vmem:[#allocation2 + $0xf1] sm:$0xff]
        %v367 = vld [vmem:[#allocation2 + $0xf9] sm:$0xff]
        %v368 = vld [vmem:[#allocation2 + $0x109] sm:$0xff]
        %v369 = vld [vmem:[#allocation2 + $0x111] sm:$0xff]
        %v370 = vld [vmem:[#allocation2 + $0x121] sm:$0xff]
        %v371 = vld [vmem:[#allocation2 + $0x129] sm:$0xff]
        %v372 = vld [vmem:[#allocation2 + $0x139] sm:$0xff]
        %v373 = vld [vmem:[#allocation2 + $0x141] sm:$0xff]
        %v374 = vld [vmem:[#allocation2 + $0x151] sm:$0xff]
        %v375 = vld [vmem:[#allocation2 + $0x159] sm:$0xff]
        %v376 = vld [vmem:[#allocation2 + $0x169] sm:$0xff]
        %v377 = vld [vmem:[#allocation2 + $0x171] sm:$0xff]
        %v378 = vpack.c.bf16 %v347, %v346
        %v379 = vpack.c.bf16 %v349, %v348
        %v380 = vpack.c.bf16 %v351, %v350
        %v381 = vpack.c.bf16 %v353, %v352
        %v382 = vpack.c.bf16 %v355, %v354
        %v383 = vpack.c.bf16 %v357, %v356
        %v384 = vpack.c.bf16 %v359, %v358
        %v385 = vpack.c.bf16 %v361, %v360
        %v386 = vpack.c.bf16 %v363, %v362
        %v387 = vpack.c.bf16 %v365, %v364
        %v388 = vpack.c.bf16 %v367, %v366
        %v389 = vpack.c.bf16 %v369, %v368
        %v390 = vpack.c.bf16 %v371, %v370
        %v391 = vpack.c.bf16 %v373, %v372
        %v392 = vpack.c.bf16 %v375, %v374
        %v393 = vpack.c.bf16 %v377, %v376
        %s394 = scalar_lea.vmem %s1, 4
        %v395 = vld [vmem:[%s394] sm:$0xf]
        %v397 = vsel %vm218, %v378, 0
        %v400 = vsel %vm218, %v379, 0
        %v403 = vsel %vm218, %v380, 0
        %v406 = vsel %vm218, %v381, 0
        %v409 = vsel %vm218, %v382, 0
        %v412 = vsel %vm218, %v383, 0
        %v415 = vsel %vm218, %v384, 0
        %v418 = vsel %vm218, %v385, 0
        %v421 = vsel %vm218, %v386, 0
        %v424 = vsel %vm218, %v387, 0
        %v427 = vsel %vm218, %v388, 0
        %v430 = vsel %vm218, %v389, 0
        %v433 = vsel %vm218, %v390, 0
        %v436 = vsel %vm218, %v391, 0
        %v439 = vsel %vm218, %v392, 0
        %v442 = vsel %vm218, %v393, 0
        %vm444 = vcmask 1043456
        %v446 = vsel %vm444, %v395, 0
        %448 = vmatprep.subr.bf16.mxu0 0
        %449 = vmatpush1.bf16.msra.mxu0 %v446
        %450 = vmatprep.subr.bf16.mxu0 0
        %451 = vmatpush1.bf16.msra.mxu0 0
        %452 = vmatprep.subr.bf16.mxu0 0
        %453 = vmatpush1.bf16.msra.mxu0 0
        %454 = vmatprep.subr.bf16.mxu0 0
        %455 = vmatpush1.bf16.msra.mxu0 0
        %456 = vmatprep.subr.bf16.mxu0 0
        %457 = vmatpush1.bf16.msra.mxu0 0
        %458 = vmatprep.subr.bf16.mxu0 0
        %459 = vmatpush1.bf16.msra.mxu0 0
        %460 = vmatprep.subr.bf16.mxu0 0
        %461 = vmatpush1.bf16.msra.mxu0 0
        %462 = vmatprep.subr.bf16.mxu0 0
        %463 = vmatpush1.bf16.msra.mxu0 0
        %464 = vmatprep.subr.bf16.mxu0 0
        %465 = vmatpush1.bf16.msra.mxu0 0
        %466 = vmatprep.subr.bf16.mxu0 0
        %467 = vmatpush1.bf16.msra.mxu0 0
        %468 = vmatprep.subr.bf16.mxu0 0
        %469 = vmatpush1.bf16.msra.mxu0 0
        %470 = vmatprep.subr.bf16.mxu0 0
        %471 = vmatpush1.bf16.msra.mxu0 0
        %472 = vmatprep.subr.bf16.mxu0 0
        %473 = vmatpush1.bf16.msra.mxu0 0
        %474 = vmatprep.subr.bf16.mxu0 0
        %475 = vmatpush1.bf16.msra.mxu0 0
        %476 = vmatprep.subr.bf16.mxu0 0
        %477 = vmatpush1.bf16.msra.mxu0 0
        %478 = vmatprep.subr.bf16.mxu0 0
        %479 = vmatpush1.bf16.msra.mxu0 0
        %480 = vmatprep.mubr.bf16.mxu0 0
        %481 = vmatmul.mubr.bf16.gmra.mrb[0].mxu0 %v397
        %v482 = vpop.f32.mrb[0].mxu0
        %v483 = vadd.f32 0.0, %v482
        %v484 = vpop.f32.mrb[0].mxu0
        %v485 = vpop.f32.mrb[0].mxu0
        %v486 = vadd.f32 0.0, %v485
        %v487 = vpop.f32.mrb[0].mxu0
        %488 = vmatprep.mubr.bf16.mxu0 0
        %489 = vmatmul.mubr.bf16.gmra.mrb[0].mxu0 %v400
        %v490 = vpop.f32.mrb[0].mxu0
        %v491 = vadd.f32 0.0, %v490
        %v492 = vpop.f32.mrb[0].mxu0
        %v493 = vpop.f32.mrb[0].mxu0
        %v494 = vadd.f32 0.0, %v493
        %v495 = vpop.f32.mrb[0].mxu0
        %496 = vmatprep.mubr.bf16.mxu0 0
        %497 = vmatmul.mubr.bf16.gmra.mrb[0].mxu0 %v403
        %v498 = vpop.f32.mrb[0].mxu0
        %v499 = vadd.f32 0.0, %v498
        %v500 = vpop.f32.mrb[0].mxu0
        %v501 = vpop.f32.mrb[0].mxu0
        %v502 = vadd.f32 0.0, %v501
        %v503 = vpop.f32.mrb[0].mxu0
        %504 = vmatprep.mubr.bf16.mxu0 0
        %505 = vmatmul.mubr.bf16.gmra.mrb[0].mxu0 %v406
        %v506 = vpop.f32.mrb[0].mxu0
        %v507 = vadd.f32 0.0, %v506
        %v508 = vpop.f32.mrb[0].mxu0
        %v509 = vpop.f32.mrb[0].mxu0
        %v510 = vadd.f32 0.0, %v509
        %v511 = vpop.f32.mrb[0].mxu0
        %512 = vmatprep.mubr.bf16.mxu0 0
        %513 = vmatmul.mubr.bf16.gmra.mrb[0].mxu0 %v409
        %v514 = vpop.f32.mrb[0].mxu0
        %v515 = vadd.f32 0.0, %v514
        %v516 = vpop.f32.mrb[0].mxu0
        %v517 = vpop.f32.mrb[0].mxu0
        %v518 = vadd.f32 0.0, %v517
        %v519 = vpop.f32.mrb[0].mxu0
        %520 = vmatprep.mubr.bf16.mxu0 0
        %521 = vmatmul.mubr.bf16.gmra.mrb[0].mxu0 %v412
        %v522 = vpop.f32.mrb[0].mxu0
        %v523 = vadd.f32 0.0, %v522
        %v524 = vpop.f32.mrb[0].mxu0
        %v525 = vpop.f32.mrb[0].mxu0
        %v526 = vadd.f32 0.0, %v525
        %v527 = vpop.f32.mrb[0].mxu0
        %528 = vmatprep.mubr.bf16.mxu0 0
        %529 = vmatmul.mubr.bf16.gmra.mrb[0].mxu0 %v415
        %v530 = vpop.f32.mrb[0].mxu0
        %v531 = vadd.f32 0.0, %v530
        %v532 = vpop.f32.mrb[0].mxu0
        %v533 = vpop.f32.mrb[0].mxu0
        %v534 = vadd.f32 0.0, %v533
        %v535 = vpop.f32.mrb[0].mxu0
        %536 = vmatprep.mubr.bf16.mxu0 0
        %537 = vmatmul.mubr.bf16.gmra.mrb[0].mxu0 %v418
        %v538 = vpop.f32.mrb[0].mxu0
        %v539 = vadd.f32 0.0, %v538
        %v540 = vpop.f32.mrb[0].mxu0
        %v541 = vpop.f32.mrb[0].mxu0
        %v542 = vadd.f32 0.0, %v541
        %v543 = vpop.f32.mrb[0].mxu0
        %544 = vmatprep.mubr.bf16.mxu0 0
        %545 = vmatmul.mubr.bf16.gmra.mrb[0].mxu0 %v421
        %v546 = vpop.f32.mrb[0].mxu0
        %v547 = vadd.f32 0.0, %v546
        %v548 = vpop.f32.mrb[0].mxu0
        %v549 = vpop.f32.mrb[0].mxu0
        %v550 = vadd.f32 0.0, %v549
        %v551 = vpop.f32.mrb[0].mxu0
        %552 = vmatprep.mubr.bf16.mxu0 0
        %553 = vmatmul.mubr.bf16.gmra.mrb[0].mxu0 %v424
        %v554 = vpop.f32.mrb[0].mxu0
        %v555 = vadd.f32 0.0, %v554
        %v556 = vpop.f32.mrb[0].mxu0
        %v557 = vpop.f32.mrb[0].mxu0
        %v558 = vadd.f32 0.0, %v557
        %v559 = vpop.f32.mrb[0].mxu0
        %560 = vmatprep.mubr.bf16.mxu0 0
        %561 = vmatmul.mubr.bf16.gmra.mrb[0].mxu0 %v427
        %v562 = vpop.f32.mrb[0].mxu0
        %v563 = vadd.f32 0.0, %v562
        %v564 = vpop.f32.mrb[0].mxu0
        %v565 = vpop.f32.mrb[0].mxu0
        %v566 = vadd.f32 0.0, %v565
        %v567 = vpop.f32.mrb[0].mxu0
        %568 = vmatprep.mubr.bf16.mxu0 0
        %569 = vmatmul.mubr.bf16.gmra.mrb[0].mxu0 %v430
        %v570 = vpop.f32.mrb[0].mxu0
        %v571 = vadd.f32 0.0, %v570
        %v572 = vpop.f32.mrb[0].mxu0
        %v573 = vpop.f32.mrb[0].mxu0
        %v574 = vadd.f32 0.0, %v573
        %v575 = vpop.f32.mrb[0].mxu0
        %576 = vmatprep.mubr.bf16.mxu0 0
        %577 = vmatmul.mubr.bf16.gmra.mrb[0].mxu0 %v433
        %v578 = vpop.f32.mrb[0].mxu0
        %v579 = vadd.f32 0.0, %v578
        %v580 = vpop.f32.mrb[0].mxu0
        %v581 = vpop.f32.mrb[0].mxu0
        %v582 = vadd.f32 0.0, %v581
        %v583 = vpop.f32.mrb[0].mxu0
        %584 = vmatprep.mubr.bf16.mxu0 0
        %585 = vmatmul.mubr.bf16.gmra.mrb[0].mxu0 %v436
        %v586 = vpop.f32.mrb[0].mxu0
        %v587 = vadd.f32 0.0, %v586
        %v588 = vpop.f32.mrb[0].mxu0
        %v589 = vpop.f32.mrb[0].mxu0
        %v590 = vadd.f32 0.0, %v589
        %v591 = vpop.f32.mrb[0].mxu0
        %592 = vmatprep.mubr.bf16.mxu0 0
        %593 = vmatmul.mubr.bf16.gmra.mrb[0].mxu0 %v439
        %v594 = vpop.f32.mrb[0].mxu0
        %v595 = vadd.f32 0.0, %v594
        %v596 = vpop.f32.mrb[0].mxu0
        %v597 = vpop.f32.mrb[0].mxu0
        %v598 = vadd.f32 0.0, %v597
        %v599 = vpop.f32.mrb[0].mxu0
        %600 = vmatprep.mubr.bf16.mxu0 0
        %601 = vmatmul.mubr.bf16.gmra.mrb[0].mxu0 %v442
        %v602 = vpop.f32.mrb[0].mxu0
        %v603 = vadd.f32 0.0, %v602
        %v604 = vpop.f32.mrb[0].mxu0
        %v605 = vpop.f32.mrb[0].mxu0
        %v606 = vadd.f32 0.0, %v605
        %v607 = vpop.f32.mrb[0].mxu0
        %608 = vdwg.mxu0
        %v610 = vsel %vm218, %v329, 0
        %v613 = vsel %vm218, %v330, 0
        %v616 = vsel %vm218, %v331, 0
        %v619 = vsel %vm218, %v332, 0
        %v622 = vsel %vm218, %v333, 0
        %v625 = vsel %vm218, %v334, 0
        %v628 = vsel %vm218, %v335, 0
        %v631 = vsel %vm218, %v336, 0
        %v634 = vsel %vm218, %v337, 0
        %v637 = vsel %vm218, %v338, 0
        %v640 = vsel %vm218, %v339, 0
        %v643 = vsel %vm218, %v340, 0
        %v646 = vsel %vm218, %v341, 0
        %v649 = vsel %vm218, %v342, 0
        %v652 = vsel %vm218, %v343, 0
        %v655 = vsel %vm218, %v344, 0
        %v658 = vsel %vm444, %v345, 0
        %660 = vmatprep.subr.bf16.mxu0 0
        %661 = vmatpush1.bf16.msra.mxu0 %v658
        %662 = vmatprep.subr.bf16.mxu0 0
        %663 = vmatpush1.bf16.msra.mxu0 0
        %664 = vmatprep.subr.bf16.mxu0 0
        %665 = vmatpush1.bf16.msra.mxu0 0
        %666 = vmatprep.subr.bf16.mxu0 0
        %667 = vmatpush1.bf16.msra.mxu0 0
        %668 = vmatprep.subr.bf16.mxu0 0
        %669 = vmatpush1.bf16.msra.mxu0 0
        %670 = vmatprep.subr.bf16.mxu0 0
        %671 = vmatpush1.bf16.msra.mxu0 0
        %672 = vmatprep.subr.bf16.mxu0 0
        %673 = vmatpush1.bf16.msra.mxu0 0
        %674 = vmatprep.subr.bf16.mxu0 0
        %675 = vmatpush1.bf16.msra.mxu0 0
        %676 = vmatprep.subr.bf16.mxu0 0
        %677 = vmatpush1.bf16.msra.mxu0 0
        %678 = vmatprep.subr.bf16.mxu0 0
        %679 = vmatpush1.bf16.msra.mxu0 0
        %680 = vmatprep.subr.bf16.mxu0 0
        %681 = vmatpush1.bf16.msra.mxu0 0
        %682 = vmatprep.subr.bf16.mxu0 0
        %683 = vmatpush1.bf16.msra.mxu0 0
        %684 = vmatprep.subr.bf16.mxu0 0
        %685 = vmatpush1.bf16.msra.mxu0 0
        %686 = vmatprep.subr.bf16.mxu0 0
        %687 = vmatpush1.bf16.msra.mxu0 0
        %688 = vmatprep.subr.bf16.mxu0 0
        %689 = vmatpush1.bf16.msra.mxu0 0
        %690 = vmatprep.subr.bf16.mxu0 0
        %691 = vmatpush1.bf16.msra.mxu0 0
        %692 = vmatprep.mubr.bf16.mxu0 0
        %693 = vmatmul.mubr.bf16.gmra.mrb[0].mxu0 %v610
        %v694 = vpop.f32.mrb[0].mxu0
        %v695 = vadd.f32 %v483, %v694
        %v696 = vpop.f32.mrb[0].mxu0
        %v697 = vpop.f32.mrb[0].mxu0
        %v698 = vadd.f32 %v486, %v697
        %v699 = vpop.f32.mrb[0].mxu0
        %700 = vmatprep.mubr.bf16.mxu0 0
        %701 = vmatmul.mubr.bf16.gmra.mrb[0].mxu0 %v613
        %v702 = vpop.f32.mrb[0].mxu0
        %v703 = vadd.f32 %v491, %v702
        %v704 = vpop.f32.mrb[0].mxu0
        %v705 = vpop.f32.mrb[0].mxu0
        %v706 = vadd.f32 %v494, %v705
        %v707 = vpop.f32.mrb[0].mxu0
        %708 = vmatprep.mubr.bf16.mxu0 0
        %709 = vmatmul.mubr.bf16.gmra.mrb[0].mxu0 %v616
        %v710 = vpop.f32.mrb[0].mxu0
        %v711 = vadd.f32 %v499, %v710
        %v712 = vpop.f32.mrb[0].mxu0
        %v713 = vpop.f32.mrb[0].mxu0
        %v714 = vadd.f32 %v502, %v713
        %v715 = vpop.f32.mrb[0].mxu0
        %716 = vmatprep.mubr.bf16.mxu0 0
        %717 = vmatmul.mubr.bf16.gmra.mrb[0].mxu0 %v619
        %v718 = vpop.f32.mrb[0].mxu0
        %v719 = vadd.f32 %v507, %v718
        %v720 = vpop.f32.mrb[0].mxu0
        %v721 = vpop.f32.mrb[0].mxu0
        %v722 = vadd.f32 %v510, %v721
        %v723 = vpop.f32.mrb[0].mxu0
        %724 = vmatprep.mubr.bf16.mxu0 0
        %725 = vmatmul.mubr.bf16.gmra.mrb[0].mxu0 %v622
        %v726 = vpop.f32.mrb[0].mxu0
        %v727 = vadd.f32 %v515, %v726
        %v728 = vpop.f32.mrb[0].mxu0
        %v729 = vpop.f32.mrb[0].mxu0
        %v730 = vadd.f32 %v518, %v729
        %v731 = vpop.f32.mrb[0].mxu0
        %732 = vmatprep.mubr.bf16.mxu0 0
        %733 = vmatmul.mubr.bf16.gmra.mrb[0].mxu0 %v625
        %v734 = vpop.f32.mrb[0].mxu0
        %v735 = vadd.f32 %v523, %v734
        %v736 = vpop.f32.mrb[0].mxu0
        %v737 = vpop.f32.mrb[0].mxu0
        %v738 = vadd.f32 %v526, %v737
        %v739 = vpop.f32.mrb[0].mxu0
        %740 = vmatprep.mubr.bf16.mxu0 0
        %741 = vmatmul.mubr.bf16.gmra.mrb[0].mxu0 %v628
        %v742 = vpop.f32.mrb[0].mxu0
        %v743 = vadd.f32 %v531, %v742
        %v744 = vpop.f32.mrb[0].mxu0
        %v745 = vpop.f32.mrb[0].mxu0
        %v746 = vadd.f32 %v534, %v745
        %v747 = vpop.f32.mrb[0].mxu0
        %748 = vmatprep.mubr.bf16.mxu0 0
        %749 = vmatmul.mubr.bf16.gmra.mrb[0].mxu0 %v631
        %v750 = vpop.f32.mrb[0].mxu0
        %v751 = vadd.f32 %v539, %v750
        %v752 = vpop.f32.mrb[0].mxu0
        %v753 = vpop.f32.mrb[0].mxu0
        %v754 = vadd.f32 %v542, %v753
        %v755 = vpop.f32.mrb[0].mxu0
        %756 = vmatprep.mubr.bf16.mxu0 0
        %757 = vmatmul.mubr.bf16.gmra.mrb[0].mxu0 %v634
        %v758 = vpop.f32.mrb[0].mxu0
        %v759 = vadd.f32 %v547, %v758
        %v760 = vpop.f32.mrb[0].mxu0
        %v761 = vpop.f32.mrb[0].mxu0
        %v762 = vadd.f32 %v550, %v761
        %v763 = vpop.f32.mrb[0].mxu0
        %764 = vmatprep.mubr.bf16.mxu0 0
        %765 = vmatmul.mubr.bf16.gmra.mrb[0].mxu0 %v637
        %v766 = vpop.f32.mrb[0].mxu0
        %v767 = vadd.f32 %v555, %v766
        %v768 = vpop.f32.mrb[0].mxu0
        %v769 = vpop.f32.mrb[0].mxu0
        %v770 = vadd.f32 %v558, %v769
        %v771 = vpop.f32.mrb[0].mxu0
        %772 = vmatprep.mubr.bf16.mxu0 0
        %773 = vmatmul.mubr.bf16.gmra.mrb[0].mxu0 %v640
        %v774 = vpop.f32.mrb[0].mxu0
        %v775 = vadd.f32 %v563, %v774
        %v776 = vpop.f32.mrb[0].mxu0
        %v777 = vpop.f32.mrb[0].mxu0
        %v778 = vadd.f32 %v566, %v777
        %v779 = vpop.f32.mrb[0].mxu0
        %780 = vmatprep.mubr.bf16.mxu0 0
        %781 = vmatmul.mubr.bf16.gmra.mrb[0].mxu0 %v643
        %v782 = vpop.f32.mrb[0].mxu0
        %v783 = vadd.f32 %v571, %v782
        %v784 = vpop.f32.mrb[0].mxu0
        %v785 = vpop.f32.mrb[0].mxu0
        %v786 = vadd.f32 %v574, %v785
        %v787 = vpop.f32.mrb[0].mxu0
        %788 = vmatprep.mubr.bf16.mxu0 0
        %789 = vmatmul.mubr.bf16.gmra.mrb[0].mxu0 %v646
        %v790 = vpop.f32.mrb[0].mxu0
        %v791 = vadd.f32 %v579, %v790
        %v792 = vpop.f32.mrb[0].mxu0
        %v793 = vpop.f32.mrb[0].mxu0
        %v794 = vadd.f32 %v582, %v793
        %v795 = vpop.f32.mrb[0].mxu0
        %796 = vmatprep.mubr.bf16.mxu0 0
        %797 = vmatmul.mubr.bf16.gmra.mrb[0].mxu0 %v649
        %v798 = vpop.f32.mrb[0].mxu0
        %v799 = vadd.f32 %v587, %v798
        %v800 = vpop.f32.mrb[0].mxu0
        %v801 = vpop.f32.mrb[0].mxu0
        %v802 = vadd.f32 %v590, %v801
        %v803 = vpop.f32.mrb[0].mxu0
        %804 = vmatprep.mubr.bf16.mxu0 0
        %805 = vmatmul.mubr.bf16.gmra.mrb[0].mxu0 %v652
        %v806 = vpop.f32.mrb[0].mxu0
        %v807 = vadd.f32 %v595, %v806
        %v808 = vpop.f32.mrb[0].mxu0
        %v809 = vpop.f32.mrb[0].mxu0
        %v810 = vadd.f32 %v598, %v809
        %v811 = vpop.f32.mrb[0].mxu0
        %812 = vmatprep.mubr.bf16.mxu0 0
        %813 = vmatmul.mubr.bf16.gmra.mrb[0].mxu0 %v655
        %v814 = vpop.f32.mrb[0].mxu0
        %v815 = vadd.f32 %v603, %v814
        %v816 = vpop.f32.mrb[0].mxu0
        %v817 = vpop.f32.mrb[0].mxu0
        %v818 = vadd.f32 %v606, %v817
        %v819 = vpop.f32.mrb[0].mxu0
        %820 = vdwg.mxu0
        %v821 = vld [vmem:[#allocation2 + $0x2] sm:$0xff]
        %v822 = vld [vmem:[#allocation2 + $0xa] sm:$0xff]
        %v823 = vld [vmem:[#allocation2 + $0x1a] sm:$0xff]
        %v824 = vld [vmem:[#allocation2 + $0x22] sm:$0xff]
        %v825 = vld [vmem:[#allocation2 + $0x32] sm:$0xff]
        %v826 = vld [vmem:[#allocation2 + $0x3a] sm:$0xff]
        %v827 = vld [vmem:[#allocation2 + $0x4a] sm:$0xff]
        %v828 = vld [vmem:[#allocation2 + $0x52] sm:$0xff]
        %v829 = vld [vmem:[#allocation2 + $0x62] sm:$0xff]
        %v830 = vld [vmem:[#allocation2 + $0x6a] sm:$0xff]
        %v831 = vld [vmem:[#allocation2 + $0x7a] sm:$0xff]
        %v832 = vld [vmem:[#allocation2 + $0x82] sm:$0xff]
        %v833 = vld [vmem:[#allocation2 + $0x92] sm:$0xff]
        %v834 = vld [vmem:[#allocation2 + $0x9a] sm:$0xff]
        %v835 = vld [vmem:[#allocation2 + $0xaa] sm:$0xff]
        %v836 = vld [vmem:[#allocation2 + $0xb2] sm:$0xff]
        %v837 = vld [vmem:[#allocation2 + $0xc2] sm:$0xff]
        %v838 = vld [vmem:[#allocation2 + $0xca] sm:$0xff]
        %v839 = vld [vmem:[#allocation2 + $0xda] sm:$0xff]
        %v840 = vld [vmem:[#allocation2 + $0xe2] sm:$0xff]
        %v841 = vld [vmem:[#allocation2 + $0xf2] sm:$0xff]
        %v842 = vld [vmem:[#allocation2 + $0xfa] sm:$0xff]
        %v843 = vld [vmem:[#allocation2 + $0x10a] sm:$0xff]
        %v844 = vld [vmem:[#allocation2 + $0x112] sm:$0xff]
        %v845 = vld [vmem:[#allocation2 + $0x122] sm:$0xff]
        %v846 = vld [vmem:[#allocation2 + $0x12a] sm:$0xff]
        %v847 = vld [vmem:[#allocation2 + $0x13a] sm:$0xff]
        %v848 = vld [vmem:[#allocation2 + $0x142] sm:$0xff]
        %v849 = vld [vmem:[#allocation2 + $0x152] sm:$0xff]
        %v850 = vld [vmem:[#allocation2 + $0x15a] sm:$0xff]
        %v851 = vld [vmem:[#allocation2 + $0x16a] sm:$0xff]
        %v852 = vld [vmem:[#allocation2 + $0x172] sm:$0xff]
        %v853 = vpack.c.bf16 %v822, %v821
        %v854 = vpack.c.bf16 %v824, %v823
        %v855 = vpack.c.bf16 %v826, %v825
        %v856 = vpack.c.bf16 %v828, %v827
        %v857 = vpack.c.bf16 %v830, %v829
        %v858 = vpack.c.bf16 %v832, %v831
        %v859 = vpack.c.bf16 %v834, %v833
        %v860 = vpack.c.bf16 %v836, %v835
        %v861 = vpack.c.bf16 %v838, %v837
        %v862 = vpack.c.bf16 %v840, %v839
        %v863 = vpack.c.bf16 %v842, %v841
        %v864 = vpack.c.bf16 %v844, %v843
        %v865 = vpack.c.bf16 %v846, %v845
        %v866 = vpack.c.bf16 %v848, %v847
        %v867 = vpack.c.bf16 %v850, %v849
        %v868 = vpack.c.bf16 %v852, %v851
        %s869 = scalar_lea.vmem %s1, 8
        %v870 = vld [vmem:[%s869] sm:$0xf]
        %v872 = vsel %vm218, %v853, 0
        %v875 = vsel %vm218, %v854, 0
        %v878 = vsel %vm218, %v855, 0
        %v881 = vsel %vm218, %v856, 0
        %v884 = vsel %vm218, %v857, 0
        %v887 = vsel %vm218, %v858, 0
        %v890 = vsel %vm218, %v859, 0
        %v893 = vsel %vm218, %v860, 0
        %v896 = vsel %vm218, %v861, 0
        %v899 = vsel %vm218, %v862, 0
        %v902 = vsel %vm218, %v863, 0
        %v905 = vsel %vm218, %v864, 0
        %v908 = vsel %vm218, %v865, 0
        %v911 = vsel %vm218, %v866, 0
        %v914 = vsel %vm218, %v867, 0
        %v917 = vsel %vm218, %v868, 0
        %v920 = vsel %vm444, %v870, 0
        %922 = vmatprep.subr.bf16.mxu0 0
        %923 = vmatpush1.bf16.msra.mxu0 %v920
        %924 = vmatprep.subr.bf16.mxu0 0
        %925 = vmatpush1.bf16.msra.mxu0 0
        %926 = vmatprep.subr.bf16.mxu0 0
        %927 = vmatpush1.bf16.msra.mxu0 0
        %928 = vmatprep.subr.bf16.mxu0 0
        %929 = vmatpush1.bf16.msra.mxu0 0
        %930 = vmatprep.subr.bf16.mxu0 0
        %931 = vmatpush1.bf16.msra.mxu0 0
        %932 = vmatprep.subr.bf16.mxu0 0
        %933 = vmatpush1.bf16.msra.mxu0 0
        %934 = vmatprep.subr.bf16.mxu0 0
        %935 = vmatpush1.bf16.msra.mxu0 0
        %936 = vmatprep.subr.bf16.mxu0 0
        %937 = vmatpush1.bf16.msra.mxu0 0
        %938 = vmatprep.subr.bf16.mxu0 0
        %939 = vmatpush1.bf16.msra.mxu0 0
        %940 = vmatprep.subr.bf16.mxu0 0
        %941 = vmatpush1.bf16.msra.mxu0 0
        %942 = vmatprep.subr.bf16.mxu0 0
        %943 = vmatpush1.bf16.msra.mxu0 0
        %944 = vmatprep.subr.bf16.mxu0 0
        %945 = vmatpush1.bf16.msra.mxu0 0
        %946 = vmatprep.subr.bf16.mxu0 0
        %947 = vmatpush1.bf16.msra.mxu0 0
        %948 = vmatprep.subr.bf16.mxu0 0
        %949 = vmatpush1.bf16.msra.mxu0 0
        %950 = vmatprep.subr.bf16.mxu0 0
        %951 = vmatpush1.bf16.msra.mxu0 0
        %952 = vmatprep.subr.bf16.mxu0 0
        %953 = vmatpush1.bf16.msra.mxu0 0
        %954 = vmatprep.mubr.bf16.mxu0 0
        %955 = vmatmul.mubr.bf16.gmra.mrb[0].mxu0 %v872
        %v956 = vpop.f32.mrb[0].mxu0
        %v957 = vadd.f32 0.0, %v956
        %v958 = vpop.f32.mrb[0].mxu0
        %v959 = vpop.f32.mrb[0].mxu0
        %v960 = vadd.f32 0.0, %v959
        %v961 = vpop.f32.mrb[0].mxu0
        %962 = vmatprep.mubr.bf16.mxu0 0
        %963 = vmatmul.mubr.bf16.gmra.mrb[0].mxu0 %v875
        %v964 = vpop.f32.mrb[0].mxu0
        %v965 = vadd.f32 0.0, %v964
        %v966 = vpop.f32.mrb[0].mxu0
        %v967 = vpop.f32.mrb[0].mxu0
        %v968 = vadd.f32 0.0, %v967
        %v969 = vpop.f32.mrb[0].mxu0
        %970 = vmatprep.mubr.bf16.mxu0 0
        %971 = vmatmul.mubr.bf16.gmra.mrb[0].mxu0 %v878
        %v972 = vpop.f32.mrb[0].mxu0
        %v973 = vadd.f32 0.0, %v972
        %v974 = vpop.f32.mrb[0].mxu0
        %v975 = vpop.f32.mrb[0].mxu0
        %v976 = vadd.f32 0.0, %v975
        %v977 = vpop.f32.mrb[0].mxu0
        %978 = vmatprep.mubr.bf16.mxu0 0
        %979 = vmatmul.mubr.bf16.gmra.mrb[0].mxu0 %v881
        %v980 = vpop.f32.mrb[0].mxu0
        %v981 = vadd.f32 0.0, %v980
        %v982 = vpop.f32.mrb[0].mxu0
        %v983 = vpop.f32.mrb[0].mxu0
        %v984 = vadd.f32 0.0, %v983
        %v985 = vpop.f32.mrb[0].mxu0
        %986 = vmatprep.mubr.bf16.mxu0 0
        %987 = vmatmul.mubr.bf16.gmra.mrb[0].mxu0 %v884
        %v988 = vpop.f32.mrb[0].mxu0
        %v989 = vadd.f32 0.0, %v988
        %v990 = vpop.f32.mrb[0].mxu0
        %v991 = vpop.f32.mrb[0].mxu0
        %v992 = vadd.f32 0.0, %v991
        %v993 = vpop.f32.mrb[0].mxu0
        %994 = vmatprep.mubr.bf16.mxu0 0
        %995 = vmatmul.mubr.bf16.gmra.mrb[0].mxu0 %v887
        %v996 = vpop.f32.mrb[0].mxu0
        %v997 = vadd.f32 0.0, %v996
        %v998 = vpop.f32.mrb[0].mxu0
        %v999 = vpop.f32.mrb[0].mxu0
        %v1000 = vadd.f32 0.0, %v999
        %v1001 = vpop.f32.mrb[0].mxu0
        %1002 = vmatprep.mubr.bf16.mxu0 0
        %1003 = vmatmul.mubr.bf16.gmra.mrb[0].mxu0 %v890
        %v1004 = vpop.f32.mrb[0].mxu0
        %v1005 = vadd.f32 0.0, %v1004
        %v1006 = vpop.f32.mrb[0].mxu0
        %v1007 = vpop.f32.mrb[0].mxu0
        %v1008 = vadd.f32 0.0, %v1007
        %v1009 = vpop.f32.mrb[0].mxu0
        %1010 = vmatprep.mubr.bf16.mxu0 0
        %1011 = vmatmul.mubr.bf16.gmra.mrb[0].mxu0 %v893
        %v1012 = vpop.f32.mrb[0].mxu0
        %v1013 = vadd.f32 0.0, %v1012
        %v1014 = vpop.f32.mrb[0].mxu0
        %v1015 = vpop.f32.mrb[0].mxu0
        %v1016 = vadd.f32 0.0, %v1015
        %v1017 = vpop.f32.mrb[0].mxu0
        %1018 = vmatprep.mubr.bf16.mxu0 0
        %1019 = vmatmul.mubr.bf16.gmra.mrb[0].mxu0 %v896
        %v1020 = vpop.f32.mrb[0].mxu0
        %v1021 = vadd.f32 0.0, %v1020
        %v1022 = vpop.f32.mrb[0].mxu0
        %v1023 = vpop.f32.mrb[0].mxu0
        %v1024 = vadd.f32 0.0, %v1023
        %v1025 = vpop.f32.mrb[0].mxu0
        %1026 = vmatprep.mubr.bf16.mxu0 0
        %1027 = vmatmul.mubr.bf16.gmra.mrb[0].mxu0 %v899
        %v1028 = vpop.f32.mrb[0].mxu0
        %v1029 = vadd.f32 0.0, %v1028
        %v1030 = vpop.f32.mrb[0].mxu0
        %v1031 = vpop.f32.mrb[0].mxu0
        %v1032 = vadd.f32 0.0, %v1031
        %v1033 = vpop.f32.mrb[0].mxu0
        %1034 = vmatprep.mubr.bf16.mxu0 0
        %1035 = vmatmul.mubr.bf16.gmra.mrb[0].mxu0 %v902
        %v1036 = vpop.f32.mrb[0].mxu0
        %v1037 = vadd.f32 0.0, %v1036
        %v1038 = vpop.f32.mrb[0].mxu0
        %v1039 = vpop.f32.mrb[0].mxu0
        %v1040 = vadd.f32 0.0, %v1039
        %v1041 = vpop.f32.mrb[0].mxu0
        %1042 = vmatprep.mubr.bf16.mxu0 0
        %1043 = vmatmul.mubr.bf16.gmra.mrb[0].mxu0 %v905
        %v1044 = vpop.f32.mrb[0].mxu0
        %v1045 = vadd.f32 0.0, %v1044
        %v1046 = vpop.f32.mrb[0].mxu0
        %v1047 = vpop.f32.mrb[0].mxu0
        %v1048 = vadd.f32 0.0, %v1047
        %v1049 = vpop.f32.mrb[0].mxu0
        %1050 = vmatprep.mubr.bf16.mxu0 0
        %1051 = vmatmul.mubr.bf16.gmra.mrb[0].mxu0 %v908
        %v1052 = vpop.f32.mrb[0].mxu0
        %v1053 = vadd.f32 0.0, %v1052
        %v1054 = vpop.f32.mrb[0].mxu0
        %v1055 = vpop.f32.mrb[0].mxu0
        %v1056 = vadd.f32 0.0, %v1055
        %v1057 = vpop.f32.mrb[0].mxu0
        %1058 = vmatprep.mubr.bf16.mxu0 0
        %1059 = vmatmul.mubr.bf16.gmra.mrb[0].mxu0 %v911
        %v1060 = vpop.f32.mrb[0].mxu0
        %v1061 = vadd.f32 0.0, %v1060
        %v1062 = vpop.f32.mrb[0].mxu0
        %v1063 = vpop.f32.mrb[0].mxu0
        %v1064 = vadd.f32 0.0, %v1063
        %v1065 = vpop.f32.mrb[0].mxu0
        %1066 = vmatprep.mubr.bf16.mxu0 0
        %1067 = vmatmul.mubr.bf16.gmra.mrb[0].mxu0 %v914
        %v1068 = vpop.f32.mrb[0].mxu0
        %v1069 = vadd.f32 0.0, %v1068
        %v1070 = vpop.f32.mrb[0].mxu0
        %v1071 = vpop.f32.mrb[0].mxu0
        %v1072 = vadd.f32 0.0, %v1071
        %v1073 = vpop.f32.mrb[0].mxu0
        %1074 = vmatprep.mubr.bf16.mxu0 0
        %1075 = vmatmul.mubr.bf16.gmra.mrb[0].mxu0 %v917
        %v1076 = vpop.f32.mrb[0].mxu0
        %v1077 = vadd.f32 0.0, %v1076
        %v1078 = vpop.f32.mrb[0].mxu0
        %v1079 = vpop.f32.mrb[0].mxu0
        %v1080 = vadd.f32 0.0, %v1079
        %v1081 = vpop.f32.mrb[0].mxu0
        %1082 = vdwg.mxu0
        %v1083 = vadd.f32 %v695, %v957
        %v1084 = vadd.f32 %v698, %v960
        %v1085 = vadd.f32 %v703, %v965
        %v1086 = vadd.f32 %v706, %v968
        %v1087 = vadd.f32 %v711, %v973
        %v1088 = vadd.f32 %v714, %v976
        %v1089 = vadd.f32 %v719, %v981
        %v1090 = vadd.f32 %v722, %v984
        %v1091 = vadd.f32 %v727, %v989
        %v1092 = vadd.f32 %v730, %v992
        %v1093 = vadd.f32 %v735, %v997
        %v1094 = vadd.f32 %v738, %v1000
        %v1095 = vadd.f32 %v743, %v1005
        %v1096 = vadd.f32 %v746, %v1008
        %v1097 = vadd.f32 %v751, %v1013
        %v1098 = vadd.f32 %v754, %v1016
        %v1099 = vadd.f32 %v759, %v1021
        %v1100 = vadd.f32 %v762, %v1024
        %v1101 = vadd.f32 %v767, %v1029
        %v1102 = vadd.f32 %v770, %v1032
        %v1103 = vadd.f32 %v775, %v1037
        %v1104 = vadd.f32 %v778, %v1040
        %v1105 = vadd.f32 %v783, %v1045
        %v1106 = vadd.f32 %v786, %v1048
        %v1107 = vadd.f32 %v791, %v1053
        %v1108 = vadd.f32 %v794, %v1056
        %v1109 = vadd.f32 %v799, %v1061
        %v1110 = vadd.f32 %v802, %v1064
        %v1111 = vadd.f32 %v807, %v1069
        %v1112 = vadd.f32 %v810, %v1072
        %v1113 = vadd.f32 %v815, %v1077
        %v1114 = vadd.f32 %v818, %v1080
        %v1115 = vld [vmem:[%s264] sm:$0xff]
        %v1116 = vld [vmem:[%s264 + $0x8] sm:$0xff]
        %v1117 = vld [vmem:[%s264 + $0x18] sm:$0xff]
        %v1118 = vld [vmem:[%s264 + $0x20] sm:$0xff]
        %v1119 = vld [vmem:[%s264 + $0x30] sm:$0xff]
        %v1120 = vld [vmem:[%s264 + $0x38] sm:$0xff]
        %v1121 = vld [vmem:[%s264 + $0x48] sm:$0xff]
        %v1122 = vld [vmem:[%s264 + $0x50] sm:$0xff]
        %v1123 = vld [vmem:[%s264 + $0x60] sm:$0xff]
        %v1124 = vld [vmem:[%s264 + $0x68] sm:$0xff]
        %v1125 = vld [vmem:[%s264 + $0x78] sm:$0xff]
        %v1126 = vld [vmem:[%s264 + $0x80] sm:$0xff]
        %v1127 = vld [vmem:[%s264 + $0x90] sm:$0xff]
        %v1128 = vld [vmem:[%s264 + $0x98] sm:$0xff]
        %v1129 = vld [vmem:[%s264 + $0xa8] sm:$0xff]
        %v1130 = vld [vmem:[%s264 + $0xb0] sm:$0xff]
        %v1131 = vld [vmem:[%s264 + $0xc0] sm:$0xff]
        %v1132 = vld [vmem:[%s264 + $0xc8] sm:$0xff]
        %v1133 = vld [vmem:[%s264 + $0xd8] sm:$0xff]
        %v1134 = vld [vmem:[%s264 + $0xe0] sm:$0xff]
        %v1135 = vld [vmem:[%s264 + $0xf0] sm:$0xff]
        %v1136 = vld [vmem:[%s264 + $0xf8] sm:$0xff]
        %v1137 = vld [vmem:[%s264 + $0x108] sm:$0xff]
        %v1138 = vld [vmem:[%s264 + $0x110] sm:$0xff]
        %v1139 = vld [vmem:[%s264 + $0x120] sm:$0xff]
        %v1140 = vld [vmem:[%s264 + $0x128] sm:$0xff]
        %v1141 = vld [vmem:[%s264 + $0x138] sm:$0xff]
        %v1142 = vld [vmem:[%s264 + $0x140] sm:$0xff]
        %v1143 = vld [vmem:[%s264 + $0x150] sm:$0xff]
        %v1144 = vld [vmem:[%s264 + $0x158] sm:$0xff]
        %v1145 = vld [vmem:[%s264 + $0x168] sm:$0xff]
        %v1146 = vld [vmem:[%s264 + $0x170] sm:$0xff]
        %v1147 = vpack.c.bf16 %v1116, %v1115
        %v1148 = vpack.c.bf16 %v1118, %v1117
        %v1149 = vpack.c.bf16 %v1120, %v1119
        %v1150 = vpack.c.bf16 %v1122, %v1121
        %v1151 = vpack.c.bf16 %v1124, %v1123
        %v1152 = vpack.c.bf16 %v1126, %v1125
        %v1153 = vpack.c.bf16 %v1128, %v1127
        %v1154 = vpack.c.bf16 %v1130, %v1129
        %v1155 = vpack.c.bf16 %v1132, %v1131
        %v1156 = vpack.c.bf16 %v1134, %v1133
        %v1157 = vpack.c.bf16 %v1136, %v1135
        %v1158 = vpack.c.bf16 %v1138, %v1137
        %v1159 = vpack.c.bf16 %v1140, %v1139
        %v1160 = vpack.c.bf16 %v1142, %v1141
        %v1161 = vpack.c.bf16 %v1144, %v1143
        %v1162 = vpack.c.bf16 %v1146, %v1145
        %s1163 = scalar_lea.vmem %s1, 12
        %v1164 = vld [vmem:[%s1163] sm:$0xf]
        %v1166 = vsel %vm218, %v1147, 0
        %v1169 = vsel %vm218, %v1148, 0
        %v1172 = vsel %vm218, %v1149, 0
        %v1175 = vsel %vm218, %v1150, 0
        %v1178 = vsel %vm218, %v1151, 0
        %v1181 = vsel %vm218, %v1152, 0
        %v1184 = vsel %vm218, %v1153, 0
        %v1187 = vsel %vm218, %v1154, 0
        %v1190 = vsel %vm218, %v1155, 0
        %v1193 = vsel %vm218, %v1156, 0
        %v1196 = vsel %vm218, %v1157, 0
        %v1199 = vsel %vm218, %v1158, 0
        %v1202 = vsel %vm218, %v1159, 0
        %v1205 = vsel %vm218, %v1160, 0
        %v1208 = vsel %vm218, %v1161, 0
        %v1211 = vsel %vm218, %v1162, 0
        %v1214 = vsel %vm444, %v1164, 0
        %1216 = vmatprep.subr.bf16.mxu0 0
        %1217 = vmatpush1.bf16.msra.mxu0 %v1214
        %1218 = vmatprep.subr.bf16.mxu0 0
        %1219 = vmatpush1.bf16.msra.mxu0 0
        %1220 = vmatprep.subr.bf16.mxu0 0
        %1221 = vmatpush1.bf16.msra.mxu0 0
        %1222 = vmatprep.subr.bf16.mxu0 0
        %1223 = vmatpush1.bf16.msra.mxu0 0
        %1224 = vmatprep.subr.bf16.mxu0 0
        %1225 = vmatpush1.bf16.msra.mxu0 0
        %1226 = vmatprep.subr.bf16.mxu0 0
        %1227 = vmatpush1.bf16.msra.mxu0 0
        %1228 = vmatprep.subr.bf16.mxu0 0
        %1229 = vmatpush1.bf16.msra.mxu0 0
        %1230 = vmatprep.subr.bf16.mxu0 0
        %1231 = vmatpush1.bf16.msra.mxu0 0
        %1232 = vmatprep.subr.bf16.mxu0 0
        %1233 = vmatpush1.bf16.msra.mxu0 0
        %1234 = vmatprep.subr.bf16.mxu0 0
        %1235 = vmatpush1.bf16.msra.mxu0 0
        %1236 = vmatprep.subr.bf16.mxu0 0
        %1237 = vmatpush1.bf16.msra.mxu0 0
        %1238 = vmatprep.subr.bf16.mxu0 0
        %1239 = vmatpush1.bf16.msra.mxu0 0
        %1240 = vmatprep.subr.bf16.mxu0 0
        %1241 = vmatpush1.bf16.msra.mxu0 0
        %1242 = vmatprep.subr.bf16.mxu0 0
        %1243 = vmatpush1.bf16.msra.mxu0 0
        %1244 = vmatprep.subr.bf16.mxu0 0
        %1245 = vmatpush1.bf16.msra.mxu0 0
        %1246 = vmatprep.subr.bf16.mxu0 0
        %1247 = vmatpush1.bf16.msra.mxu0 0
        %1248 = vmatprep.mubr.bf16.mxu0 0
        %1249 = vmatmul.mubr.bf16.gmra.mrb[0].mxu0 %v1166
        %v1250 = vpop.f32.mrb[0].mxu0
        %v1251 = vadd.f32 0.0, %v1250
        %v1252 = vpop.f32.mrb[0].mxu0
        %v1253 = vpop.f32.mrb[0].mxu0
        %v1254 = vadd.f32 0.0, %v1253
        %v1255 = vpop.f32.mrb[0].mxu0
        %1256 = vmatprep.mubr.bf16.mxu0 0
        %1257 = vmatmul.mubr.bf16.gmra.mrb[0].mxu0 %v1169
        %v1258 = vpop.f32.mrb[0].mxu0
        %v1259 = vadd.f32 0.0, %v1258
        %v1260 = vpop.f32.mrb[0].mxu0
        %v1261 = vpop.f32.mrb[0].mxu0
        %v1262 = vadd.f32 0.0, %v1261
        %v1263 = vpop.f32.mrb[0].mxu0
        %1264 = vmatprep.mubr.bf16.mxu0 0
        %1265 = vmatmul.mubr.bf16.gmra.mrb[0].mxu0 %v1172
        %v1266 = vpop.f32.mrb[0].mxu0
        %v1267 = vadd.f32 0.0, %v1266
        %v1268 = vpop.f32.mrb[0].mxu0
        %v1269 = vpop.f32.mrb[0].mxu0
        %v1270 = vadd.f32 0.0, %v1269
        %v1271 = vpop.f32.mrb[0].mxu0
        %1272 = vmatprep.mubr.bf16.mxu0 0
        %1273 = vmatmul.mubr.bf16.gmra.mrb[0].mxu0 %v1175
        %v1274 = vpop.f32.mrb[0].mxu0
        %v1275 = vadd.f32 0.0, %v1274
        %v1276 = vpop.f32.mrb[0].mxu0
        %v1277 = vpop.f32.mrb[0].mxu0
        %v1278 = vadd.f32 0.0, %v1277
        %v1279 = vpop.f32.mrb[0].mxu0
        %1280 = vmatprep.mubr.bf16.mxu0 0
        %1281 = vmatmul.mubr.bf16.gmra.mrb[0].mxu0 %v1178
        %v1282 = vpop.f32.mrb[0].mxu0
        %v1283 = vadd.f32 0.0, %v1282
        %v1284 = vpop.f32.mrb[0].mxu0
        %v1285 = vpop.f32.mrb[0].mxu0
        %v1286 = vadd.f32 0.0, %v1285
        %v1287 = vpop.f32.mrb[0].mxu0
        %1288 = vmatprep.mubr.bf16.mxu0 0
        %1289 = vmatmul.mubr.bf16.gmra.mrb[0].mxu0 %v1181
        %v1290 = vpop.f32.mrb[0].mxu0
        %v1291 = vadd.f32 0.0, %v1290
        %v1292 = vpop.f32.mrb[0].mxu0
        %v1293 = vpop.f32.mrb[0].mxu0
        %v1294 = vadd.f32 0.0, %v1293
        %v1295 = vpop.f32.mrb[0].mxu0
        %1296 = vmatprep.mubr.bf16.mxu0 0
        %1297 = vmatmul.mubr.bf16.gmra.mrb[0].mxu0 %v1184
        %v1298 = vpop.f32.mrb[0].mxu0
        %v1299 = vadd.f32 0.0, %v1298
        %v1300 = vpop.f32.mrb[0].mxu0
        %v1301 = vpop.f32.mrb[0].mxu0
        %v1302 = vadd.f32 0.0, %v1301
        %v1303 = vpop.f32.mrb[0].mxu0
        %1304 = vmatprep.mubr.bf16.mxu0 0
        %1305 = vmatmul.mubr.bf16.gmra.mrb[0].mxu0 %v1187
        %v1306 = vpop.f32.mrb[0].mxu0
        %v1307 = vadd.f32 0.0, %v1306
        %v1308 = vpop.f32.mrb[0].mxu0
        %v1309 = vpop.f32.mrb[0].mxu0
        %v1310 = vadd.f32 0.0, %v1309
        %v1311 = vpop.f32.mrb[0].mxu0
        %1312 = vmatprep.mubr.bf16.mxu0 0
        %1313 = vmatmul.mubr.bf16.gmra.mrb[0].mxu0 %v1190
        %v1314 = vpop.f32.mrb[0].mxu0
        %v1315 = vadd.f32 0.0, %v1314
        %v1316 = vpop.f32.mrb[0].mxu0
        %v1317 = vpop.f32.mrb[0].mxu0
        %v1318 = vadd.f32 0.0, %v1317
        %v1319 = vpop.f32.mrb[0].mxu0
        %1320 = vmatprep.mubr.bf16.mxu0 0
        %1321 = vmatmul.mubr.bf16.gmra.mrb[0].mxu0 %v1193
        %v1322 = vpop.f32.mrb[0].mxu0
        %v1323 = vadd.f32 0.0, %v1322
        %v1324 = vpop.f32.mrb[0].mxu0
        %v1325 = vpop.f32.mrb[0].mxu0
        %v1326 = vadd.f32 0.0, %v1325
        %v1327 = vpop.f32.mrb[0].mxu0
        %1328 = vmatprep.mubr.bf16.mxu0 0
        %1329 = vmatmul.mubr.bf16.gmra.mrb[0].mxu0 %v1196
        %v1330 = vpop.f32.mrb[0].mxu0
        %v1331 = vadd.f32 0.0, %v1330
        %v1332 = vpop.f32.mrb[0].mxu0
        %v1333 = vpop.f32.mrb[0].mxu0
        %v1334 = vadd.f32 0.0, %v1333
        %v1335 = vpop.f32.mrb[0].mxu0
        %1336 = vmatprep.mubr.bf16.mxu0 0
        %1337 = vmatmul.mubr.bf16.gmra.mrb[0].mxu0 %v1199
        %v1338 = vpop.f32.mrb[0].mxu0
        %v1339 = vadd.f32 0.0, %v1338
        %v1340 = vpop.f32.mrb[0].mxu0
        %v1341 = vpop.f32.mrb[0].mxu0
        %v1342 = vadd.f32 0.0, %v1341
        %v1343 = vpop.f32.mrb[0].mxu0
        %1344 = vmatprep.mubr.bf16.mxu0 0
        %1345 = vmatmul.mubr.bf16.gmra.mrb[0].mxu0 %v1202
        %v1346 = vpop.f32.mrb[0].mxu0
        %v1347 = vadd.f32 0.0, %v1346
        %v1348 = vpop.f32.mrb[0].mxu0
        %v1349 = vpop.f32.mrb[0].mxu0
        %v1350 = vadd.f32 0.0, %v1349
        %v1351 = vpop.f32.mrb[0].mxu0
        %1352 = vmatprep.mubr.bf16.mxu0 0
        %1353 = vmatmul.mubr.bf16.gmra.mrb[0].mxu0 %v1205
        %v1354 = vpop.f32.mrb[0].mxu0
        %v1355 = vadd.f32 0.0, %v1354
        %v1356 = vpop.f32.mrb[0].mxu0
        %v1357 = vpop.f32.mrb[0].mxu0
        %v1358 = vadd.f32 0.0, %v1357
        %v1359 = vpop.f32.mrb[0].mxu0
        %1360 = vmatprep.mubr.bf16.mxu0 0
        %1361 = vmatmul.mubr.bf16.gmra.mrb[0].mxu0 %v1208
        %v1362 = vpop.f32.mrb[0].mxu0
        %v1363 = vadd.f32 0.0, %v1362
        %v1364 = vpop.f32.mrb[0].mxu0
        %v1365 = vpop.f32.mrb[0].mxu0
        %v1366 = vadd.f32 0.0, %v1365
        %v1367 = vpop.f32.mrb[0].mxu0
        %1368 = vmatprep.mubr.bf16.mxu0 0
        %1369 = vmatmul.mubr.bf16.gmra.mrb[0].mxu0 %v1211
        %v1370 = vpop.f32.mrb[0].mxu0
        %v1371 = vadd.f32 0.0, %v1370
        %v1372 = vpop.f32.mrb[0].mxu0
        %v1373 = vpop.f32.mrb[0].mxu0
        %v1374 = vadd.f32 0.0, %v1373
        %v1375 = vpop.f32.mrb[0].mxu0
        %1376 = vdwg.mxu0
        %v1377 = vadd.f32 %v1083, %v1251
        %v1378 = vadd.f32 %v1084, %v1254
        %v1379 = vadd.f32 %v1085, %v1259
        %v1380 = vadd.f32 %v1086, %v1262
        %v1381 = vadd.f32 %v1087, %v1267
        %v1382 = vadd.f32 %v1088, %v1270
        %v1383 = vadd.f32 %v1089, %v1275
        %v1384 = vadd.f32 %v1090, %v1278
        %v1385 = vadd.f32 %v1091, %v1283
        %v1386 = vadd.f32 %v1092, %v1286
        %v1387 = vadd.f32 %v1093, %v1291
        %v1388 = vadd.f32 %v1094, %v1294
        %v1389 = vadd.f32 %v1095, %v1299
        %v1390 = vadd.f32 %v1096, %v1302
        %v1391 = vadd.f32 %v1097, %v1307
        %v1392 = vadd.f32 %v1098, %v1310
        %v1393 = vadd.f32 %v1099, %v1315
        %v1394 = vadd.f32 %v1100, %v1318
        %v1395 = vadd.f32 %v1101, %v1323
        %v1396 = vadd.f32 %v1102, %v1326
        %v1397 = vadd.f32 %v1103, %v1331
        %v1398 = vadd.f32 %v1104, %v1334
        %v1399 = vadd.f32 %v1105, %v1339
        %v1400 = vadd.f32 %v1106, %v1342
        %v1401 = vadd.f32 %v1107, %v1347
        %v1402 = vadd.f32 %v1108, %v1350
        %v1403 = vadd.f32 %v1109, %v1355
        %v1404 = vadd.f32 %v1110, %v1358
        %v1405 = vadd.f32 %v1111, %v1363
        %v1406 = vadd.f32 %v1112, %v1366
        %v1407 = vadd.f32 %v1113, %v1371
        %v1408 = vadd.f32 %v1114, %v1374
        %v1409 = vld [vmem:[%s264 + $0x1] sm:$0xff]
        %v1410 = vld [vmem:[%s264 + $0x9] sm:$0xff]
        %v1411 = vld [vmem:[%s264 + $0x19] sm:$0xff]
        %v1412 = vld [vmem:[%s264 + $0x21] sm:$0xff]
        %v1413 = vld [vmem:[%s264 + $0x31] sm:$0xff]
        %v1414 = vld [vmem:[%s264 + $0x39] sm:$0xff]
        %v1415 = vld [vmem:[%s264 + $0x49] sm:$0xff]
        %v1416 = vld [vmem:[%s264 + $0x51] sm:$0xff]
        %v1417 = vld [vmem:[%s264 + $0x61] sm:$0xff]
        %v1418 = vld [vmem:[%s264 + $0x69] sm:$0xff]
        %v1419 = vld [vmem:[%s264 + $0x79] sm:$0xff]
        %v1420 = vld [vmem:[%s264 + $0x81] sm:$0xff]
        %v1421 = vld [vmem:[%s264 + $0x91] sm:$0xff]
        %v1422 = vld [vmem:[%s264 + $0x99] sm:$0xff]
        %v1423 = vld [vmem:[%s264 + $0xa9] sm:$0xff]
        %v1424 = vld [vmem:[%s264 + $0xb1] sm:$0xff]
        %v1425 = vld [vmem:[%s264 + $0xc1] sm:$0xff]
        %v1426 = vld [vmem:[%s264 + $0xc9] sm:$0xff]
        %v1427 = vld [vmem:[%s264 + $0xd9] sm:$0xff]
        %v1428 = vld [vmem:[%s264 + $0xe1] sm:$0xff]
        %v1429 = vld [vmem:[%s264 + $0xf1] sm:$0xff]
        %v1430 = vld [vmem:[%s264 + $0xf9] sm:$0xff]
        %v1431 = vld [vmem:[%s264 + $0x109] sm:$0xff]
        %v1432 = vld [vmem:[%s264 + $0x111] sm:$0xff]
        %v1433 = vld [vmem:[%s264 + $0x121] sm:$0xff]
        %v1434 = vld [vmem:[%s264 + $0x129] sm:$0xff]
        %v1435 = vld [vmem:[%s264 + $0x139] sm:$0xff]
        %v1436 = vld [vmem:[%s264 + $0x141] sm:$0xff]
        %v1437 = vld [vmem:[%s264 + $0x151] sm:$0xff]
        %v1438 = vld [vmem:[%s264 + $0x159] sm:$0xff]
        %v1439 = vld [vmem:[%s264 + $0x169] sm:$0xff]
        %v1440 = vld [vmem:[%s264 + $0x171] sm:$0xff]
        %v1441 = vpack.c.bf16 %v1410, %v1409
        %v1442 = vpack.c.bf16 %v1412, %v1411
        %v1443 = vpack.c.bf16 %v1414, %v1413
        %v1444 = vpack.c.bf16 %v1416, %v1415
        %v1445 = vpack.c.bf16 %v1418, %v1417
        %v1446 = vpack.c.bf16 %v1420, %v1419
        %v1447 = vpack.c.bf16 %v1422, %v1421
        %v1448 = vpack.c.bf16 %v1424, %v1423
        %v1449 = vpack.c.bf16 %v1426, %v1425
        %v1450 = vpack.c.bf16 %v1428, %v1427
        %v1451 = vpack.c.bf16 %v1430, %v1429
        %v1452 = vpack.c.bf16 %v1432, %v1431
        %v1453 = vpack.c.bf16 %v1434, %v1433
        %v1454 = vpack.c.bf16 %v1436, %v1435
        %v1455 = vpack.c.bf16 %v1438, %v1437
        %v1456 = vpack.c.bf16 %v1440, %v1439
        %s1457 = scalar_lea.vmem %s1, 16
        %v1458 = vld [vmem:[%s1457] sm:$0xf]
        %v1460 = vsel %vm218, %v1441, 0
        %v1463 = vsel %vm218, %v1442, 0
        %v1466 = vsel %vm218, %v1443, 0
        %v1469 = vsel %vm218, %v1444, 0
        %v1472 = vsel %vm218, %v1445, 0
        %v1475 = vsel %vm218, %v1446, 0
        %v1478 = vsel %vm218, %v1447, 0
        %v1481 = vsel %vm218, %v1448, 0
        %v1484 = vsel %vm218, %v1449, 0
        %v1487 = vsel %vm218, %v1450, 0
        %v1490 = vsel %vm218, %v1451, 0
        %v1493 = vsel %vm218, %v1452, 0
        %v1496 = vsel %vm218, %v1453, 0
        %v1499 = vsel %vm218, %v1454, 0
        %v1502 = vsel %vm218, %v1455, 0
        %v1505 = vsel %vm218, %v1456, 0
        %v1508 = vsel %vm444, %v1458, 0
        %1510 = vmatprep.subr.bf16.mxu0 0
        %1511 = vmatpush1.bf16.msra.mxu0 %v1508
        %1512 = vmatprep.subr.bf16.mxu0 0
        %1513 = vmatpush1.bf16.msra.mxu0 0
        %1514 = vmatprep.subr.bf16.mxu0 0
        %1515 = vmatpush1.bf16.msra.mxu0 0
        %1516 = vmatprep.subr.bf16.mxu0 0
        %1517 = vmatpush1.bf16.msra.mxu0 0
        %1518 = vmatprep.subr.bf16.mxu0 0
        %1519 = vmatpush1.bf16.msra.mxu0 0
        %1520 = vmatprep.subr.bf16.mxu0 0
        %1521 = vmatpush1.bf16.msra.mxu0 0
        %1522 = vmatprep.subr.bf16.mxu0 0
        %1523 = vmatpush1.bf16.msra.mxu0 0
        %1524 = vmatprep.subr.bf16.mxu0 0
        %1525 = vmatpush1.bf16.msra.mxu0 0
        %1526 = vmatprep.subr.bf16.mxu0 0
        %1527 = vmatpush1.bf16.msra.mxu0 0
        %1528 = vmatprep.subr.bf16.mxu0 0
        %1529 = vmatpush1.bf16.msra.mxu0 0
        %1530 = vmatprep.subr.bf16.mxu0 0
        %1531 = vmatpush1.bf16.msra.mxu0 0
        %1532 = vmatprep.subr.bf16.mxu0 0
        %1533 = vmatpush1.bf16.msra.mxu0 0
        %1534 = vmatprep.subr.bf16.mxu0 0
        %1535 = vmatpush1.bf16.msra.mxu0 0
        %1536 = vmatprep.subr.bf16.mxu0 0
        %1537 = vmatpush1.bf16.msra.mxu0 0
        %1538 = vmatprep.subr.bf16.mxu0 0
        %1539 = vmatpush1.bf16.msra.mxu0 0
        %1540 = vmatprep.subr.bf16.mxu0 0
        %1541 = vmatpush1.bf16.msra.mxu0 0
        %1542 = vmatprep.mubr.bf16.mxu0 0
        %1543 = vmatmul.mubr.bf16.gmra.mrb[0].mxu0 %v1460
        %v1544 = vpop.f32.mrb[0].mxu0
        %v1545 = vadd.f32 0.0, %v1544
        %v1546 = vpop.f32.mrb[0].mxu0
        %v1547 = vpop.f32.mrb[0].mxu0
        %v1548 = vadd.f32 0.0, %v1547
        %v1549 = vpop.f32.mrb[0].mxu0
        %1550 = vmatprep.mubr.bf16.mxu0 0
        %1551 = vmatmul.mubr.bf16.gmra.mrb[0].mxu0 %v1463
        %v1552 = vpop.f32.mrb[0].mxu0
        %v1553 = vadd.f32 0.0, %v1552
        %v1554 = vpop.f32.mrb[0].mxu0
        %v1555 = vpop.f32.mrb[0].mxu0
        %v1556 = vadd.f32 0.0, %v1555
        %v1557 = vpop.f32.mrb[0].mxu0
        %1558 = vmatprep.mubr.bf16.mxu0 0
        %1559 = vmatmul.mubr.bf16.gmra.mrb[0].mxu0 %v1466
        %v1560 = vpop.f32.mrb[0].mxu0
        %v1561 = vadd.f32 0.0, %v1560
        %v1562 = vpop.f32.mrb[0].mxu0
        %v1563 = vpop.f32.mrb[0].mxu0
        %v1564 = vadd.f32 0.0, %v1563
        %v1565 = vpop.f32.mrb[0].mxu0
        %1566 = vmatprep.mubr.bf16.mxu0 0
        %1567 = vmatmul.mubr.bf16.gmra.mrb[0].mxu0 %v1469
        %v1568 = vpop.f32.mrb[0].mxu0
        %v1569 = vadd.f32 0.0, %v1568
        %v1570 = vpop.f32.mrb[0].mxu0
        %v1571 = vpop.f32.mrb[0].mxu0
        %v1572 = vadd.f32 0.0, %v1571
        %v1573 = vpop.f32.mrb[0].mxu0
        %1574 = vmatprep.mubr.bf16.mxu0 0
        %1575 = vmatmul.mubr.bf16.gmra.mrb[0].mxu0 %v1472
        %v1576 = vpop.f32.mrb[0].mxu0
        %v1577 = vadd.f32 0.0, %v1576
        %v1578 = vpop.f32.mrb[0].mxu0
        %v1579 = vpop.f32.mrb[0].mxu0
        %v1580 = vadd.f32 0.0, %v1579
        %v1581 = vpop.f32.mrb[0].mxu0
        %1582 = vmatprep.mubr.bf16.mxu0 0
        %1583 = vmatmul.mubr.bf16.gmra.mrb[0].mxu0 %v1475
        %v1584 = vpop.f32.mrb[0].mxu0
        %v1585 = vadd.f32 0.0, %v1584
        %v1586 = vpop.f32.mrb[0].mxu0
        %v1587 = vpop.f32.mrb[0].mxu0
        %v1588 = vadd.f32 0.0, %v1587
        %v1589 = vpop.f32.mrb[0].mxu0
        %1590 = vmatprep.mubr.bf16.mxu0 0
        %1591 = vmatmul.mubr.bf16.gmra.mrb[0].mxu0 %v1478
        %v1592 = vpop.f32.mrb[0].mxu0
        %v1593 = vadd.f32 0.0, %v1592
        %v1594 = vpop.f32.mrb[0].mxu0
        %v1595 = vpop.f32.mrb[0].mxu0
        %v1596 = vadd.f32 0.0, %v1595
        %v1597 = vpop.f32.mrb[0].mxu0
        %1598 = vmatprep.mubr.bf16.mxu0 0
        %1599 = vmatmul.mubr.bf16.gmra.mrb[0].mxu0 %v1481
        %v1600 = vpop.f32.mrb[0].mxu0
        %v1601 = vadd.f32 0.0, %v1600
        %v1602 = vpop.f32.mrb[0].mxu0
        %v1603 = vpop.f32.mrb[0].mxu0
        %v1604 = vadd.f32 0.0, %v1603
        %v1605 = vpop.f32.mrb[0].mxu0
        %1606 = vmatprep.mubr.bf16.mxu0 0
        %1607 = vmatmul.mubr.bf16.gmra.mrb[0].mxu0 %v1484
        %v1608 = vpop.f32.mrb[0].mxu0
        %v1609 = vadd.f32 0.0, %v1608
        %v1610 = vpop.f32.mrb[0].mxu0
        %v1611 = vpop.f32.mrb[0].mxu0
        %v1612 = vadd.f32 0.0, %v1611
        %v1613 = vpop.f32.mrb[0].mxu0
        %1614 = vmatprep.mubr.bf16.mxu0 0
        %1615 = vmatmul.mubr.bf16.gmra.mrb[0].mxu0 %v1487
        %v1616 = vpop.f32.mrb[0].mxu0
        %v1617 = vadd.f32 0.0, %v1616
        %v1618 = vpop.f32.mrb[0].mxu0
        %v1619 = vpop.f32.mrb[0].mxu0
        %v1620 = vadd.f32 0.0, %v1619
        %v1621 = vpop.f32.mrb[0].mxu0
        %1622 = vmatprep.mubr.bf16.mxu0 0
        %1623 = vmatmul.mubr.bf16.gmra.mrb[0].mxu0 %v1490
        %v1624 = vpop.f32.mrb[0].mxu0
        %v1625 = vadd.f32 0.0, %v1624
        %v1626 = vpop.f32.mrb[0].mxu0
        %v1627 = vpop.f32.mrb[0].mxu0
        %v1628 = vadd.f32 0.0, %v1627
        %v1629 = vpop.f32.mrb[0].mxu0
        %1630 = vmatprep.mubr.bf16.mxu0 0
        %1631 = vmatmul.mubr.bf16.gmra.mrb[0].mxu0 %v1493
        %v1632 = vpop.f32.mrb[0].mxu0
        %v1633 = vadd.f32 0.0, %v1632
        %v1634 = vpop.f32.mrb[0].mxu0
        %v1635 = vpop.f32.mrb[0].mxu0
        %v1636 = vadd.f32 0.0, %v1635
        %v1637 = vpop.f32.mrb[0].mxu0
        %1638 = vmatprep.mubr.bf16.mxu0 0
        %1639 = vmatmul.mubr.bf16.gmra.mrb[0].mxu0 %v1496
        %v1640 = vpop.f32.mrb[0].mxu0
        %v1641 = vadd.f32 0.0, %v1640
        %v1642 = vpop.f32.mrb[0].mxu0
        %v1643 = vpop.f32.mrb[0].mxu0
        %v1644 = vadd.f32 0.0, %v1643
        %v1645 = vpop.f32.mrb[0].mxu0
        %1646 = vmatprep.mubr.bf16.mxu0 0
        %1647 = vmatmul.mubr.bf16.gmra.mrb[0].mxu0 %v1499
        %v1648 = vpop.f32.mrb[0].mxu0
        %v1649 = vadd.f32 0.0, %v1648
        %v1650 = vpop.f32.mrb[0].mxu0
        %v1651 = vpop.f32.mrb[0].mxu0
        %v1652 = vadd.f32 0.0, %v1651
        %v1653 = vpop.f32.mrb[0].mxu0
        %1654 = vmatprep.mubr.bf16.mxu0 0
        %1655 = vmatmul.mubr.bf16.gmra.mrb[0].mxu0 %v1502
        %v1656 = vpop.f32.mrb[0].mxu0
        %v1657 = vadd.f32 0.0, %v1656
        %v1658 = vpop.f32.mrb[0].mxu0
        %v1659 = vpop.f32.mrb[0].mxu0
        %v1660 = vadd.f32 0.0, %v1659
        %v1661 = vpop.f32.mrb[0].mxu0
        %1662 = vmatprep.mubr.bf16.mxu0 0
        %1663 = vmatmul.mubr.bf16.gmra.mrb[0].mxu0 %v1505
        %v1664 = vpop.f32.mrb[0].mxu0
        %v1665 = vadd.f32 0.0, %v1664
        %v1666 = vpop.f32.mrb[0].mxu0
        %v1667 = vpop.f32.mrb[0].mxu0
        %v1668 = vadd.f32 0.0, %v1667
        %v1669 = vpop.f32.mrb[0].mxu0
        %1670 = vdwg.mxu0
        %v1671 = vadd.f32 %v1377, %v1545
        %v1672 = vadd.f32 %v1378, %v1548
        %v1673 = vadd.f32 %v1379, %v1553
        %v1674 = vadd.f32 %v1380, %v1556
        %v1675 = vadd.f32 %v1381, %v1561
        %v1676 = vadd.f32 %v1382, %v1564
        %v1677 = vadd.f32 %v1383, %v1569
        %v1678 = vadd.f32 %v1384, %v1572
        %v1679 = vadd.f32 %v1385, %v1577
        %v1680 = vadd.f32 %v1386, %v1580
        %v1681 = vadd.f32 %v1387, %v1585
        %v1682 = vadd.f32 %v1388, %v1588
        %v1683 = vadd.f32 %v1389, %v1593
        %v1684 = vadd.f32 %v1390, %v1596
        %v1685 = vadd.f32 %v1391, %v1601
        %v1686 = vadd.f32 %v1392, %v1604
        %v1687 = vadd.f32 %v1393, %v1609
        %v1688 = vadd.f32 %v1394, %v1612
        %v1689 = vadd.f32 %v1395, %v1617
        %v1690 = vadd.f32 %v1396, %v1620
        %v1691 = vadd.f32 %v1397, %v1625
        %v1692 = vadd.f32 %v1398, %v1628
        %v1693 = vadd.f32 %v1399, %v1633
        %v1694 = vadd.f32 %v1400, %v1636
        %v1695 = vadd.f32 %v1401, %v1641
        %v1696 = vadd.f32 %v1402, %v1644
        %v1697 = vadd.f32 %v1403, %v1649
        %v1698 = vadd.f32 %v1404, %v1652
        %v1699 = vadd.f32 %v1405, %v1657
        %v1700 = vadd.f32 %v1406, %v1660
        %v1701 = vadd.f32 %v1407, %v1665
        %v1702 = vadd.f32 %v1408, %v1668
        %v1703 = vld [vmem:[%s264 + $0x2] sm:$0xff]
        %v1704 = vld [vmem:[%s264 + $0xa] sm:$0xff]
        %v1705 = vld [vmem:[%s264 + $0x1a] sm:$0xff]
        %v1706 = vld [vmem:[%s264 + $0x22] sm:$0xff]
        %v1707 = vld [vmem:[%s264 + $0x32] sm:$0xff]
        %v1708 = vld [vmem:[%s264 + $0x3a] sm:$0xff]
        %v1709 = vld [vmem:[%s264 + $0x4a] sm:$0xff]
        %v1710 = vld [vmem:[%s264 + $0x52] sm:$0xff]
        %v1711 = vld [vmem:[%s264 + $0x62] sm:$0xff]
        %v1712 = vld [vmem:[%s264 + $0x6a] sm:$0xff]
        %v1713 = vld [vmem:[%s264 + $0x7a] sm:$0xff]
        %v1714 = vld [vmem:[%s264 + $0x82] sm:$0xff]
        %v1715 = vld [vmem:[%s264 + $0x92] sm:$0xff]
        %v1716 = vld [vmem:[%s264 + $0x9a] sm:$0xff]
        %v1717 = vld [vmem:[%s264 + $0xaa] sm:$0xff]
        %v1718 = vld [vmem:[%s264 + $0xb2] sm:$0xff]
        %v1719 = vld [vmem:[%s264 + $0xc2] sm:$0xff]
        %v1720 = vld [vmem:[%s264 + $0xca] sm:$0xff]
        %v1721 = vld [vmem:[%s264 + $0xda] sm:$0xff]
        %v1722 = vld [vmem:[%s264 + $0xe2] sm:$0xff]
        %v1723 = vld [vmem:[%s264 + $0xf2] sm:$0xff]
        %v1724 = vld [vmem:[%s264 + $0xfa] sm:$0xff]
        %v1725 = vld [vmem:[%s264 + $0x10a] sm:$0xff]
        %v1726 = vld [vmem:[%s264 + $0x112] sm:$0xff]
        %v1727 = vld [vmem:[%s264 + $0x122] sm:$0xff]
        %v1728 = vld [vmem:[%s264 + $0x12a] sm:$0xff]
        %v1729 = vld [vmem:[%s264 + $0x13a] sm:$0xff]
        %v1730 = vld [vmem:[%s264 + $0x142] sm:$0xff]
        %v1731 = vld [vmem:[%s264 + $0x152] sm:$0xff]
        %v1732 = vld [vmem:[%s264 + $0x15a] sm:$0xff]
        %v1733 = vld [vmem:[%s264 + $0x16a] sm:$0xff]
        %v1734 = vld [vmem:[%s264 + $0x172] sm:$0xff]
        %v1735 = vpack.c.bf16 %v1704, %v1703
        %v1736 = vpack.c.bf16 %v1706, %v1705
        %v1737 = vpack.c.bf16 %v1708, %v1707
        %v1738 = vpack.c.bf16 %v1710, %v1709
        %v1739 = vpack.c.bf16 %v1712, %v1711
        %v1740 = vpack.c.bf16 %v1714, %v1713
        %v1741 = vpack.c.bf16 %v1716, %v1715
        %v1742 = vpack.c.bf16 %v1718, %v1717
        %v1743 = vpack.c.bf16 %v1720, %v1719
        %v1744 = vpack.c.bf16 %v1722, %v1721
        %v1745 = vpack.c.bf16 %v1724, %v1723
        %v1746 = vpack.c.bf16 %v1726, %v1725
        %v1747 = vpack.c.bf16 %v1728, %v1727
        %v1748 = vpack.c.bf16 %v1730, %v1729
        %v1749 = vpack.c.bf16 %v1732, %v1731
        %v1750 = vpack.c.bf16 %v1734, %v1733
        %s1751 = scalar_lea.vmem %s1, 20
        %v1752 = vld [vmem:[%s1751] sm:$0xf]
        %v1754 = vsel %vm218, %v1735, 0
        %v1757 = vsel %vm218, %v1736, 0
        %v1760 = vsel %vm218, %v1737, 0
        %v1763 = vsel %vm218, %v1738, 0
        %v1766 = vsel %vm218, %v1739, 0
        %v1769 = vsel %vm218, %v1740, 0
        %v1772 = vsel %vm218, %v1741, 0
        %v1775 = vsel %vm218, %v1742, 0
        %v1778 = vsel %vm218, %v1743, 0
        %v1781 = vsel %vm218, %v1744, 0
        %v1784 = vsel %vm218, %v1745, 0
        %v1787 = vsel %vm218, %v1746, 0
        %v1790 = vsel %vm218, %v1747, 0
        %v1793 = vsel %vm218, %v1748, 0
        %v1796 = vsel %vm218, %v1749, 0
        %v1799 = vsel %vm218, %v1750, 0
        %v1802 = vsel %vm444, %v1752, 0
        %1804 = vmatprep.subr.bf16.mxu0 0
        %1805 = vmatpush1.bf16.msra.mxu0 %v1802
        %1806 = vmatprep.subr.bf16.mxu0 0
        %1807 = vmatpush1.bf16.msra.mxu0 0
        %1808 = vmatprep.subr.bf16.mxu0 0
        %1809 = vmatpush1.bf16.msra.mxu0 0
        %1810 = vmatprep.subr.bf16.mxu0 0
        %1811 = vmatpush1.bf16.msra.mxu0 0
        %1812 = vmatprep.subr.bf16.mxu0 0
        %1813 = vmatpush1.bf16.msra.mxu0 0
        %1814 = vmatprep.subr.bf16.mxu0 0
        %1815 = vmatpush1.bf16.msra.mxu0 0
        %1816 = vmatprep.subr.bf16.mxu0 0
        %1817 = vmatpush1.bf16.msra.mxu0 0
        %1818 = vmatprep.subr.bf16.mxu0 0
        %1819 = vmatpush1.bf16.msra.mxu0 0
        %1820 = vmatprep.subr.bf16.mxu0 0
        %1821 = vmatpush1.bf16.msra.mxu0 0
        %1822 = vmatprep.subr.bf16.mxu0 0
        %1823 = vmatpush1.bf16.msra.mxu0 0
        %1824 = vmatprep.subr.bf16.mxu0 0
        %1825 = vmatpush1.bf16.msra.mxu0 0
        %1826 = vmatprep.subr.bf16.mxu0 0
        %1827 = vmatpush1.bf16.msra.mxu0 0
        %1828 = vmatprep.subr.bf16.mxu0 0
        %1829 = vmatpush1.bf16.msra.mxu0 0
        %1830 = vmatprep.subr.bf16.mxu0 0
        %1831 = vmatpush1.bf16.msra.mxu0 0
        %1832 = vmatprep.subr.bf16.mxu0 0
        %1833 = vmatpush1.bf16.msra.mxu0 0
        %1834 = vmatprep.subr.bf16.mxu0 0
        %1835 = vmatpush1.bf16.msra.mxu0 0
        %1836 = vmatprep.mubr.bf16.mxu0 0
        %1837 = vmatmul.mubr.bf16.gmra.mrb[0].mxu0 %v1754
        %v1838 = vpop.f32.mrb[0].mxu0
        %v1839 = vadd.f32 0.0, %v1838
        %v1840 = vpop.f32.mrb[0].mxu0
        %v1841 = vpop.f32.mrb[0].mxu0
        %v1842 = vadd.f32 0.0, %v1841
        %v1843 = vpop.f32.mrb[0].mxu0
        %1844 = vmatprep.mubr.bf16.mxu0 0
        %1845 = vmatmul.mubr.bf16.gmra.mrb[0].mxu0 %v1757
        %v1846 = vpop.f32.mrb[0].mxu0
        %v1847 = vadd.f32 0.0, %v1846
        %v1848 = vpop.f32.mrb[0].mxu0
        %v1849 = vpop.f32.mrb[0].mxu0
        %v1850 = vadd.f32 0.0, %v1849
        %v1851 = vpop.f32.mrb[0].mxu0
        %1852 = vmatprep.mubr.bf16.mxu0 0
        %1853 = vmatmul.mubr.bf16.gmra.mrb[0].mxu0 %v1760
        %v1854 = vpop.f32.mrb[0].mxu0
        %v1855 = vadd.f32 0.0, %v1854
        %v1856 = vpop.f32.mrb[0].mxu0
        %v1857 = vpop.f32.mrb[0].mxu0
        %v1858 = vadd.f32 0.0, %v1857
        %v1859 = vpop.f32.mrb[0].mxu0
        %1860 = vmatprep.mubr.bf16.mxu0 0
        %1861 = vmatmul.mubr.bf16.gmra.mrb[0].mxu0 %v1763
        %v1862 = vpop.f32.mrb[0].mxu0
        %v1863 = vadd.f32 0.0, %v1862
        %v1864 = vpop.f32.mrb[0].mxu0
        %v1865 = vpop.f32.mrb[0].mxu0
        %v1866 = vadd.f32 0.0, %v1865
        %v1867 = vpop.f32.mrb[0].mxu0
        %1868 = vmatprep.mubr.bf16.mxu0 0
        %1869 = vmatmul.mubr.bf16.gmra.mrb[0].mxu0 %v1766
        %v1870 = vpop.f32.mrb[0].mxu0
        %v1871 = vadd.f32 0.0, %v1870
        %v1872 = vpop.f32.mrb[0].mxu0
        %v1873 = vpop.f32.mrb[0].mxu0
        %v1874 = vadd.f32 0.0, %v1873
        %v1875 = vpop.f32.mrb[0].mxu0
        %1876 = vmatprep.mubr.bf16.mxu0 0
        %1877 = vmatmul.mubr.bf16.gmra.mrb[0].mxu0 %v1769
        %v1878 = vpop.f32.mrb[0].mxu0
        %v1879 = vadd.f32 0.0, %v1878
        %v1880 = vpop.f32.mrb[0].mxu0
        %v1881 = vpop.f32.mrb[0].mxu0
        %v1882 = vadd.f32 0.0, %v1881
        %v1883 = vpop.f32.mrb[0].mxu0
        %1884 = vmatprep.mubr.bf16.mxu0 0
        %1885 = vmatmul.mubr.bf16.gmra.mrb[0].mxu0 %v1772
        %v1886 = vpop.f32.mrb[0].mxu0
        %v1887 = vadd.f32 0.0, %v1886
        %v1888 = vpop.f32.mrb[0].mxu0
        %v1889 = vpop.f32.mrb[0].mxu0
        %v1890 = vadd.f32 0.0, %v1889
        %v1891 = vpop.f32.mrb[0].mxu0
        %1892 = vmatprep.mubr.bf16.mxu0 0
        %1893 = vmatmul.mubr.bf16.gmra.mrb[0].mxu0 %v1775
        %v1894 = vpop.f32.mrb[0].mxu0
        %v1895 = vadd.f32 0.0, %v1894
        %v1896 = vpop.f32.mrb[0].mxu0
        %v1897 = vpop.f32.mrb[0].mxu0
        %v1898 = vadd.f32 0.0, %v1897
        %v1899 = vpop.f32.mrb[0].mxu0
        %1900 = vmatprep.mubr.bf16.mxu0 0
        %1901 = vmatmul.mubr.bf16.gmra.mrb[0].mxu0 %v1778
        %v1902 = vpop.f32.mrb[0].mxu0
        %v1903 = vadd.f32 0.0, %v1902
        %v1904 = vpop.f32.mrb[0].mxu0
        %v1905 = vpop.f32.mrb[0].mxu0
        %v1906 = vadd.f32 0.0, %v1905
        %v1907 = vpop.f32.mrb[0].mxu0
        %1908 = vmatprep.mubr.bf16.mxu0 0
        %1909 = vmatmul.mubr.bf16.gmra.mrb[0].mxu0 %v1781
        %v1910 = vpop.f32.mrb[0].mxu0
        %v1911 = vadd.f32 0.0, %v1910
        %v1912 = vpop.f32.mrb[0].mxu0
        %v1913 = vpop.f32.mrb[0].mxu0
        %v1914 = vadd.f32 0.0, %v1913
        %v1915 = vpop.f32.mrb[0].mxu0
        %1916 = vmatprep.mubr.bf16.mxu0 0
        %1917 = vmatmul.mubr.bf16.gmra.mrb[0].mxu0 %v1784
        %v1918 = vpop.f32.mrb[0].mxu0
        %v1919 = vadd.f32 0.0, %v1918
        %v1920 = vpop.f32.mrb[0].mxu0
        %v1921 = vpop.f32.mrb[0].mxu0
        %v1922 = vadd.f32 0.0, %v1921
        %v1923 = vpop.f32.mrb[0].mxu0
        %1924 = vmatprep.mubr.bf16.mxu0 0
        %1925 = vmatmul.mubr.bf16.gmra.mrb[0].mxu0 %v1787
        %v1926 = vpop.f32.mrb[0].mxu0
        %v1927 = vadd.f32 0.0, %v1926
        %v1928 = vpop.f32.mrb[0].mxu0
        %v1929 = vpop.f32.mrb[0].mxu0
        %v1930 = vadd.f32 0.0, %v1929
        %v1931 = vpop.f32.mrb[0].mxu0
        %1932 = vmatprep.mubr.bf16.mxu0 0
        %1933 = vmatmul.mubr.bf16.gmra.mrb[0].mxu0 %v1790
        %v1934 = vpop.f32.mrb[0].mxu0
        %v1935 = vadd.f32 0.0, %v1934
        %v1936 = vpop.f32.mrb[0].mxu0
        %v1937 = vpop.f32.mrb[0].mxu0
        %v1938 = vadd.f32 0.0, %v1937
        %v1939 = vpop.f32.mrb[0].mxu0
        %1940 = vmatprep.mubr.bf16.mxu0 0
        %1941 = vmatmul.mubr.bf16.gmra.mrb[0].mxu0 %v1793
        %v1942 = vpop.f32.mrb[0].mxu0
        %v1943 = vadd.f32 0.0, %v1942
        %v1944 = vpop.f32.mrb[0].mxu0
        %v1945 = vpop.f32.mrb[0].mxu0
        %v1946 = vadd.f32 0.0, %v1945
        %v1947 = vpop.f32.mrb[0].mxu0
        %1948 = vmatprep.mubr.bf16.mxu0 0
        %1949 = vmatmul.mubr.bf16.gmra.mrb[0].mxu0 %v1796
        %v1950 = vpop.f32.mrb[0].mxu0
        %v1951 = vadd.f32 0.0, %v1950
        %v1952 = vpop.f32.mrb[0].mxu0
        %v1953 = vpop.f32.mrb[0].mxu0
        %v1954 = vadd.f32 0.0, %v1953
        %v1955 = vpop.f32.mrb[0].mxu0
        %1956 = vmatprep.mubr.bf16.mxu0 0
        %1957 = vmatmul.mubr.bf16.gmra.mrb[0].mxu0 %v1799
        %v1958 = vpop.f32.mrb[0].mxu0
        %v1959 = vadd.f32 0.0, %v1958
        %v1960 = vpop.f32.mrb[0].mxu0
        %v1961 = vpop.f32.mrb[0].mxu0
        %v1962 = vadd.f32 0.0, %v1961
        %v1963 = vpop.f32.mrb[0].mxu0
        %1964 = vdwg.mxu0
        %v1965 = vadd.f32 %v1671, %v1839
        %v1966 = vadd.f32 %v1672, %v1842
        %v1967 = vadd.f32 %v1673, %v1847
        %v1968 = vadd.f32 %v1674, %v1850
        %v1969 = vadd.f32 %v1675, %v1855
        %v1970 = vadd.f32 %v1676, %v1858
        %v1971 = vadd.f32 %v1677, %v1863
        %v1972 = vadd.f32 %v1678, %v1866
        %v1973 = vadd.f32 %v1679, %v1871
        %v1974 = vadd.f32 %v1680, %v1874
        %v1975 = vadd.f32 %v1681, %v1879
        %v1976 = vadd.f32 %v1682, %v1882
        %v1977 = vadd.f32 %v1683, %v1887
        %v1978 = vadd.f32 %v1684, %v1890
        %v1979 = vadd.f32 %v1685, %v1895
        %v1980 = vadd.f32 %v1686, %v1898
        %v1981 = vadd.f32 %v1687, %v1903
        %v1982 = vadd.f32 %v1688, %v1906
        %v1983 = vadd.f32 %v1689, %v1911
        %v1984 = vadd.f32 %v1690, %v1914
        %v1985 = vadd.f32 %v1691, %v1919
        %v1986 = vadd.f32 %v1692, %v1922
        %v1987 = vadd.f32 %v1693, %v1927
        %v1988 = vadd.f32 %v1694, %v1930
        %v1989 = vadd.f32 %v1695, %v1935
        %v1990 = vadd.f32 %v1696, %v1938
        %v1991 = vadd.f32 %v1697, %v1943
        %v1992 = vadd.f32 %v1698, %v1946
        %v1993 = vadd.f32 %v1699, %v1951
        %v1994 = vadd.f32 %v1700, %v1954
        %v1995 = vadd.f32 %v1701, %v1959
        %v1996 = vadd.f32 %v1702, %v1962
        %s1997 = scalar_lea.vmem [#allocation2], 48
        %v1998 = vld [vmem:[%s1997] sm:$0xff]
        %v1999 = vld [vmem:[%s1997 + $0x8] sm:$0xff]
        %v2000 = vld [vmem:[%s1997 + $0x18] sm:$0xff]
        %v2001 = vld [vmem:[%s1997 + $0x20] sm:$0xff]
        %v2002 = vld [vmem:[%s1997 + $0x30] sm:$0xff]
        %v2003 = vld [vmem:[%s1997 + $0x38] sm:$0xff]
        %v2004 = vld [vmem:[%s1997 + $0x48] sm:$0xff]
        %v2005 = vld [vmem:[%s1997 + $0x50] sm:$0xff]
        %v2006 = vld [vmem:[%s1997 + $0x60] sm:$0xff]
        %v2007 = vld [vmem:[%s1997 + $0x68] sm:$0xff]
        %v2008 = vld [vmem:[%s1997 + $0x78] sm:$0xff]
        %v2009 = vld [vmem:[%s1997 + $0x80] sm:$0xff]
        %v2010 = vld [vmem:[%s1997 + $0x90] sm:$0xff]
        %v2011 = vld [vmem:[%s1997 + $0x98] sm:$0xff]
        %v2012 = vld [vmem:[%s1997 + $0xa8] sm:$0xff]
        %v2013 = vld [vmem:[%s1997 + $0xb0] sm:$0xff]
        %v2014 = vld [vmem:[%s1997 + $0xc0] sm:$0xff]
        %v2015 = vld [vmem:[%s1997 + $0xc8] sm:$0xff]
        %v2016 = vld [vmem:[%s1997 + $0xd8] sm:$0xff]
        %v2017 = vld [vmem:[%s1997 + $0xe0] sm:$0xff]
        %v2018 = vld [vmem:[%s1997 + $0xf0] sm:$0xff]
        %v2019 = vld [vmem:[%s1997 + $0xf8] sm:$0xff]
        %v2020 = vld [vmem:[%s1997 + $0x108] sm:$0xff]
        %v2021 = vld [vmem:[%s1997 + $0x110] sm:$0xff]
        %v2022 = vld [vmem:[%s1997 + $0x120] sm:$0xff]
        %v2023 = vld [vmem:[%s1997 + $0x128] sm:$0xff]
        %v2024 = vld [vmem:[%s1997 + $0x138] sm:$0xff]
        %v2025 = vld [vmem:[%s1997 + $0x140] sm:$0xff]
        %v2026 = vld [vmem:[%s1997 + $0x150] sm:$0xff]
        %v2027 = vld [vmem:[%s1997 + $0x158] sm:$0xff]
        %v2028 = vld [vmem:[%s1997 + $0x168] sm:$0xff]
        %v2029 = vld [vmem:[%s1997 + $0x170] sm:$0xff]
        %v2030 = vpack.c.bf16 %v1999, %v1998
        %v2031 = vpack.c.bf16 %v2001, %v2000
        %v2032 = vpack.c.bf16 %v2003, %v2002
        %v2033 = vpack.c.bf16 %v2005, %v2004
        %v2034 = vpack.c.bf16 %v2007, %v2006
        %v2035 = vpack.c.bf16 %v2009, %v2008
        %v2036 = vpack.c.bf16 %v2011, %v2010
        %v2037 = vpack.c.bf16 %v2013, %v2012
        %v2038 = vpack.c.bf16 %v2015, %v2014
        %v2039 = vpack.c.bf16 %v2017, %v2016
        %v2040 = vpack.c.bf16 %v2019, %v2018
        %v2041 = vpack.c.bf16 %v2021, %v2020
        %v2042 = vpack.c.bf16 %v2023, %v2022
        %v2043 = vpack.c.bf16 %v2025, %v2024
        %v2044 = vpack.c.bf16 %v2027, %v2026
        %v2045 = vpack.c.bf16 %v2029, %v2028
        %s2046 = scalar_lea.vmem %s1, 24
        %v2047 = vld [vmem:[%s2046] sm:$0xf]
        %v2049 = vsel %vm218, %v2030, 0
        %v2052 = vsel %vm218, %v2031, 0
        %v2055 = vsel %vm218, %v2032, 0
        %v2058 = vsel %vm218, %v2033, 0
        %v2061 = vsel %vm218, %v2034, 0
        %v2064 = vsel %vm218, %v2035, 0
        %v2067 = vsel %vm218, %v2036, 0
        %v2070 = vsel %vm218, %v2037, 0
        %v2073 = vsel %vm218, %v2038, 0
        %v2076 = vsel %vm218, %v2039, 0
        %v2079 = vsel %vm218, %v2040, 0
        %v2082 = vsel %vm218, %v2041, 0
        %v2085 = vsel %vm218, %v2042, 0
        %v2088 = vsel %vm218, %v2043, 0
        %v2091 = vsel %vm218, %v2044, 0
        %v2094 = vsel %vm218, %v2045, 0
        %v2097 = vsel %vm444, %v2047, 0
        %2099 = vmatprep.subr.bf16.mxu0 0
        %2100 = vmatpush1.bf16.msra.mxu0 %v2097
        %2101 = vmatprep.subr.bf16.mxu0 0
        %2102 = vmatpush1.bf16.msra.mxu0 0
        %2103 = vmatprep.subr.bf16.mxu0 0
        %2104 = vmatpush1.bf16.msra.mxu0 0
        %2105 = vmatprep.subr.bf16.mxu0 0
        %2106 = vmatpush1.bf16.msra.mxu0 0
        %2107 = vmatprep.subr.bf16.mxu0 0
        %2108 = vmatpush1.bf16.msra.mxu0 0
        %2109 = vmatprep.subr.bf16.mxu0 0
        %2110 = vmatpush1.bf16.msra.mxu0 0
        %2111 = vmatprep.subr.bf16.mxu0 0
        %2112 = vmatpush1.bf16.msra.mxu0 0
        %2113 = vmatprep.subr.bf16.mxu0 0
        %2114 = vmatpush1.bf16.msra.mxu0 0
        %2115 = vmatprep.subr.bf16.mxu0 0
        %2116 = vmatpush1.bf16.msra.mxu0 0
        %2117 = vmatprep.subr.bf16.mxu0 0
        %2118 = vmatpush1.bf16.msra.mxu0 0
        %2119 = vmatprep.subr.bf16.mxu0 0
        %2120 = vmatpush1.bf16.msra.mxu0 0
        %2121 = vmatprep.subr.bf16.mxu0 0
        %2122 = vmatpush1.bf16.msra.mxu0 0
        %2123 = vmatprep.subr.bf16.mxu0 0
        %2124 = vmatpush1.bf16.msra.mxu0 0
        %2125 = vmatprep.subr.bf16.mxu0 0
        %2126 = vmatpush1.bf16.msra.mxu0 0
        %2127 = vmatprep.subr.bf16.mxu0 0
        %2128 = vmatpush1.bf16.msra.mxu0 0
        %2129 = vmatprep.subr.bf16.mxu0 0
        %2130 = vmatpush1.bf16.msra.mxu0 0
        %2131 = vmatprep.mubr.bf16.mxu0 0
        %2132 = vmatmul.mubr.bf16.gmra.mrb[0].mxu0 %v2049
        %v2133 = vpop.f32.mrb[0].mxu0
        %v2134 = vadd.f32 0.0, %v2133
        %v2135 = vpop.f32.mrb[0].mxu0
        %v2136 = vpop.f32.mrb[0].mxu0
        %v2137 = vadd.f32 0.0, %v2136
        %v2138 = vpop.f32.mrb[0].mxu0
        %2139 = vmatprep.mubr.bf16.mxu0 0
        %2140 = vmatmul.mubr.bf16.gmra.mrb[0].mxu0 %v2052
        %v2141 = vpop.f32.mrb[0].mxu0
        %v2142 = vadd.f32 0.0, %v2141
        %v2143 = vpop.f32.mrb[0].mxu0
        %v2144 = vpop.f32.mrb[0].mxu0
        %v2145 = vadd.f32 0.0, %v2144
        %v2146 = vpop.f32.mrb[0].mxu0
        %2147 = vmatprep.mubr.bf16.mxu0 0
        %2148 = vmatmul.mubr.bf16.gmra.mrb[0].mxu0 %v2055
        %v2149 = vpop.f32.mrb[0].mxu0
        %v2150 = vadd.f32 0.0, %v2149
        %v2151 = vpop.f32.mrb[0].mxu0
        %v2152 = vpop.f32.mrb[0].mxu0
        %v2153 = vadd.f32 0.0, %v2152
        %v2154 = vpop.f32.mrb[0].mxu0
        %2155 = vmatprep.mubr.bf16.mxu0 0
        %2156 = vmatmul.mubr.bf16.gmra.mrb[0].mxu0 %v2058
        %v2157 = vpop.f32.mrb[0].mxu0
        %v2158 = vadd.f32 0.0, %v2157
        %v2159 = vpop.f32.mrb[0].mxu0
        %v2160 = vpop.f32.mrb[0].mxu0
        %v2161 = vadd.f32 0.0, %v2160
        %v2162 = vpop.f32.mrb[0].mxu0
        %2163 = vmatprep.mubr.bf16.mxu0 0
        %2164 = vmatmul.mubr.bf16.gmra.mrb[0].mxu0 %v2061
        %v2165 = vpop.f32.mrb[0].mxu0
        %v2166 = vadd.f32 0.0, %v2165
        %v2167 = vpop.f32.mrb[0].mxu0
        %v2168 = vpop.f32.mrb[0].mxu0
        %v2169 = vadd.f32 0.0, %v2168
        %v2170 = vpop.f32.mrb[0].mxu0
        %2171 = vmatprep.mubr.bf16.mxu0 0
        %2172 = vmatmul.mubr.bf16.gmra.mrb[0].mxu0 %v2064
        %v2173 = vpop.f32.mrb[0].mxu0
        %v2174 = vadd.f32 0.0, %v2173
        %v2175 = vpop.f32.mrb[0].mxu0
        %v2176 = vpop.f32.mrb[0].mxu0
        %v2177 = vadd.f32 0.0, %v2176
        %v2178 = vpop.f32.mrb[0].mxu0
        %2179 = vmatprep.mubr.bf16.mxu0 0
        %2180 = vmatmul.mubr.bf16.gmra.mrb[0].mxu0 %v2067
        %v2181 = vpop.f32.mrb[0].mxu0
        %v2182 = vadd.f32 0.0, %v2181
        %v2183 = vpop.f32.mrb[0].mxu0
        %v2184 = vpop.f32.mrb[0].mxu0
        %v2185 = vadd.f32 0.0, %v2184
        %v2186 = vpop.f32.mrb[0].mxu0
        %2187 = vmatprep.mubr.bf16.mxu0 0
        %2188 = vmatmul.mubr.bf16.gmra.mrb[0].mxu0 %v2070
        %v2189 = vpop.f32.mrb[0].mxu0
        %v2190 = vadd.f32 0.0, %v2189
        %v2191 = vpop.f32.mrb[0].mxu0
        %v2192 = vpop.f32.mrb[0].mxu0
        %v2193 = vadd.f32 0.0, %v2192
        %v2194 = vpop.f32.mrb[0].mxu0
        %2195 = vmatprep.mubr.bf16.mxu0 0
        %2196 = vmatmul.mubr.bf16.gmra.mrb[0].mxu0 %v2073
        %v2197 = vpop.f32.mrb[0].mxu0
        %v2198 = vadd.f32 0.0, %v2197
        %v2199 = vpop.f32.mrb[0].mxu0
        %v2200 = vpop.f32.mrb[0].mxu0
        %v2201 = vadd.f32 0.0, %v2200
        %v2202 = vpop.f32.mrb[0].mxu0
        %2203 = vmatprep.mubr.bf16.mxu0 0
        %2204 = vmatmul.mubr.bf16.gmra.mrb[0].mxu0 %v2076
        %v2205 = vpop.f32.mrb[0].mxu0
        %v2206 = vadd.f32 0.0, %v2205
        %v2207 = vpop.f32.mrb[0].mxu0
        %v2208 = vpop.f32.mrb[0].mxu0
        %v2209 = vadd.f32 0.0, %v2208
        %v2210 = vpop.f32.mrb[0].mxu0
        %2211 = vmatprep.mubr.bf16.mxu0 0
        %2212 = vmatmul.mubr.bf16.gmra.mrb[0].mxu0 %v2079
        %v2213 = vpop.f32.mrb[0].mxu0
        %v2214 = vadd.f32 0.0, %v2213
        %v2215 = vpop.f32.mrb[0].mxu0
        %v2216 = vpop.f32.mrb[0].mxu0
        %v2217 = vadd.f32 0.0, %v2216
        %v2218 = vpop.f32.mrb[0].mxu0
        %2219 = vmatprep.mubr.bf16.mxu0 0
        %2220 = vmatmul.mubr.bf16.gmra.mrb[0].mxu0 %v2082
        %v2221 = vpop.f32.mrb[0].mxu0
        %v2222 = vadd.f32 0.0, %v2221
        %v2223 = vpop.f32.mrb[0].mxu0
        %v2224 = vpop.f32.mrb[0].mxu0
        %v2225 = vadd.f32 0.0, %v2224
        %v2226 = vpop.f32.mrb[0].mxu0
        %2227 = vmatprep.mubr.bf16.mxu0 0
        %2228 = vmatmul.mubr.bf16.gmra.mrb[0].mxu0 %v2085
        %v2229 = vpop.f32.mrb[0].mxu0
        %v2230 = vadd.f32 0.0, %v2229
        %v2231 = vpop.f32.mrb[0].mxu0
        %v2232 = vpop.f32.mrb[0].mxu0
        %v2233 = vadd.f32 0.0, %v2232
        %v2234 = vpop.f32.mrb[0].mxu0
        %2235 = vmatprep.mubr.bf16.mxu0 0
        %2236 = vmatmul.mubr.bf16.gmra.mrb[0].mxu0 %v2088
        %v2237 = vpop.f32.mrb[0].mxu0
        %v2238 = vadd.f32 0.0, %v2237
        %v2239 = vpop.f32.mrb[0].mxu0
        %v2240 = vpop.f32.mrb[0].mxu0
        %v2241 = vadd.f32 0.0, %v2240
        %v2242 = vpop.f32.mrb[0].mxu0
        %2243 = vmatprep.mubr.bf16.mxu0 0
        %2244 = vmatmul.mubr.bf16.gmra.mrb[0].mxu0 %v2091
        %v2245 = vpop.f32.mrb[0].mxu0
        %v2246 = vadd.f32 0.0, %v2245
        %v2247 = vpop.f32.mrb[0].mxu0
        %v2248 = vpop.f32.mrb[0].mxu0
        %v2249 = vadd.f32 0.0, %v2248
        %v2250 = vpop.f32.mrb[0].mxu0
        %2251 = vmatprep.mubr.bf16.mxu0 0
        %2252 = vmatmul.mubr.bf16.gmra.mrb[0].mxu0 %v2094
        %v2253 = vpop.f32.mrb[0].mxu0
        %v2254 = vadd.f32 0.0, %v2253
        %v2255 = vpop.f32.mrb[0].mxu0
        %v2256 = vpop.f32.mrb[0].mxu0
        %v2257 = vadd.f32 0.0, %v2256
        %v2258 = vpop.f32.mrb[0].mxu0
        %2259 = vdwg.mxu0
        %v2260 = vadd.f32 %v1965, %v2134
        %v2261 = vadd.f32 %v1966, %v2137
        %v2262 = vadd.f32 %v1967, %v2142
        %v2263 = vadd.f32 %v1968, %v2145
        %v2264 = vadd.f32 %v1969, %v2150
        %v2265 = vadd.f32 %v1970, %v2153
        %v2266 = vadd.f32 %v1971, %v2158
        %v2267 = vadd.f32 %v1972, %v2161
        %v2268 = vadd.f32 %v1973, %v2166
        %v2269 = vadd.f32 %v1974, %v2169
        %v2270 = vadd.f32 %v1975, %v2174
        %v2271 = vadd.f32 %v1976, %v2177
        %v2272 = vadd.f32 %v1977, %v2182
        %v2273 = vadd.f32 %v1978, %v2185
        %v2274 = vadd.f32 %v1979, %v2190
        %v2275 = vadd.f32 %v1980, %v2193
        %v2276 = vadd.f32 %v1981, %v2198
        %v2277 = vadd.f32 %v1982, %v2201
        %v2278 = vadd.f32 %v1983, %v2206
        %v2279 = vadd.f32 %v1984, %v2209
        %v2280 = vadd.f32 %v1985, %v2214
        %v2281 = vadd.f32 %v1986, %v2217
        %v2282 = vadd.f32 %v1987, %v2222
        %v2283 = vadd.f32 %v1988, %v2225
        %v2284 = vadd.f32 %v1989, %v2230
        %v2285 = vadd.f32 %v1990, %v2233
        %v2286 = vadd.f32 %v1991, %v2238
        %v2287 = vadd.f32 %v1992, %v2241
        %v2288 = vadd.f32 %v1993, %v2246
        %v2289 = vadd.f32 %v1994, %v2249
        %v2290 = vadd.f32 %v1995, %v2254
        %v2291 = vadd.f32 %v1996, %v2257
        %v2292 = vld [vmem:[%s1997 + $0x1] sm:$0xff]
        %v2293 = vld [vmem:[%s1997 + $0x9] sm:$0xff]
        %v2294 = vld [vmem:[%s1997 + $0x19] sm:$0xff]
        %v2295 = vld [vmem:[%s1997 + $0x21] sm:$0xff]
        %v2296 = vld [vmem:[%s1997 + $0x31] sm:$0xff]
        %v2297 = vld [vmem:[%s1997 + $0x39] sm:$0xff]
        %v2298 = vld [vmem:[%s1997 + $0x49] sm:$0xff]
        %v2299 = vld [vmem:[%s1997 + $0x51] sm:$0xff]
        %v2300 = vld [vmem:[%s1997 + $0x61] sm:$0xff]
        %v2301 = vld [vmem:[%s1997 + $0x69] sm:$0xff]
        %v2302 = vld [vmem:[%s1997 + $0x79] sm:$0xff]
        %v2303 = vld [vmem:[%s1997 + $0x81] sm:$0xff]
        %v2304 = vld [vmem:[%s1997 + $0x91] sm:$0xff]
        %v2305 = vld [vmem:[%s1997 + $0x99] sm:$0xff]
        %v2306 = vld [vmem:[%s1997 + $0xa9] sm:$0xff]
        %v2307 = vld [vmem:[%s1997 + $0xb1] sm:$0xff]
        %v2308 = vld [vmem:[%s1997 + $0xc1] sm:$0xff]
        %v2309 = vld [vmem:[%s1997 + $0xc9] sm:$0xff]
        %v2310 = vld [vmem:[%s1997 + $0xd9] sm:$0xff]
        %v2311 = vld [vmem:[%s1997 + $0xe1] sm:$0xff]
        %v2312 = vld [vmem:[%s1997 + $0xf1] sm:$0xff]
        %v2313 = vld [vmem:[%s1997 + $0xf9] sm:$0xff]
        %v2314 = vld [vmem:[%s1997 + $0x109] sm:$0xff]
        %v2315 = vld [vmem:[%s1997 + $0x111] sm:$0xff]
        %v2316 = vld [vmem:[%s1997 + $0x121] sm:$0xff]
        %v2317 = vld [vmem:[%s1997 + $0x129] sm:$0xff]
        %v2318 = vld [vmem:[%s1997 + $0x139] sm:$0xff]
        %v2319 = vld [vmem:[%s1997 + $0x141] sm:$0xff]
        %v2320 = vld [vmem:[%s1997 + $0x151] sm:$0xff]
        %v2321 = vld [vmem:[%s1997 + $0x159] sm:$0xff]
        %v2322 = vld [vmem:[%s1997 + $0x169] sm:$0xff]
        %v2323 = vld [vmem:[%s1997 + $0x171] sm:$0xff]
        %v2324 = vpack.c.bf16 %v2293, %v2292
        %v2325 = vpack.c.bf16 %v2295, %v2294
        %v2326 = vpack.c.bf16 %v2297, %v2296
        %v2327 = vpack.c.bf16 %v2299, %v2298
        %v2328 = vpack.c.bf16 %v2301, %v2300
        %v2329 = vpack.c.bf16 %v2303, %v2302
        %v2330 = vpack.c.bf16 %v2305, %v2304
        %v2331 = vpack.c.bf16 %v2307, %v2306
        %v2332 = vpack.c.bf16 %v2309, %v2308
        %v2333 = vpack.c.bf16 %v2311, %v2310
        %v2334 = vpack.c.bf16 %v2313, %v2312
        %v2335 = vpack.c.bf16 %v2315, %v2314
        %v2336 = vpack.c.bf16 %v2317, %v2316
        %v2337 = vpack.c.bf16 %v2319, %v2318
        %v2338 = vpack.c.bf16 %v2321, %v2320
        %v2339 = vpack.c.bf16 %v2323, %v2322
        %s2340 = scalar_lea.vmem %s1, 28
        %v2341 = vld [vmem:[%s2340] sm:$0xf]
        %v2343 = vsel %vm218, %v2324, 0
        %v2346 = vsel %vm218, %v2325, 0
        %v2349 = vsel %vm218, %v2326, 0
        %v2352 = vsel %vm218, %v2327, 0
        %v2355 = vsel %vm218, %v2328, 0
        %v2358 = vsel %vm218, %v2329, 0
        %v2361 = vsel %vm218, %v2330, 0
        %v2364 = vsel %vm218, %v2331, 0
        %v2367 = vsel %vm218, %v2332, 0
        %v2370 = vsel %vm218, %v2333, 0
        %v2373 = vsel %vm218, %v2334, 0
        %v2376 = vsel %vm218, %v2335, 0
        %v2379 = vsel %vm218, %v2336, 0
        %v2382 = vsel %vm218, %v2337, 0
        %v2385 = vsel %vm218, %v2338, 0
        %v2388 = vsel %vm218, %v2339, 0
        %v2391 = vsel %vm444, %v2341, 0
        %2393 = vmatprep.subr.bf16.mxu0 0
        %2394 = vmatpush1.bf16.msra.mxu0 %v2391
        %2395 = vmatprep.subr.bf16.mxu0 0
        %2396 = vmatpush1.bf16.msra.mxu0 0
        %2397 = vmatprep.subr.bf16.mxu0 0
        %2398 = vmatpush1.bf16.msra.mxu0 0
        %2399 = vmatprep.subr.bf16.mxu0 0
        %2400 = vmatpush1.bf16.msra.mxu0 0
        %2401 = vmatprep.subr.bf16.mxu0 0
        %2402 = vmatpush1.bf16.msra.mxu0 0
        %2403 = vmatprep.subr.bf16.mxu0 0
        %2404 = vmatpush1.bf16.msra.mxu0 0
        %2405 = vmatprep.subr.bf16.mxu0 0
        %2406 = vmatpush1.bf16.msra.mxu0 0
        %2407 = vmatprep.subr.bf16.mxu0 0
        %2408 = vmatpush1.bf16.msra.mxu0 0
        %2409 = vmatprep.subr.bf16.mxu0 0
        %2410 = vmatpush1.bf16.msra.mxu0 0
        %2411 = vmatprep.subr.bf16.mxu0 0
        %2412 = vmatpush1.bf16.msra.mxu0 0
        %2413 = vmatprep.subr.bf16.mxu0 0
        %2414 = vmatpush1.bf16.msra.mxu0 0
        %2415 = vmatprep.subr.bf16.mxu0 0
        %2416 = vmatpush1.bf16.msra.mxu0 0
        %2417 = vmatprep.subr.bf16.mxu0 0
        %2418 = vmatpush1.bf16.msra.mxu0 0
        %2419 = vmatprep.subr.bf16.mxu0 0
        %2420 = vmatpush1.bf16.msra.mxu0 0
        %2421 = vmatprep.subr.bf16.mxu0 0
        %2422 = vmatpush1.bf16.msra.mxu0 0
        %2423 = vmatprep.subr.bf16.mxu0 0
        %2424 = vmatpush1.bf16.msra.mxu0 0
        %2425 = vmatprep.mubr.bf16.mxu0 0
        %2426 = vmatmul.mubr.bf16.gmra.mrb[0].mxu0 %v2343
        %v2427 = vpop.f32.mrb[0].mxu0
        %v2428 = vadd.f32 0.0, %v2427
        %v2429 = vpop.f32.mrb[0].mxu0
        %v2430 = vpop.f32.mrb[0].mxu0
        %v2431 = vadd.f32 0.0, %v2430
        %v2432 = vpop.f32.mrb[0].mxu0
        %2433 = vmatprep.mubr.bf16.mxu0 0
        %2434 = vmatmul.mubr.bf16.gmra.mrb[0].mxu0 %v2346
        %v2435 = vpop.f32.mrb[0].mxu0
        %v2436 = vadd.f32 0.0, %v2435
        %v2437 = vpop.f32.mrb[0].mxu0
        %v2438 = vpop.f32.mrb[0].mxu0
        %v2439 = vadd.f32 0.0, %v2438
        %v2440 = vpop.f32.mrb[0].mxu0
        %2441 = vmatprep.mubr.bf16.mxu0 0
        %2442 = vmatmul.mubr.bf16.gmra.mrb[0].mxu0 %v2349
        %v2443 = vpop.f32.mrb[0].mxu0
        %v2444 = vadd.f32 0.0, %v2443
        %v2445 = vpop.f32.mrb[0].mxu0
        %v2446 = vpop.f32.mrb[0].mxu0
        %v2447 = vadd.f32 0.0, %v2446
        %v2448 = vpop.f32.mrb[0].mxu0
        %2449 = vmatprep.mubr.bf16.mxu0 0
        %2450 = vmatmul.mubr.bf16.gmra.mrb[0].mxu0 %v2352
        %v2451 = vpop.f32.mrb[0].mxu0
        %v2452 = vadd.f32 0.0, %v2451
        %v2453 = vpop.f32.mrb[0].mxu0
        %v2454 = vpop.f32.mrb[0].mxu0
        %v2455 = vadd.f32 0.0, %v2454
        %v2456 = vpop.f32.mrb[0].mxu0
        %2457 = vmatprep.mubr.bf16.mxu0 0
        %2458 = vmatmul.mubr.bf16.gmra.mrb[0].mxu0 %v2355
        %v2459 = vpop.f32.mrb[0].mxu0
        %v2460 = vadd.f32 0.0, %v2459
        %v2461 = vpop.f32.mrb[0].mxu0
        %v2462 = vpop.f32.mrb[0].mxu0
        %v2463 = vadd.f32 0.0, %v2462
        %v2464 = vpop.f32.mrb[0].mxu0
        %2465 = vmatprep.mubr.bf16.mxu0 0
        %2466 = vmatmul.mubr.bf16.gmra.mrb[0].mxu0 %v2358
        %v2467 = vpop.f32.mrb[0].mxu0
        %v2468 = vadd.f32 0.0, %v2467
        %v2469 = vpop.f32.mrb[0].mxu0
        %v2470 = vpop.f32.mrb[0].mxu0
        %v2471 = vadd.f32 0.0, %v2470
        %v2472 = vpop.f32.mrb[0].mxu0
        %2473 = vmatprep.mubr.bf16.mxu0 0
        %2474 = vmatmul.mubr.bf16.gmra.mrb[0].mxu0 %v2361
        %v2475 = vpop.f32.mrb[0].mxu0
        %v2476 = vadd.f32 0.0, %v2475
        %v2477 = vpop.f32.mrb[0].mxu0
        %v2478 = vpop.f32.mrb[0].mxu0
        %v2479 = vadd.f32 0.0, %v2478
        %v2480 = vpop.f32.mrb[0].mxu0
        %2481 = vmatprep.mubr.bf16.mxu0 0
        %2482 = vmatmul.mubr.bf16.gmra.mrb[0].mxu0 %v2364
        %v2483 = vpop.f32.mrb[0].mxu0
        %v2484 = vadd.f32 0.0, %v2483
        %v2485 = vpop.f32.mrb[0].mxu0
        %v2486 = vpop.f32.mrb[0].mxu0
        %v2487 = vadd.f32 0.0, %v2486
        %v2488 = vpop.f32.mrb[0].mxu0
        %2489 = vmatprep.mubr.bf16.mxu0 0
        %2490 = vmatmul.mubr.bf16.gmra.mrb[0].mxu0 %v2367
        %v2491 = vpop.f32.mrb[0].mxu0
        %v2492 = vadd.f32 0.0, %v2491
        %v2493 = vpop.f32.mrb[0].mxu0
        %v2494 = vpop.f32.mrb[0].mxu0
        %v2495 = vadd.f32 0.0, %v2494
        %v2496 = vpop.f32.mrb[0].mxu0
        %2497 = vmatprep.mubr.bf16.mxu0 0
        %2498 = vmatmul.mubr.bf16.gmra.mrb[0].mxu0 %v2370
        %v2499 = vpop.f32.mrb[0].mxu0
        %v2500 = vadd.f32 0.0, %v2499
        %v2501 = vpop.f32.mrb[0].mxu0
        %v2502 = vpop.f32.mrb[0].mxu0
        %v2503 = vadd.f32 0.0, %v2502
        %v2504 = vpop.f32.mrb[0].mxu0
        %2505 = vmatprep.mubr.bf16.mxu0 0
        %2506 = vmatmul.mubr.bf16.gmra.mrb[0].mxu0 %v2373
        %v2507 = vpop.f32.mrb[0].mxu0
        %v2508 = vadd.f32 0.0, %v2507
        %v2509 = vpop.f32.mrb[0].mxu0
        %v2510 = vpop.f32.mrb[0].mxu0
        %v2511 = vadd.f32 0.0, %v2510
        %v2512 = vpop.f32.mrb[0].mxu0
        %2513 = vmatprep.mubr.bf16.mxu0 0
        %2514 = vmatmul.mubr.bf16.gmra.mrb[0].mxu0 %v2376
        %v2515 = vpop.f32.mrb[0].mxu0
        %v2516 = vadd.f32 0.0, %v2515
        %v2517 = vpop.f32.mrb[0].mxu0
        %v2518 = vpop.f32.mrb[0].mxu0
        %v2519 = vadd.f32 0.0, %v2518
        %v2520 = vpop.f32.mrb[0].mxu0
        %2521 = vmatprep.mubr.bf16.mxu0 0
        %2522 = vmatmul.mubr.bf16.gmra.mrb[0].mxu0 %v2379
        %v2523 = vpop.f32.mrb[0].mxu0
        %v2524 = vadd.f32 0.0, %v2523
        %v2525 = vpop.f32.mrb[0].mxu0
        %v2526 = vpop.f32.mrb[0].mxu0
        %v2527 = vadd.f32 0.0, %v2526
        %v2528 = vpop.f32.mrb[0].mxu0
        %2529 = vmatprep.mubr.bf16.mxu0 0
        %2530 = vmatmul.mubr.bf16.gmra.mrb[0].mxu0 %v2382
        %v2531 = vpop.f32.mrb[0].mxu0
        %v2532 = vadd.f32 0.0, %v2531
        %v2533 = vpop.f32.mrb[0].mxu0
        %v2534 = vpop.f32.mrb[0].mxu0
        %v2535 = vadd.f32 0.0, %v2534
        %v2536 = vpop.f32.mrb[0].mxu0
        %2537 = vmatprep.mubr.bf16.mxu0 0
        %2538 = vmatmul.mubr.bf16.gmra.mrb[0].mxu0 %v2385
        %v2539 = vpop.f32.mrb[0].mxu0
        %v2540 = vadd.f32 0.0, %v2539
        %v2541 = vpop.f32.mrb[0].mxu0
        %v2542 = vpop.f32.mrb[0].mxu0
        %v2543 = vadd.f32 0.0, %v2542
        %v2544 = vpop.f32.mrb[0].mxu0
        %2545 = vmatprep.mubr.bf16.mxu0 0
        %2546 = vmatmul.mubr.bf16.gmra.mrb[0].mxu0 %v2388
        %v2547 = vpop.f32.mrb[0].mxu0
        %v2548 = vadd.f32 0.0, %v2547
        %v2549 = vpop.f32.mrb[0].mxu0
        %v2550 = vpop.f32.mrb[0].mxu0
        %v2551 = vadd.f32 0.0, %v2550
        %v2552 = vpop.f32.mrb[0].mxu0
        %2553 = vdwg.mxu0
        %v2554 = vadd.f32 %v2260, %v2428
        %v2555 = vadd.f32 %v2261, %v2431
        %v2556 = vadd.f32 %v2262, %v2436
        %v2557 = vadd.f32 %v2263, %v2439
        %v2558 = vadd.f32 %v2264, %v2444
        %v2559 = vadd.f32 %v2265, %v2447
        %v2560 = vadd.f32 %v2266, %v2452
        %v2561 = vadd.f32 %v2267, %v2455
        %v2562 = vadd.f32 %v2268, %v2460
        %v2563 = vadd.f32 %v2269, %v2463
        %v2564 = vadd.f32 %v2270, %v2468
        %v2565 = vadd.f32 %v2271, %v2471
        %v2566 = vadd.f32 %v2272, %v2476
        %v2567 = vadd.f32 %v2273, %v2479
        %v2568 = vadd.f32 %v2274, %v2484
        %v2569 = vadd.f32 %v2275, %v2487
        %v2570 = vadd.f32 %v2276, %v2492
        %v2571 = vadd.f32 %v2277, %v2495
        %v2572 = vadd.f32 %v2278, %v2500
        %v2573 = vadd.f32 %v2279, %v2503
        %v2574 = vadd.f32 %v2280, %v2508
        %v2575 = vadd.f32 %v2281, %v2511
        %v2576 = vadd.f32 %v2282, %v2516
        %v2577 = vadd.f32 %v2283, %v2519
        %v2578 = vadd.f32 %v2284, %v2524
        %v2579 = vadd.f32 %v2285, %v2527
        %v2580 = vadd.f32 %v2286, %v2532
        %v2581 = vadd.f32 %v2287, %v2535
        %v2582 = vadd.f32 %v2288, %v2540
        %v2583 = vadd.f32 %v2289, %v2543
        %v2584 = vadd.f32 %v2290, %v2548
        %v2585 = vadd.f32 %v2291, %v2551
        %v2586 = vld [vmem:[%s1997 + $0x2] sm:$0xff]
        %v2587 = vld [vmem:[%s1997 + $0xa] sm:$0xff]
        %v2588 = vld [vmem:[%s1997 + $0x1a] sm:$0xff]
        %v2589 = vld [vmem:[%s1997 + $0x22] sm:$0xff]
        %v2590 = vld [vmem:[%s1997 + $0x32] sm:$0xff]
        %v2591 = vld [vmem:[%s1997 + $0x3a] sm:$0xff]
        %v2592 = vld [vmem:[%s1997 + $0x4a] sm:$0xff]
        %v2593 = vld [vmem:[%s1997 + $0x52] sm:$0xff]
        %v2594 = vld [vmem:[%s1997 + $0x62] sm:$0xff]
        %v2595 = vld [vmem:[%s1997 + $0x6a] sm:$0xff]
        %v2596 = vld [vmem:[%s1997 + $0x7a] sm:$0xff]
        %v2597 = vld [vmem:[%s1997 + $0x82] sm:$0xff]
        %v2598 = vld [vmem:[%s1997 + $0x92] sm:$0xff]
        %v2599 = vld [vmem:[%s1997 + $0x9a] sm:$0xff]
        %v2600 = vld [vmem:[%s1997 + $0xaa] sm:$0xff]
        %v2601 = vld [vmem:[%s1997 + $0xb2] sm:$0xff]
        %v2602 = vld [vmem:[%s1997 + $0xc2] sm:$0xff]
        %v2603 = vld [vmem:[%s1997 + $0xca] sm:$0xff]
        %v2604 = vld [vmem:[%s1997 + $0xda] sm:$0xff]
        %v2605 = vld [vmem:[%s1997 + $0xe2] sm:$0xff]
        %v2606 = vld [vmem:[%s1997 + $0xf2] sm:$0xff]
        %v2607 = vld [vmem:[%s1997 + $0xfa] sm:$0xff]
        %v2608 = vld [vmem:[%s1997 + $0x10a] sm:$0xff]
        %v2609 = vld [vmem:[%s1997 + $0x112] sm:$0xff]
        %v2610 = vld [vmem:[%s1997 + $0x122] sm:$0xff]
        %v2611 = vld [vmem:[%s1997 + $0x12a] sm:$0xff]
        %v2612 = vld [vmem:[%s1997 + $0x13a] sm:$0xff]
        %v2613 = vld [vmem:[%s1997 + $0x142] sm:$0xff]
        %v2614 = vld [vmem:[%s1997 + $0x152] sm:$0xff]
        %v2615 = vld [vmem:[%s1997 + $0x15a] sm:$0xff]
        %v2616 = vld [vmem:[%s1997 + $0x16a] sm:$0xff]
        %v2617 = vld [vmem:[%s1997 + $0x172] sm:$0xff]
        %v2618 = vpack.c.bf16 %v2587, %v2586
        %v2619 = vpack.c.bf16 %v2589, %v2588
        %v2620 = vpack.c.bf16 %v2591, %v2590
        %v2621 = vpack.c.bf16 %v2593, %v2592
        %v2622 = vpack.c.bf16 %v2595, %v2594
        %v2623 = vpack.c.bf16 %v2597, %v2596
        %v2624 = vpack.c.bf16 %v2599, %v2598
        %v2625 = vpack.c.bf16 %v2601, %v2600
        %v2626 = vpack.c.bf16 %v2603, %v2602
        %v2627 = vpack.c.bf16 %v2605, %v2604
        %v2628 = vpack.c.bf16 %v2607, %v2606
        %v2629 = vpack.c.bf16 %v2609, %v2608
        %v2630 = vpack.c.bf16 %v2611, %v2610
        %v2631 = vpack.c.bf16 %v2613, %v2612
        %v2632 = vpack.c.bf16 %v2615, %v2614
        %v2633 = vpack.c.bf16 %v2617, %v2616
        %s2634 = scalar_lea.vmem %s1, 32
        %v2635 = vld [vmem:[%s2634] sm:$0xf]
        %v2637 = vsel %vm218, %v2618, 0
        %v2640 = vsel %vm218, %v2619, 0
        %v2643 = vsel %vm218, %v2620, 0
        %v2646 = vsel %vm218, %v2621, 0
        %v2649 = vsel %vm218, %v2622, 0
        %v2652 = vsel %vm218, %v2623, 0
        %v2655 = vsel %vm218, %v2624, 0
        %v2658 = vsel %vm218, %v2625, 0
        %v2661 = vsel %vm218, %v2626, 0
        %v2664 = vsel %vm218, %v2627, 0
        %v2667 = vsel %vm218, %v2628, 0
        %v2670 = vsel %vm218, %v2629, 0
        %v2673 = vsel %vm218, %v2630, 0
        %v2676 = vsel %vm218, %v2631, 0
        %v2679 = vsel %vm218, %v2632, 0
        %v2682 = vsel %vm218, %v2633, 0
        %v2685 = vsel %vm444, %v2635, 0
        %2687 = vmatprep.subr.bf16.mxu0 0
        %2688 = vmatpush1.bf16.msra.mxu0 %v2685
        %2689 = vmatprep.subr.bf16.mxu0 0
        %2690 = vmatpush1.bf16.msra.mxu0 0
        %2691 = vmatprep.subr.bf16.mxu0 0
        %2692 = vmatpush1.bf16.msra.mxu0 0
        %2693 = vmatprep.subr.bf16.mxu0 0
        %2694 = vmatpush1.bf16.msra.mxu0 0
        %2695 = vmatprep.subr.bf16.mxu0 0
        %2696 = vmatpush1.bf16.msra.mxu0 0
        %2697 = vmatprep.subr.bf16.mxu0 0
        %2698 = vmatpush1.bf16.msra.mxu0 0
        %2699 = vmatprep.subr.bf16.mxu0 0
        %2700 = vmatpush1.bf16.msra.mxu0 0
        %2701 = vmatprep.subr.bf16.mxu0 0
        %2702 = vmatpush1.bf16.msra.mxu0 0
        %2703 = vmatprep.subr.bf16.mxu0 0
        %2704 = vmatpush1.bf16.msra.mxu0 0
        %2705 = vmatprep.subr.bf16.mxu0 0
        %2706 = vmatpush1.bf16.msra.mxu0 0
        %2707 = vmatprep.subr.bf16.mxu0 0
        %2708 = vmatpush1.bf16.msra.mxu0 0
        %2709 = vmatprep.subr.bf16.mxu0 0
        %2710 = vmatpush1.bf16.msra.mxu0 0
        %2711 = vmatprep.subr.bf16.mxu0 0
        %2712 = vmatpush1.bf16.msra.mxu0 0
        %2713 = vmatprep.subr.bf16.mxu0 0
        %2714 = vmatpush1.bf16.msra.mxu0 0
        %2715 = vmatprep.subr.bf16.mxu0 0
        %2716 = vmatpush1.bf16.msra.mxu0 0
        %2717 = vmatprep.subr.bf16.mxu0 0
        %2718 = vmatpush1.bf16.msra.mxu0 0
        %2719 = vmatprep.mubr.bf16.mxu0 0
        %2720 = vmatmul.mubr.bf16.gmra.mrb[0].mxu0 %v2637
        %v2721 = vpop.f32.mrb[0].mxu0
        %v2722 = vadd.f32 0.0, %v2721
        %v2723 = vpop.f32.mrb[0].mxu0
        %v2724 = vpop.f32.mrb[0].mxu0
        %v2725 = vadd.f32 0.0, %v2724
        %v2726 = vpop.f32.mrb[0].mxu0
        %2727 = vmatprep.mubr.bf16.mxu0 0
        %2728 = vmatmul.mubr.bf16.gmra.mrb[0].mxu0 %v2640
        %v2729 = vpop.f32.mrb[0].mxu0
        %v2730 = vadd.f32 0.0, %v2729
        %v2731 = vpop.f32.mrb[0].mxu0
        %v2732 = vpop.f32.mrb[0].mxu0
        %v2733 = vadd.f32 0.0, %v2732
        %v2734 = vpop.f32.mrb[0].mxu0
        %2735 = vmatprep.mubr.bf16.mxu0 0
        %2736 = vmatmul.mubr.bf16.gmra.mrb[0].mxu0 %v2643
        %v2737 = vpop.f32.mrb[0].mxu0
        %v2738 = vadd.f32 0.0, %v2737
        %v2739 = vpop.f32.mrb[0].mxu0
        %v2740 = vpop.f32.mrb[0].mxu0
        %v2741 = vadd.f32 0.0, %v2740
        %v2742 = vpop.f32.mrb[0].mxu0
        %2743 = vmatprep.mubr.bf16.mxu0 0
        %2744 = vmatmul.mubr.bf16.gmra.mrb[0].mxu0 %v2646
        %v2745 = vpop.f32.mrb[0].mxu0
        %v2746 = vadd.f32 0.0, %v2745
        %v2747 = vpop.f32.mrb[0].mxu0
        %v2748 = vpop.f32.mrb[0].mxu0
        %v2749 = vadd.f32 0.0, %v2748
        %v2750 = vpop.f32.mrb[0].mxu0
        %2751 = vmatprep.mubr.bf16.mxu0 0
        %2752 = vmatmul.mubr.bf16.gmra.mrb[0].mxu0 %v2649
        %v2753 = vpop.f32.mrb[0].mxu0
        %v2754 = vadd.f32 0.0, %v2753
        %v2755 = vpop.f32.mrb[0].mxu0
        %v2756 = vpop.f32.mrb[0].mxu0
        %v2757 = vadd.f32 0.0, %v2756
        %v2758 = vpop.f32.mrb[0].mxu0
        %2759 = vmatprep.mubr.bf16.mxu0 0
        %2760 = vmatmul.mubr.bf16.gmra.mrb[0].mxu0 %v2652
        %v2761 = vpop.f32.mrb[0].mxu0
        %v2762 = vadd.f32 0.0, %v2761
        %v2763 = vpop.f32.mrb[0].mxu0
        %v2764 = vpop.f32.mrb[0].mxu0
        %v2765 = vadd.f32 0.0, %v2764
        %v2766 = vpop.f32.mrb[0].mxu0
        %2767 = vmatprep.mubr.bf16.mxu0 0
        %2768 = vmatmul.mubr.bf16.gmra.mrb[0].mxu0 %v2655
        %v2769 = vpop.f32.mrb[0].mxu0
        %v2770 = vadd.f32 0.0, %v2769
        %v2771 = vpop.f32.mrb[0].mxu0
        %v2772 = vpop.f32.mrb[0].mxu0
        %v2773 = vadd.f32 0.0, %v2772
        %v2774 = vpop.f32.mrb[0].mxu0
        %2775 = vmatprep.mubr.bf16.mxu0 0
        %2776 = vmatmul.mubr.bf16.gmra.mrb[0].mxu0 %v2658
        %v2777 = vpop.f32.mrb[0].mxu0
        %v2778 = vadd.f32 0.0, %v2777
        %v2779 = vpop.f32.mrb[0].mxu0
        %v2780 = vpop.f32.mrb[0].mxu0
        %v2781 = vadd.f32 0.0, %v2780
        %v2782 = vpop.f32.mrb[0].mxu0
        %2783 = vmatprep.mubr.bf16.mxu0 0
        %2784 = vmatmul.mubr.bf16.gmra.mrb[0].mxu0 %v2661
        %v2785 = vpop.f32.mrb[0].mxu0
        %v2786 = vadd.f32 0.0, %v2785
        %v2787 = vpop.f32.mrb[0].mxu0
        %v2788 = vpop.f32.mrb[0].mxu0
        %v2789 = vadd.f32 0.0, %v2788
        %v2790 = vpop.f32.mrb[0].mxu0
        %2791 = vmatprep.mubr.bf16.mxu0 0
        %2792 = vmatmul.mubr.bf16.gmra.mrb[0].mxu0 %v2664
        %v2793 = vpop.f32.mrb[0].mxu0
        %v2794 = vadd.f32 0.0, %v2793
        %v2795 = vpop.f32.mrb[0].mxu0
        %v2796 = vpop.f32.mrb[0].mxu0
        %v2797 = vadd.f32 0.0, %v2796
        %v2798 = vpop.f32.mrb[0].mxu0
        %2799 = vmatprep.mubr.bf16.mxu0 0
        %2800 = vmatmul.mubr.bf16.gmra.mrb[0].mxu0 %v2667
        %v2801 = vpop.f32.mrb[0].mxu0
        %v2802 = vadd.f32 0.0, %v2801
        %v2803 = vpop.f32.mrb[0].mxu0
        %v2804 = vpop.f32.mrb[0].mxu0
        %v2805 = vadd.f32 0.0, %v2804
        %v2806 = vpop.f32.mrb[0].mxu0
        %2807 = vmatprep.mubr.bf16.mxu0 0
        %2808 = vmatmul.mubr.bf16.gmra.mrb[0].mxu0 %v2670
        %v2809 = vpop.f32.mrb[0].mxu0
        %v2810 = vadd.f32 0.0, %v2809
        %v2811 = vpop.f32.mrb[0].mxu0
        %v2812 = vpop.f32.mrb[0].mxu0
        %v2813 = vadd.f32 0.0, %v2812
        %v2814 = vpop.f32.mrb[0].mxu0
        %2815 = vmatprep.mubr.bf16.mxu0 0
        %2816 = vmatmul.mubr.bf16.gmra.mrb[0].mxu0 %v2673
        %v2817 = vpop.f32.mrb[0].mxu0
        %v2818 = vadd.f32 0.0, %v2817
        %v2819 = vpop.f32.mrb[0].mxu0
        %v2820 = vpop.f32.mrb[0].mxu0
        %v2821 = vadd.f32 0.0, %v2820
        %v2822 = vpop.f32.mrb[0].mxu0
        %2823 = vmatprep.mubr.bf16.mxu0 0
        %2824 = vmatmul.mubr.bf16.gmra.mrb[0].mxu0 %v2676
        %v2825 = vpop.f32.mrb[0].mxu0
        %v2826 = vadd.f32 0.0, %v2825
        %v2827 = vpop.f32.mrb[0].mxu0
        %v2828 = vpop.f32.mrb[0].mxu0
        %v2829 = vadd.f32 0.0, %v2828
        %v2830 = vpop.f32.mrb[0].mxu0
        %2831 = vmatprep.mubr.bf16.mxu0 0
        %2832 = vmatmul.mubr.bf16.gmra.mrb[0].mxu0 %v2679
        %v2833 = vpop.f32.mrb[0].mxu0
        %v2834 = vadd.f32 0.0, %v2833
        %v2835 = vpop.f32.mrb[0].mxu0
        %v2836 = vpop.f32.mrb[0].mxu0
        %v2837 = vadd.f32 0.0, %v2836
        %v2838 = vpop.f32.mrb[0].mxu0
        %2839 = vmatprep.mubr.bf16.mxu0 0
        %2840 = vmatmul.mubr.bf16.gmra.mrb[0].mxu0 %v2682
        %v2841 = vpop.f32.mrb[0].mxu0
        %v2842 = vadd.f32 0.0, %v2841
        %v2843 = vpop.f32.mrb[0].mxu0
        %v2844 = vpop.f32.mrb[0].mxu0
        %v2845 = vadd.f32 0.0, %v2844
        %v2846 = vpop.f32.mrb[0].mxu0
        %2847 = vdwg.mxu0
        %v2848 = vadd.f32 %v2554, %v2722
        %v2849 = vadd.f32 %v2555, %v2725
        %v2850 = vadd.f32 %v2556, %v2730
        %v2851 = vadd.f32 %v2557, %v2733
        %v2852 = vadd.f32 %v2558, %v2738
        %v2853 = vadd.f32 %v2559, %v2741
        %v2854 = vadd.f32 %v2560, %v2746
        %v2855 = vadd.f32 %v2561, %v2749
        %v2856 = vadd.f32 %v2562, %v2754
        %v2857 = vadd.f32 %v2563, %v2757
        %v2858 = vadd.f32 %v2564, %v2762
        %v2859 = vadd.f32 %v2565, %v2765
        %v2860 = vadd.f32 %v2566, %v2770
        %v2861 = vadd.f32 %v2567, %v2773
        %v2862 = vadd.f32 %v2568, %v2778
        %v2863 = vadd.f32 %v2569, %v2781
        %v2864 = vadd.f32 %v2570, %v2786
        %v2865 = vadd.f32 %v2571, %v2789
        %v2866 = vadd.f32 %v2572, %v2794
        %v2867 = vadd.f32 %v2573, %v2797
        %v2868 = vadd.f32 %v2574, %v2802
        %v2869 = vadd.f32 %v2575, %v2805
        %v2870 = vadd.f32 %v2576, %v2810
        %v2871 = vadd.f32 %v2577, %v2813
        %v2872 = vadd.f32 %v2578, %v2818
        %v2873 = vadd.f32 %v2579, %v2821
        %v2874 = vadd.f32 %v2580, %v2826
        %v2875 = vadd.f32 %v2581, %v2829
        %v2876 = vadd.f32 %v2582, %v2834
        %v2877 = vadd.f32 %v2583, %v2837
        %v2878 = vadd.f32 %v2584, %v2842
        %v2879 = vadd.f32 %v2585, %v2845
        %2880 = vmatprep.subr.mxu0 0.0
        %2881 = vmatpush1.msra.mxu0 %v2848
        %2882 = vmatprep.subr.mxu0 0.0
        %2883 = vmatpush1.msra.mxu0 %v2849
        %2884 = vmatprep.subr.mxu0 0.0
        %2885 = vmatpush1.msra.mxu0 %v2850
        %2886 = vmatprep.subr.mxu0 0.0
        %2887 = vmatpush1.msra.mxu0 %v2851
        %2888 = vmatprep.subr.mxu0 0.0
        %2889 = vmatpush1.msra.mxu0 %v2852
        %2890 = vmatprep.subr.mxu0 0.0
        %2891 = vmatpush1.msra.mxu0 %v2853
        %2892 = vmatprep.subr.mxu0 0.0
        %2893 = vmatpush1.msra.mxu0 %v2854
        %2894 = vmatprep.subr.mxu0 0.0
        %2895 = vmatpush1.msra.mxu0 %v2855
        %2896 = vmatprep.subr.mxu0 0.0
        %2897 = vmatpush1.msra.mxu0 %v2856
        %2898 = vmatprep.subr.mxu0 0.0
        %2899 = vmatpush1.msra.mxu0 %v2857
        %2900 = vmatprep.subr.mxu0 0.0
        %2901 = vmatpush1.msra.mxu0 %v2858
        %2902 = vmatprep.subr.mxu0 0.0
        %2903 = vmatpush1.msra.mxu0 %v2859
        %2904 = vmatprep.subr.mxu0 0.0
        %2905 = vmatpush1.msra.mxu0 %v2860
        %2906 = vmatprep.subr.mxu0 0.0
        %2907 = vmatpush1.msra.mxu0 %v2861
        %2908 = vmatprep.subr.mxu0 0.0
        %2909 = vmatpush1.msra.mxu0 %v2862
        %2910 = vmatprep.subr.mxu0 0.0
        %2911 = vmatpush1.msra.mxu0 %v2863
        %2912 = vmatprep.subr.mxu0 0.0
        %2913 = vmatpush1.msra.mxu0 %v2864
        %2914 = vmatprep.subr.mxu0 0.0
        %2915 = vmatpush1.msra.mxu0 %v2865
        %2916 = vmatprep.subr.mxu0 0.0
        %2917 = vmatpush1.msra.mxu0 %v2866
        %2918 = vmatprep.subr.mxu0 0.0
        %2919 = vmatpush1.msra.mxu0 %v2867
        %2920 = vmatprep.subr.mxu0 0.0
        %2921 = vmatpush1.msra.mxu0 %v2868
        %2922 = vmatprep.subr.mxu0 0.0
        %2923 = vmatpush1.msra.mxu0 %v2869
        %2924 = vmatprep.subr.mxu0 0.0
        %2925 = vmatpush1.msra.mxu0 %v2870
        %2926 = vmatprep.subr.mxu0 0.0
        %2927 = vmatpush1.msra.mxu0 %v2871
        %2928 = vmatprep.subr.mxu0 0.0
        %2929 = vmatpush1.msra.mxu0 %v2872
        %2930 = vmatprep.subr.mxu0 0.0
        %2931 = vmatpush1.msra.mxu0 %v2873
        %2932 = vmatprep.subr.mxu0 0.0
        %2933 = vmatpush1.msra.mxu0 %v2874
        %2934 = vmatprep.subr.mxu0 0.0
        %2935 = vmatpush1.msra.mxu0 %v2875
        %2936 = vmatprep.subr.mxu0 0.0
        %2937 = vmatpush1.msra.mxu0 %v2876
        %2938 = vmatprep.subr.mxu0 0.0
        %2939 = vmatpush1.msra.mxu0 %v2877
        %2940 = vmatprep.subr.mxu0 0.0
        %2941 = vmatpush1.msra.mxu0 %v2878
        %2942 = vmatprep.subr.mxu0 0.0
        %2943 = vmatpush1.msra.mxu0 %v2879
        %2944 = vmatprep.mubr.f32.mxu0 1.0
        %2945 = vmatmul.mubr.f32.gmra.mrb[0].mxu0 1.0
        %v2946 = vpop.f32.mrb[0].mxu0
        %v2947 = vadd.f32 0.0, %v2946
        %v2948 = vpop.f32.mrb[0].mxu0
        %2949 = vdwg.mxu0
        %v2950 = vmul.f32 %v2848, %v2848
        %v2951 = vmul.f32 %v2849, %v2849
        %v2952 = vmul.f32 %v2850, %v2850
        %v2953 = vmul.f32 %v2851, %v2851
        %v2954 = vmul.f32 %v2852, %v2852
        %v2955 = vmul.f32 %v2853, %v2853
        %v2956 = vmul.f32 %v2854, %v2854
        %v2957 = vmul.f32 %v2855, %v2855
        %v2958 = vmul.f32 %v2856, %v2856
        %v2959 = vmul.f32 %v2857, %v2857
        %v2960 = vmul.f32 %v2858, %v2858
        %v2961 = vmul.f32 %v2859, %v2859
        %v2962 = vmul.f32 %v2860, %v2860
        %v2963 = vmul.f32 %v2861, %v2861
        %v2964 = vmul.f32 %v2862, %v2862
        %v2965 = vmul.f32 %v2863, %v2863
        %v2966 = vmul.f32 %v2864, %v2864
        %v2967 = vmul.f32 %v2865, %v2865
        %v2968 = vmul.f32 %v2866, %v2866
        %v2969 = vmul.f32 %v2867, %v2867
        %v2970 = vmul.f32 %v2868, %v2868
        %v2971 = vmul.f32 %v2869, %v2869
        %v2972 = vmul.f32 %v2870, %v2870
        %v2973 = vmul.f32 %v2871, %v2871
        %v2974 = vmul.f32 %v2872, %v2872
        %v2975 = vmul.f32 %v2873, %v2873
        %v2976 = vmul.f32 %v2874, %v2874
        %v2977 = vmul.f32 %v2875, %v2875
        %v2978 = vmul.f32 %v2876, %v2876
        %v2979 = vmul.f32 %v2877, %v2877
        %v2980 = vmul.f32 %v2878, %v2878
        %v2981 = vmul.f32 %v2879, %v2879
        %2982 = vmatprep.subr.mxu0 0.0
        %2983 = vmatpush1.msra.mxu0 %v2950
        %2984 = vmatprep.subr.mxu0 0.0
        %2985 = vmatpush1.msra.mxu0 %v2951
        %2986 = vmatprep.subr.mxu0 0.0
        %2987 = vmatpush1.msra.mxu0 %v2952
        %2988 = vmatprep.subr.mxu0 0.0
        %2989 = vmatpush1.msra.mxu0 %v2953
        %2990 = vmatprep.subr.mxu0 0.0
        %2991 = vmatpush1.msra.mxu0 %v2954
        %2992 = vmatprep.subr.mxu0 0.0
        %2993 = vmatpush1.msra.mxu0 %v2955
        %2994 = vmatprep.subr.mxu0 0.0
        %2995 = vmatpush1.msra.mxu0 %v2956
        %2996 = vmatprep.subr.mxu0 0.0
        %2997 = vmatpush1.msra.mxu0 %v2957
        %2998 = vmatprep.subr.mxu0 0.0
        %2999 = vmatpush1.msra.mxu0 %v2958
        %3000 = vmatprep.subr.mxu0 0.0
        %3001 = vmatpush1.msra.mxu0 %v2959
        %3002 = vmatprep.subr.mxu0 0.0
        %3003 = vmatpush1.msra.mxu0 %v2960
        %3004 = vmatprep.subr.mxu0 0.0
        %3005 = vmatpush1.msra.mxu0 %v2961
        %3006 = vmatprep.subr.mxu0 0.0
        %3007 = vmatpush1.msra.mxu0 %v2962
        %3008 = vmatprep.subr.mxu0 0.0
        %3009 = vmatpush1.msra.mxu0 %v2963
        %3010 = vmatprep.subr.mxu0 0.0
        %3011 = vmatpush1.msra.mxu0 %v2964
        %3012 = vmatprep.subr.mxu0 0.0
        %3013 = vmatpush1.msra.mxu0 %v2965
        %3014 = vmatprep.subr.mxu0 0.0
        %3015 = vmatpush1.msra.mxu0 %v2966
        %3016 = vmatprep.subr.mxu0 0.0
        %3017 = vmatpush1.msra.mxu0 %v2967
        %3018 = vmatprep.subr.mxu0 0.0
        %3019 = vmatpush1.msra.mxu0 %v2968
        %3020 = vmatprep.subr.mxu0 0.0
        %3021 = vmatpush1.msra.mxu0 %v2969
        %3022 = vmatprep.subr.mxu0 0.0
        %3023 = vmatpush1.msra.mxu0 %v2970
        %3024 = vmatprep.subr.mxu0 0.0
        %3025 = vmatpush1.msra.mxu0 %v2971
        %3026 = vmatprep.subr.mxu0 0.0
        %3027 = vmatpush1.msra.mxu0 %v2972
        %3028 = vmatprep.subr.mxu0 0.0
        %3029 = vmatpush1.msra.mxu0 %v2973
        %3030 = vmatprep.subr.mxu0 0.0
        %3031 = vmatpush1.msra.mxu0 %v2974
        %3032 = vmatprep.subr.mxu0 0.0
        %3033 = vmatpush1.msra.mxu0 %v2975
        %3034 = vmatprep.subr.mxu0 0.0
        %3035 = vmatpush1.msra.mxu0 %v2976
        %3036 = vmatprep.subr.mxu0 0.0
        %3037 = vmatpush1.msra.mxu0 %v2977
        %3038 = vmatprep.subr.mxu0 0.0
        %3039 = vmatpush1.msra.mxu0 %v2978
        %3040 = vmatprep.subr.mxu0 0.0
        %3041 = vmatpush1.msra.mxu0 %v2979
        %3042 = vmatprep.subr.mxu0 0.0
        %3043 = vmatpush1.msra.mxu0 %v2980
        %3044 = vmatprep.subr.mxu0 0.0
        %3045 = vmatpush1.msra.mxu0 %v2981
        %3046 = vmatprep.mubr.f32.mxu0 1.0
        %3047 = vmatmul.mubr.f32.gmra.mrb[0].mxu0 1.0
        %v3048 = vpop.f32.mrb[0].mxu0
        %v3049 = vadd.f32 0.0, %v3048
        %v3050 = vpop.f32.mrb[0].mxu0
        %3051 = vdwg.mxu0
        %v3053 = vrot.slane %v3049, 7
        %vm3055 = vcmask 1040384
        %v3056 = vsel %vm3055, %v2947, %v3053
        %3057 = vst.msk [vmem:[%s172] sm:$0x3] %vm221, %v3056
        %3058 = vst.msk [vmem:[%s183] sm:$0xff] %vm218, %v2848
        %3059 = vst.msk [vmem:[%s183 + $0x8] sm:$0xff] %vm218, %v2849
        %3060 = vst.msk [vmem:[%s183 + $0x10] sm:$0xff] %vm218, %v2850
        %3061 = vst.msk [vmem:[%s183 + $0x18] sm:$0xff] %vm218, %v2851
        %3062 = vst.msk [vmem:[%s183 + $0x20] sm:$0xff] %vm218, %v2852
        %3063 = vst.msk [vmem:[%s183 + $0x28] sm:$0xff] %vm218, %v2853
        %3064 = vst.msk [vmem:[%s183 + $0x30] sm:$0xff] %vm218, %v2854
        %3065 = vst.msk [vmem:[%s183 + $0x38] sm:$0xff] %vm218, %v2855
        %3066 = vst.msk [vmem:[%s183 + $0x40] sm:$0xff] %vm218, %v2856
        %3067 = vst.msk [vmem:[%s183 + $0x48] sm:$0xff] %vm218, %v2857
        %3068 = vst.msk [vmem:[%s183 + $0x50] sm:$0xff] %vm218, %v2858
        %3069 = vst.msk [vmem:[%s183 + $0x58] sm:$0xff] %vm218, %v2859
        %3070 = vst.msk [vmem:[%s183 + $0x60] sm:$0xff] %vm218, %v2860
        %3071 = vst.msk [vmem:[%s183 + $0x68] sm:$0xff] %vm218, %v2861
        %3072 = vst.msk [vmem:[%s183 + $0x70] sm:$0xff] %vm218, %v2862
        %3073 = vst.msk [vmem:[%s183 + $0x78] sm:$0xff] %vm218, %v2863
        %3074 = vst.msk [vmem:[%s183 + $0x80] sm:$0xff] %vm218, %v2864
        %3075 = vst.msk [vmem:[%s183 + $0x88] sm:$0xff] %vm218, %v2865
        %3076 = vst.msk [vmem:[%s183 + $0x90] sm:$0xff] %vm218, %v2866
        %3077 = vst.msk [vmem:[%s183 + $0x98] sm:$0xff] %vm218, %v2867
        %3078 = vst.msk [vmem:[%s183 + $0xa0] sm:$0xff] %vm218, %v2868
        %3079 = vst.msk [vmem:[%s183 + $0xa8] sm:$0xff] %vm218, %v2869
        %3080 = vst.msk [vmem:[%s183 + $0xb0] sm:$0xff] %vm218, %v2870
        %3081 = vst.msk [vmem:[%s183 + $0xb8] sm:$0xff] %vm218, %v2871
        %3082 = vst.msk [vmem:[%s183 + $0xc0] sm:$0xff] %vm218, %v2872
        %3083 = vst.msk [vmem:[%s183 + $0xc8] sm:$0xff] %vm218, %v2873
        %3084 = vst.msk [vmem:[%s183 + $0xd0] sm:$0xff] %vm218, %v2874
        %3085 = vst.msk [vmem:[%s183 + $0xd8] sm:$0xff] %vm218, %v2875
        %3086 = vst.msk [vmem:[%s183 + $0xe0] sm:$0xff] %vm218, %v2876
        %3087 = vst.msk [vmem:[%s183 + $0xe8] sm:$0xff] %vm218, %v2877
        %3088 = vst.msk [vmem:[%s183 + $0xf0] sm:$0xff] %vm218, %v2878
        %3089 = vst.msk [vmem:[%s183 + $0xf8] sm:$0xff] %vm218, %v2879
        %s3090 = smul.u32 32, %s18
        %p3091 = scmp.lt.s32.totalorder %s3090, 63
        %s3092 = scalar_select %p3091, %s3090, 63
        %s3093 = smul.addr %s3092, 8
        %s3094 = scalar_lea.vmem %s2, %s3093
        %s3095 = sand.u32 %s99, 1
        %s3096 = scalar_lea.sflag [#allocation4], %s3095
        %s3097 = sand.u32 %s99, 1
        %s3098 = smul.addr %s3097, 2
        %s3099 = scalar_lea.vmem [#allocation3], %s3098
        // Predicated region
        $region29: #{tpu_custom_call.1} parent=27 // pred_check
          %p3100 = pneg %p83
        $region30: #{tpu_custom_call.1} parent=27 // pred_check_branch
          %3102 = sbr.rel (%p3100) target = $region32
        $region31: #{tpu_custom_call.1} parent=27 // pred_region
          %s3103 = smul.u32 32, %s18
        $region32: #{tpu_custom_call.1} parent=27 // pred_fallthru
          _
        // Predicated region
        $region33: #{tpu_custom_call.1} parent=27 // pred_check
          %p3104 = pneg %p109
        $region34: #{tpu_custom_call.1} parent=27 // pred_check_branch
          %3106 = sbr.rel (%p3104) target = $region36
        $region35: #{tpu_custom_call.1} parent=27 // pred_region
          %s3108 = ssub.s32 32, 32
          %3109 = vsyncadd %s3096, %s3108
          %s3110 = smul.addr %s18, 32
          %s3111 = scalar_lea.hbm %s3, %s3110
          %s3113 = sshll.u32 %s3099, 4
          %s3114 = int_to_ptr.vmem [resolvable:$true] %s3113
          %3116 = dma.vmem_to_hbm [thread:$0]  %s3114, 32, %s3111, %s3096
        $region36: #{tpu_custom_call.1} parent=27 // pred_fallthru
          _
      $region28: #{tpu_custom_call.1} parent=5 // pred_fallthru
        _
      %p3117 = scmp.le.s32.totalorder 2, %s13
      // Predicated region
      $region37: #{tpu_custom_call.1} parent=5 // pred_check
        %p3118 = pneg %p3117
      $region38: #{tpu_custom_call.1} parent=5 // pred_check_branch
        %3120 = sbr.rel (%p3118) target = $region40
      $region39: #{tpu_custom_call.1} parent=5 // pred_region
        %s3121 = ssub.s32 %s13, 2
        // Predicated region
        $region41: #{tpu_custom_call.1} parent=39 // pred_check
          %p3122 = pneg %p89
        $region42: #{tpu_custom_call.1} parent=39 // pred_check_branch
          %3124 = sbr.rel (%p3122) target = $region44
        $region43: #{tpu_custom_call.1} parent=39 // pred_region
          %s3125 = smul.u32 32, %s19
          %p3126 = scmp.lt.s32.totalorder %s3125, 63
          %s3127 = scalar_select %p3126, %s3125, 63
          %s3128 = smul.addr %s3127, 8
          %s3129 = scalar_lea.vmem %s2, %s3128
        $region44: #{tpu_custom_call.1} parent=39 // pred_fallthru
          _
        // Predicated region
        $region45: #{tpu_custom_call.1} parent=39 // pred_check
          %p3130 = pneg %p115
        $region46: #{tpu_custom_call.1} parent=39 // pred_check_branch
          %3132 = sbr.rel (%p3130) target = $region48
        $region47: #{tpu_custom_call.1} parent=39 // pred_region
          %s3133 = sand.u32 %s100, 1
          %s3134 = scalar_lea.sflag [#allocation4], %s3133
          %s3135 = sand.u32 %s100, 1
          %s3136 = smul.addr %s3135, 2
          %s3137 = scalar_lea.vmem [#allocation3], %s3136
          %3138 = dma.done %s3134, 32
        $region48: #{tpu_custom_call.1} parent=39 // pred_fallthru
          _
      $region40: #{tpu_custom_call.1} parent=5 // pred_fallthru
        _
    $region6: #{tpu_custom_call.1} parent=1 // loop_footer
      %s17 = sadd.s32 1, %s13
    $region7: #{tpu_custom_call.1} parent=1 // loop_footer_branch
      %12 = sbr.rel target = $region3
    $region8: #{tpu_custom_call.1} parent=1 // loop_exit
      _
    %3139 = vsyncpa [#allocation4], 1
    %s3140 = scalar_lea.sflag [#allocation4], 1
    %3141 = vsyncpa %s3140, 1

</llo_original>
